<compile_context>
chip_gen: v7x
topology: tpu7x:2x2x1
jax: 0.10.0
libtpu: 0.0.40
codegen_flags: <defaults>
</compile_context>

<pallas_src>
import functools

import numpy as np

import jax
import jax.numpy as jnp
from jax.experimental import pallas as pl
from jax.experimental.pallas import tpu as pltpu


LANE = 128    # lane (last-dim) width used for every in-kernel matrix
B_TILE = 16   # images per grid step (multiple of 8; rows per block = 16*B_TILE)

_KP_ORDER = ('t_c1', 'b_c1', 't_b2c1', 'b_b2c1', 't_b2c2', 'b_b2c2',
             't_b3c1', 'b_b3c1', 't_sc', 'b_sc', 't_b3c2', 'b_b3c2',
             'w1', 'bf1', 'w2', 'bf2')


# ----------------------------------------------------------------------------
# Pallas kernel: the entire ResNetForMinist forward pass for one B-image tile
# ----------------------------------------------------------------------------
def _resnet_kernel(B,
                   xp_ref,
                   t_c1, b_c1,
                   t_b2c1, b_b2c1,
                   t_b2c2, b_b2c2,
                   t_b3c1, b_b3c1,
                   t_sc, b_sc,
                   t_b3c2, b_b3c2,
                   w1, bf1, w2, bf2,
                   o_ref,
                   h1, h2a, h2, h3a):
    f32 = jnp.float32
    bf16 = jnp.bfloat16
    zrow = jnp.zeros((B, LANE), bf16)

    # Zero only the padding-ring row blocks (contiguous in the interleaved
    # layout); every interior row is fully overwritten below.
    h1[pl.ds(0, B), :] = zrow
    h1[pl.ds(17 * B, B), :] = zrow
    h2a[pl.ds(0, B), :] = zrow
    h2a[pl.ds(17 * B, B), :] = zrow
    h2[pl.ds(0, B), :] = zrow          # even bank, padded row 0
    h3a[pl.ds(0, B), :] = zrow
    h3a[pl.ds(9 * B, B), :] = zrow

    def conv3(x0, x1, x2, t_ref, bias_ref, extra=None, relu=True):
        """3x3 conv + folded BN: three row-Toeplitz bf16 MXU matmuls, f32 acc."""
        acc = jnp.dot(x0, t_ref[0], preferred_element_type=f32)
        acc = acc + jnp.dot(x1, t_ref[1], preferred_element_type=f32)
        acc = acc + jnp.dot(x2, t_ref[2], preferred_element_type=f32)
        acc = acc + bias_ref[...]
        if extra is not None:
            acc = acc + extra
        if relu:
            acc = jnp.maximum(acc, 0.0)
        return acc

    # --- stem: Conv(1->3, k3, s2, p1) + BN + ReLU : 32x32 -> 16x16 -------------
    # Input is parity-split: rows [0,17B) = even padded rows, [17B,34B) = odd.
    y = conv3(xp_ref[pl.ds(0, 16 * B), :],        # padded rows 0,2,...,30
              xp_ref[pl.ds(17 * B, 16 * B), :],   # padded rows 1,3,...,31
              xp_ref[pl.ds(B, 16 * B), :],        # padded rows 2,4,...,32
              t_c1, b_c1)
    h1[pl.ds(B, 16 * B), :] = y.astype(bf16)

    # --- ResBlock(3, 3, stride=1), identity shortcut ----------------------------
    y = conv3(h1[pl.ds(0, 16 * B), :], h1[pl.ds(B, 16 * B), :],
              h1[pl.ds(2 * B, 16 * B), :], t_b2c1, b_b2c1)
    h2a[pl.ds(B, 16 * B), :] = y.astype(bf16)

    res = h1[pl.ds(B, 16 * B), :]                 # block2 input = identity shortcut
    y = conv3(h2a[pl.ds(0, 16 * B), :], h2a[pl.ds(B, 16 * B), :],
              h2a[pl.ds(2 * B, 16 * B), :], t_b2c2, b_b2c2, extra=res)
    # Store block2's output parity-split so the stride-2 consumers below read
    # contiguous blocks: rows [0,9B) = even padded rows 0..16, [9B,17B) = odd 1..15.
    y4 = y.astype(bf16).reshape(8, 2, B, LANE)    # (row-pair, parity, image, lane)
    h2[pl.ds(B, 8 * B), :] = y4[:, 1].reshape(8 * B, LANE)       # padded 2,4,...,16
    h2[pl.ds(9 * B, 8 * B), :] = y4[:, 0].reshape(8 * B, LANE)   # padded 1,3,...,15

    # --- ResBlock(3, 6, stride=2), 1x1 conv shortcut -----------------------------
    y = conv3(h2[pl.ds(0, 8 * B), :],             # padded rows 0,2,...,14
              h2[pl.ds(9 * B, 8 * B), :],         # padded rows 1,3,...,15
              h2[pl.ds(B, 8 * B), :],             # padded rows 2,4,...,16
              t_b3c1, b_b3c1)
    h3a[pl.ds(B, 8 * B), :] = y.astype(bf16)

    # 1x1 stride-2 conv + BN shortcut (no ReLU): reads odd padded rows 1,3,...,15.
    ysc = jnp.dot(h2[pl.ds(9 * B, 8 * B), :], t_sc[...],
                  preferred_element_type=f32) + b_sc[...]

    y3 = conv3(h3a[pl.ds(0, 8 * B), :], h3a[pl.ds(B, 8 * B), :],
               h3a[pl.ds(2 * B, 8 * B), :], t_b3c2, b_b3c2, extra=ysc)

    # --- FC head (batched over the tile's B images) ------------------------------
    y3b = y3.astype(bf16)
    acc = jnp.zeros((B, LANE), f32)
    for oh in range(8):                           # NCHW flatten folded into w1 blocks
        acc = acc + jnp.dot(y3b[oh * B:(oh + 1) * B, :], w1[oh],
                            preferred_element_type=f32)
    a = jnp.maximum(acc + bf1[...], 0.0)
    # TODO(synk): Dropout(0.5) is identity in inference mode.
    o_ref[...] = jnp.dot(a.astype(bf16), w2[...],
                         preferred_element_type=f32) + bf2[...]


# ----------------------------------------------------------------------------
# Forward wrapper: one pallas_call, grid over batch tiles
# ----------------------------------------------------------------------------
def _const_spec(shape):
    if len(shape) == 3:
        return pl.BlockSpec(shape, lambda i: (0, 0, 0))
    return pl.BlockSpec(shape, lambda i: (0, 0))


@jax.jit
def resnet_forward(x_nchw, kp):
    B = B_TILE
    batch = x_nchw.shape[0]
    pad_n = (-batch) % B
    nb = batch + pad_n
    ntiles = nb // B

    xb = jnp.pad(x_nchw.astype(jnp.float32), ((0, pad_n), (0, 0), (0, 0), (0, 0)))
    xpad = jnp.pad(xb[:, 0], ((0, 0), (1, 1), (1, 1)))                 # (nb, 34, 34)
    # Parity-split rows (17 even then 17 odd), interleave images inside each tile:
    # row within a tile = bank_row * B + image.
    xsplit = jnp.concatenate([xpad[:, 0::2, :], xpad[:, 1::2, :]], axis=1)
    xrows = xsplit.reshape(ntiles, B, 34, 34).transpose(0, 2, 1, 3).reshape(
        ntiles * 34 * B, 34)
    xp = jnp.pad(xrows, ((0, 0), (0, LANE - 34))).astype(jnp.bfloat16)

    in_specs = [pl.BlockSpec((34 * B, LANE), lambda i: (i, 0))]
    in_specs += [_const_spec(kp[n].shape) for n in _KP_ORDER]

    out = pl.pallas_call(
        functools.partial(_resnet_kernel, B),
        grid=(ntiles,),
        in_specs=in_specs,
        out_specs=pl.BlockSpec((B, LANE), lambda i: (i, 0)),
        out_shape=jax.ShapeDtypeStruct((nb, LANE), jnp.float32),
        scratch_shapes=[
            pltpu.VMEM((18 * B, LANE), jnp.bfloat16),   # h1 : stem out / block2 in
            pltpu.VMEM((18 * B, LANE), jnp.bfloat16),   # h2a: block2.conv1 out
            pltpu.VMEM((17 * B, LANE), jnp.bfloat16),   # h2 : block2 out (parity-split)
            pltpu.VMEM((10 * B, LANE), jnp.bfloat16),   # h3a: block3.conv1 out
        ],
        compiler_params=pltpu.CompilerParams(
            dimension_semantics=("parallel",)),
    )(xp, *[kp[n] for n in _KP_ORDER])
    return out[:batch, :10]


# ----------------------------------------------------------------------------
# Deterministic parameter construction (raw), then kernel-ready packing
# ----------------------------------------------------------------------------
def _conv_bn_raw(key, cin, cout, kh, kw):
    k = jax.random.split(key, 6)
    return dict(
        w=jax.random.normal(k[0], (cout, cin, kh, kw), jnp.float32) * 0.1,
        b=jax.random.normal(k[1], (cout,), jnp.float32) * 0.1,
        gamma=1.0 + 0.1 * jax.random.normal(k[2], (cout,), jnp.float32),
        beta=0.1 * jax.random.normal(k[3], (cout,), jnp.float32),
        mean=0.1 * jax.random.normal(k[4], (cout,), jnp.float32),
        var=1.0 + 0.1 * jax.random.uniform(k[5], (cout,), jnp.float32),
    )


def _linear_raw(key, fin, fout):
    k1, k2 = jax.random.split(key)
    return dict(
        w=jax.random.normal(k1, (fout, fin), jnp.float32) / jnp.sqrt(float(fin)),
        b=jax.random.normal(k2, (fout,), jnp.float32) * 0.05,
    )


def make_raw_params(key):
    keys = jax.random.split(key, 8)
    return {
        'c1':   _conv_bn_raw(keys[0], 1, 3, 3, 3),
        'b2c1': _conv_bn_raw(keys[1], 3, 3, 3, 3),
        'b2c2': _conv_bn_raw(keys[2], 3, 3, 3, 3),
        'b3c1': _conv_bn_raw(keys[3], 3, 6, 3, 3),
        'b3c2': _conv_bn_raw(keys[4], 6, 6, 3, 3),
        'b3sc': _conv_bn_raw(keys[5], 3, 6, 1, 1),
        'fc1':  _linear_raw(keys[6], 384, 84),
        'fc2':  _linear_raw(keys[7], 84, 10),
    }


def _fold(cv):
    w = np.asarray(cv['w'], np.float32)
    scale = np.asarray(cv['gamma'], np.float32) / np.sqrt(
        np.asarray(cv['var'], np.float32) + 1e-5)
    bias = (np.asarray(cv['b'], np.float32) - np.asarray(cv['mean'], np.float32)
            ) * scale + np.asarray(cv['beta'], np.float32)
    return w, scale, bias


def build_kernel_params(raw):
    """Pack weights into the layouts the fused kernel consumes (done once)."""
    kp = {}
    # 3x3 convs: row-Toeplitz slabs T[ki, j*Cin+ci, (o+1)*Cout+co] = W*scale
    for name, w_in, stride in [('c1', 32, 2), ('b2c1', 16, 1), ('b2c2', 16, 1),
                               ('b3c1', 16, 2), ('b3c2', 8, 1)]:
        w, scale, bias = _fold(raw[name])
        cout, cin = w.shape[0], w.shape[1]
        ow_n = (w_in + 2 - 3) // stride + 1
        t = np.zeros((3, LANE, LANE), np.float32)
        brow = np.zeros((1, LANE), np.float32)
        for ki in range(3):
            for o in range(ow_n):
                for kj in range(3):
                    j = stride * o + kj
                    t[ki, j * cin:(j + 1) * cin, (o + 1) * cout:(o + 2) * cout] = \
                        (w[:, :, ki, kj] * scale[:, None]).T
        for o in range(ow_n):
            brow[0, (o + 1) * cout:(o + 2) * cout] = bias
        kp['t_' + name] = jnp.asarray(t, jnp.bfloat16)
        kp['b_' + name] = jnp.asarray(brow, jnp.float32)

    # block3 shortcut: 1x1 conv, stride 2, no padding
    w, scale, bias = _fold(raw['b3sc'])
    cout, cin = w.shape[0], w.shape[1]
    t = np.zeros((LANE, LANE), np.float32)
    brow = np.zeros((1, LANE), np.float32)
    for o in range(8):
        j = 2 * o + 1
        t[j * cin:(j + 1) * cin, (o + 1) * cout:(o + 2) * cout] = \
            (w[:, :, 0, 0] * scale[:, None]).T
        brow[0, (o + 1) * cout:(o + 2) * cout] = bias
    kp['t_sc'] = jnp.asarray(t, jnp.bfloat16)
    kp['b_sc'] = jnp.asarray(brow, jnp.float32)

    # FC head: NCHW flatten folded into per-output-row fc1 weight blocks (bf16)
    w1 = np.asarray(raw['fc1']['w'], np.float32)   # (84, 384)
    b1 = np.asarray(raw['fc1']['b'], np.float32)
    w2 = np.asarray(raw['fc2']['w'], np.float32)   # (10, 84)
    b2 = np.asarray(raw['fc2']['b'], np.float32)
    w1blk = np.zeros((8, LANE, LANE), np.float32)
    for oh in range(8):
        for o in range(8):
            for c in range(6):
                w1blk[oh, (o + 1) * 6 + c, :84] = w1[:, c * 64 + oh * 8 + o]
    bf1 = np.zeros((1, LANE), np.float32)
    bf1[0, :84] = b1
    w2p = np.zeros((LANE, LANE), np.float32)
    w2p[:84, :10] = w2.T
    bf2 = np.zeros((1, LANE), np.float32)
    bf2[0, :10] = b2
    kp['w1'] = jnp.asarray(w1blk, jnp.bfloat16)
    kp['bf1'] = jnp.asarray(bf1, jnp.float32)
    kp['w2'] = jnp.asarray(w2p, jnp.bfloat16)
    kp['bf2'] = jnp.asarray(bf2, jnp.float32)
    return kp


def build_ref_params(raw):
    rp = {}
    for k in ['c1', 'b2c1', 'b2c2', 'b3c1', 'b3c2', 'b3sc']:
        w, scale, bias = _fold(raw[k])
        rp[k] = (jnp.asarray(w), jnp.asarray(scale), jnp.asarray(bias))
    rp['fc1'] = (raw['fc1']['w'], raw['fc1']['b'])
    rp['fc2'] = (raw['fc2']['w'], raw['fc2']['b'])
    return rp


# ----------------------------------------------------------------------------
# Plain-JAX reference (validation only; not the performance path)
# ----------------------------------------------------------------------------
def _conv_bn_ref(x, w, scale, bias, stride, pad):
    y = jax.lax.conv_general_dilated(
        x, w, window_strides=(stride, stride),
        padding=((pad, pad), (pad, pad)),
        dimension_numbers=('NCHW', 'OIHW', 'NCHW'))
    return y * scale.reshape(1, -1, 1, 1) + bias.reshape(1, -1, 1, 1)


@jax.jit
def reference_forward(x, rp):
    h = jax.nn.relu(_conv_bn_ref(x, *rp['c1'], 2, 1))
    t = jax.nn.relu(_conv_bn_ref(h, *rp['b2c1'], 1, 1))
    t = _conv_bn_ref(t, *rp['b2c2'], 1, 1)
    h = jax.nn.relu(t + h)
    t = jax.nn.relu(_conv_bn_ref(h, *rp['b3c1'], 2, 1))
    t = _conv_bn_ref(t, *rp['b3c2'], 1, 1)
    s = _conv_bn_ref(h, *rp['b3sc'], 2, 0)
    h = jax.nn.relu(t + s)
    flat = h.reshape(h.shape[0], -1)
    w1, b1 = rp['fc1']
    w2, b2 = rp['fc2']
    z = jax.nn.relu(flat @ w1.T + b1)
    return z @ w2.T + b2


# ----------------------------------------------------------------------------
if __name__ == "__main__":
    key = jax.random.PRNGKey(0)
    kx, kw = jax.random.split(key)
    # MNIST-style input padded to 32x32 so Linear(384, 84) is consistent:
    # 32 -(conv1 s2)-> 16 -(block2 s1)-> 16 -(block3 s2)-> 8 ; 6*8*8 = 384.
    # batch=24 exercises both the 2-step batch grid and batch padding (24 -> 32).
    x = jax.random.normal(kx, (24, 1, 32, 32), jnp.float32)

    raw = make_raw_params(kw)
    kp = build_kernel_params(raw)
    rp = build_ref_params(raw)

    out = jax.block_until_ready(resnet_forward(x, kp))
    assert out.shape == (24, 10), out.shape
    assert bool(jnp.all(jnp.isfinite(out)))

    # Cross-check against a plain-JAX reference using the same folded parameters;
    # tolerance covers the bf16 activations / matmul operands used in the kernel.
    ref = reference_forward(x, rp)
    assert bool(jnp.allclose(out, ref, rtol=1e-1, atol=1e-1)), (np.asarray(out),
                                                                np.asarray(ref))

    print("KERNEL_OK")
</pallas_src>

<mosaic_0001>
module attributes {stable_mosaic.version = 11 : i64} {
  func.func @_resnet_kernel(%arg0: i32, %arg1: memref<544x128xbf16, #tpu.memory_space<vmem>>, %arg2: memref<3x128x128xbf16, #tpu.memory_space<vmem>>, %arg3: memref<1x128xf32, #tpu.memory_space<vmem>>, %arg4: memref<3x128x128xbf16, #tpu.memory_space<vmem>>, %arg5: memref<1x128xf32, #tpu.memory_space<vmem>>, %arg6: memref<3x128x128xbf16, #tpu.memory_space<vmem>>, %arg7: memref<1x128xf32, #tpu.memory_space<vmem>>, %arg8: memref<3x128x128xbf16, #tpu.memory_space<vmem>>, %arg9: memref<1x128xf32, #tpu.memory_space<vmem>>, %arg10: memref<128x128xbf16, #tpu.memory_space<vmem>>, %arg11: memref<1x128xf32, #tpu.memory_space<vmem>>, %arg12: memref<3x128x128xbf16, #tpu.memory_space<vmem>>, %arg13: memref<1x128xf32, #tpu.memory_space<vmem>>, %arg14: memref<8x128x128xbf16, #tpu.memory_space<vmem>>, %arg15: memref<1x128xf32, #tpu.memory_space<vmem>>, %arg16: memref<128x128xbf16, #tpu.memory_space<vmem>>, %arg17: memref<1x128xf32, #tpu.memory_space<vmem>>, %arg18: memref<16x128xf32, #tpu.memory_space<vmem>>, %arg19: memref<288x128xbf16, #tpu.memory_space<vmem>>, %arg20: memref<288x128xbf16, #tpu.memory_space<vmem>>, %arg21: memref<272x128xbf16, #tpu.memory_space<vmem>>, %arg22: memref<160x128xbf16, #tpu.memory_space<vmem>>) attributes {dimension_semantics = [#tpu.dimension_semantics<parallel>], iteration_bounds = array<i64: 2>, scalar_prefetch = 0 : i64, scratch_operands = 4 : i64, tpu.core_type = #tpu.core_type<tc>, window_params = [{transform_indices = @transform_0, window_bounds = array<i64: 544, 128>}, {pipeline_mode = #tpu.pipeline_mode<synchronous>, transform_indices = @transform_1, window_bounds = array<i64: 3, 128, 128>}, {pipeline_mode = #tpu.pipeline_mode<synchronous>, transform_indices = @transform_2, window_bounds = array<i64: 1, 128>}, {pipeline_mode = #tpu.pipeline_mode<synchronous>, transform_indices = @transform_3, window_bounds = array<i64: 3, 128, 128>}, {pipeline_mode = #tpu.pipeline_mode<synchronous>, transform_indices = @transform_4, window_bounds = array<i64: 1, 128>}, {pipeline_mode = #tpu.pipeline_mode<synchronous>, transform_indices = @transform_5, window_bounds = array<i64: 3, 128, 128>}, {pipeline_mode = #tpu.pipeline_mode<synchronous>, transform_indices = @transform_6, window_bounds = array<i64: 1, 128>}, {pipeline_mode = #tpu.pipeline_mode<synchronous>, transform_indices = @transform_7, window_bounds = array<i64: 3, 128, 128>}, {pipeline_mode = #tpu.pipeline_mode<synchronous>, transform_indices = @transform_8, window_bounds = array<i64: 1, 128>}, {pipeline_mode = #tpu.pipeline_mode<synchronous>, transform_indices = @transform_9, window_bounds = array<i64: 128, 128>}, {pipeline_mode = #tpu.pipeline_mode<synchronous>, transform_indices = @transform_10, window_bounds = array<i64: 1, 128>}, {pipeline_mode = #tpu.pipeline_mode<synchronous>, transform_indices = @transform_11, window_bounds = array<i64: 3, 128, 128>}, {pipeline_mode = #tpu.pipeline_mode<synchronous>, transform_indices = @transform_12, window_bounds = array<i64: 1, 128>}, {pipeline_mode = #tpu.pipeline_mode<synchronous>, transform_indices = @transform_13, window_bounds = array<i64: 8, 128, 128>}, {pipeline_mode = #tpu.pipeline_mode<synchronous>, transform_indices = @transform_14, window_bounds = array<i64: 1, 128>}, {pipeline_mode = #tpu.pipeline_mode<synchronous>, transform_indices = @transform_15, window_bounds = array<i64: 128, 128>}, {pipeline_mode = #tpu.pipeline_mode<synchronous>, transform_indices = @transform_16, window_bounds = array<i64: 1, 128>}, {transform_indices = @transform_17, window_bounds = array<i64: 16, 128>}]} {
    %cst = arith.constant 0.000000e+00 : bf16
    %0 = vector.broadcast %cst : bf16 to vector<16x128xbf16>
    %c0 = arith.constant 0 : index
    %c0_0 = arith.constant 0 : index
    %1 = vector.load %arg19[%c0, %c0_0] : memref<288x128xbf16, #tpu.memory_space<vmem>>, vector<16x128xbf16>
    tpu.vector_store %arg19[%c0, %c0_0], %0 {strides = array<i32>} : memref<288x128xbf16, #tpu.memory_space<vmem>>, vector<16x128xbf16>,
    %c272 = arith.constant 272 : index
    %c0_1 = arith.constant 0 : index
    %2 = vector.load %arg19[%c272, %c0_1] : memref<288x128xbf16, #tpu.memory_space<vmem>>, vector<16x128xbf16>
    tpu.vector_store %arg19[%c272, %c0_1], %0 {strides = array<i32>} : memref<288x128xbf16, #tpu.memory_space<vmem>>, vector<16x128xbf16>,
    %c0_2 = arith.constant 0 : index
    %c0_3 = arith.constant 0 : index
    %3 = vector.load %arg20[%c0_2, %c0_3] : memref<288x128xbf16, #tpu.memory_space<vmem>>, vector<16x128xbf16>
    tpu.vector_store %arg20[%c0_2, %c0_3], %0 {strides = array<i32>} : memref<288x128xbf16, #tpu.memory_space<vmem>>, vector<16x128xbf16>,
    %c272_4 = arith.constant 272 : index
    %c0_5 = arith.constant 0 : index
    %4 = vector.load %arg20[%c272_4, %c0_5] : memref<288x128xbf16, #tpu.memory_space<vmem>>, vector<16x128xbf16>
    tpu.vector_store %arg20[%c272_4, %c0_5], %0 {strides = array<i32>} : memref<288x128xbf16, #tpu.memory_space<vmem>>, vector<16x128xbf16>,
    %c0_6 = arith.constant 0 : index
    %c0_7 = arith.constant 0 : index
    %5 = vector.load %arg21[%c0_6, %c0_7] : memref<272x128xbf16, #tpu.memory_space<vmem>>, vector<16x128xbf16>
    tpu.vector_store %arg21[%c0_6, %c0_7], %0 {strides = array<i32>} : memref<272x128xbf16, #tpu.memory_space<vmem>>, vector<16x128xbf16>,
    %c0_8 = arith.constant 0 : index
    %c0_9 = arith.constant 0 : index
    %6 = vector.load %arg22[%c0_8, %c0_9] : memref<160x128xbf16, #tpu.memory_space<vmem>>, vector<16x128xbf16>
    tpu.vector_store %arg22[%c0_8, %c0_9], %0 {strides = array<i32>} : memref<160x128xbf16, #tpu.memory_space<vmem>>, vector<16x128xbf16>,
    %c144 = arith.constant 144 : index
    %c0_10 = arith.constant 0 : index
    %7 = vector.load %arg22[%c144, %c0_10] : memref<160x128xbf16, #tpu.memory_space<vmem>>, vector<16x128xbf16>
    tpu.vector_store %arg22[%c144, %c0_10], %0 {strides = array<i32>} : memref<160x128xbf16, #tpu.memory_space<vmem>>, vector<16x128xbf16>,
    %c0_11 = arith.constant 0 : index
    %c0_12 = arith.constant 0 : index
    %8 = vector.load %arg1[%c0_11, %c0_12] : memref<544x128xbf16, #tpu.memory_space<vmem>>, vector<256x128xbf16>
    %c272_13 = arith.constant 272 : index
    %c0_14 = arith.constant 0 : index
    %9 = vector.load %arg1[%c272_13, %c0_14] : memref<544x128xbf16, #tpu.memory_space<vmem>>, vector<256x128xbf16>
    %c16 = arith.constant 16 : index
    %c0_15 = arith.constant 0 : index
    %10 = vector.load %arg1[%c16, %c0_15] : memref<544x128xbf16, #tpu.memory_space<vmem>>, vector<256x128xbf16>
    %c0_16 = arith.constant 0 : index
    %c0_17 = arith.constant 0 : index
    %c0_18 = arith.constant 0 : index
    %11 = vector.load %arg2[%c0_16, %c0_17, %c0_18] : memref<3x128x128xbf16, #tpu.memory_space<vmem>>, vector<1x128x128xbf16>
    %12 = vector.shape_cast %11 : vector<1x128x128xbf16> to vector<128x128xbf16>
    %cst_19 = arith.constant dense<0.000000e+00> : vector<256x128xf32>
    %13 = tpu.matmul %8, %12, %cst_19 {dimension_numbers = #tpu.dot_dimension_numbers<[1], [0], [0], [1], [0, 0, 1, 1], [], []>} : vector<256x128xbf16>, vector<128x128xbf16>, vector<256x128xf32> -> vector<256x128xf32>
    %c1 = arith.constant 1 : index
    %c0_20 = arith.constant 0 : index
    %c0_21 = arith.constant 0 : index
    %14 = vector.load %arg2[%c1, %c0_20, %c0_21] : memref<3x128x128xbf16, #tpu.memory_space<vmem>>, vector<1x128x128xbf16>
    %15 = vector.shape_cast %14 : vector<1x128x128xbf16> to vector<128x128xbf16>
    %cst_22 = arith.constant dense<0.000000e+00> : vector<256x128xf32>
    %16 = tpu.matmul %9, %15, %cst_22 {dimension_numbers = #tpu.dot_dimension_numbers<[1], [0], [0], [1], [0, 0, 1, 1], [], []>} : vector<256x128xbf16>, vector<128x128xbf16>, vector<256x128xf32> -> vector<256x128xf32>
    %17 = arith.addf %13, %16 : vector<256x128xf32>
    %c2 = arith.constant 2 : index
    %c0_23 = arith.constant 0 : index
    %c0_24 = arith.constant 0 : index
    %18 = vector.load %arg2[%c2, %c0_23, %c0_24] : memref<3x128x128xbf16, #tpu.memory_space<vmem>>, vector<1x128x128xbf16>
    %19 = vector.shape_cast %18 : vector<1x128x128xbf16> to vector<128x128xbf16>
    %cst_25 = arith.constant dense<0.000000e+00> : vector<256x128xf32>
    %20 = tpu.matmul %10, %19, %cst_25 {dimension_numbers = #tpu.dot_dimension_numbers<[1], [0], [0], [1], [0, 0, 1, 1], [], []>} : vector<256x128xbf16>, vector<128x128xbf16>, vector<256x128xf32> -> vector<256x128xf32>
    %21 = arith.addf %17, %20 : vector<256x128xf32>
    %c0_26 = arith.constant 0 : index
    %c0_27 = arith.constant 0 : index
    %22 = vector.load %arg3[%c0_26, %c0_27] : memref<1x128xf32, #tpu.memory_space<vmem>>, vector<1x128xf32>
    %23 = vector.broadcast %22 : vector<1x128xf32> to vector<256x128xf32>
    %24 = arith.addf %21, %23 : vector<256x128xf32>
    %cst_28 = arith.constant 0.000000e+00 : f32
    %25 = vector.broadcast %cst_28 : f32 to vector<256x128xf32>
    %26 = arith.maximumf %24, %25 : vector<256x128xf32>
    %27 = arith.truncf %26 : vector<256x128xf32> to vector<256x128xbf16>
    %c16_29 = arith.constant 16 : index
    %c0_30 = arith.constant 0 : index
    %28 = vector.load %arg19[%c16_29, %c0_30] : memref<288x128xbf16, #tpu.memory_space<vmem>>, vector<256x128xbf16>
    tpu.vector_store %arg19[%c16_29, %c0_30], %27 {strides = array<i32>} : memref<288x128xbf16, #tpu.memory_space<vmem>>, vector<256x128xbf16>,
    %c0_31 = arith.constant 0 : index
    %c0_32 = arith.constant 0 : index
    %29 = vector.load %arg19[%c0_31, %c0_32] : memref<288x128xbf16, #tpu.memory_space<vmem>>, vector<256x128xbf16>
    %c16_33 = arith.constant 16 : index
    %c0_34 = arith.constant 0 : index
    %30 = vector.load %arg19[%c16_33, %c0_34] : memref<288x128xbf16, #tpu.memory_space<vmem>>, vector<256x128xbf16>
    %c32 = arith.constant 32 : index
    %c0_35 = arith.constant 0 : index
    %31 = vector.load %arg19[%c32, %c0_35] : memref<288x128xbf16, #tpu.memory_space<vmem>>, vector<256x128xbf16>
    %c0_36 = arith.constant 0 : index
    %c0_37 = arith.constant 0 : index
    %c0_38 = arith.constant 0 : index
    %32 = vector.load %arg4[%c0_36, %c0_37, %c0_38] : memref<3x128x128xbf16, #tpu.memory_space<vmem>>, vector<1x128x128xbf16>
    %33 = vector.shape_cast %32 : vector<1x128x128xbf16> to vector<128x128xbf16>
    %cst_39 = arith.constant dense<0.000000e+00> : vector<256x128xf32>
    %34 = tpu.matmul %29, %33, %cst_39 {dimension_numbers = #tpu.dot_dimension_numbers<[1], [0], [0], [1], [0, 0, 1, 1], [], []>} : vector<256x128xbf16>, vector<128x128xbf16>, vector<256x128xf32> -> vector<256x128xf32>
    %c1_40 = arith.constant 1 : index
    %c0_41 = arith.constant 0 : index
    %c0_42 = arith.constant 0 : index
    %35 = vector.load %arg4[%c1_40, %c0_41, %c0_42] : memref<3x128x128xbf16, #tpu.memory_space<vmem>>, vector<1x128x128xbf16>
    %36 = vector.shape_cast %35 : vector<1x128x128xbf16> to vector<128x128xbf16>
    %cst_43 = arith.constant dense<0.000000e+00> : vector<256x128xf32>
    %37 = tpu.matmul %30, %36, %cst_43 {dimension_numbers = #tpu.dot_dimension_numbers<[1], [0], [0], [1], [0, 0, 1, 1], [], []>} : vector<256x128xbf16>, vector<128x128xbf16>, vector<256x128xf32> -> vector<256x128xf32>
    %38 = arith.addf %34, %37 : vector<256x128xf32>
    %c2_44 = arith.constant 2 : index
    %c0_45 = arith.constant 0 : index
    %c0_46 = arith.constant 0 : index
    %39 = vector.load %arg4[%c2_44, %c0_45, %c0_46] : memref<3x128x128xbf16, #tpu.memory_space<vmem>>, vector<1x128x128xbf16>
    %40 = vector.shape_cast %39 : vector<1x128x128xbf16> to vector<128x128xbf16>
    %cst_47 = arith.constant dense<0.000000e+00> : vector<256x128xf32>
    %41 = tpu.matmul %31, %40, %cst_47 {dimension_numbers = #tpu.dot_dimension_numbers<[1], [0], [0], [1], [0, 0, 1, 1], [], []>} : vector<256x128xbf16>, vector<128x128xbf16>, vector<256x128xf32> -> vector<256x128xf32>
    %42 = arith.addf %38, %41 : vector<256x128xf32>
    %c0_48 = arith.constant 0 : index
    %c0_49 = arith.constant 0 : index
    %43 = vector.load %arg5[%c0_48, %c0_49] : memref<1x128xf32, #tpu.memory_space<vmem>>, vector<1x128xf32>
    %44 = vector.broadcast %43 : vector<1x128xf32> to vector<256x128xf32>
    %45 = arith.addf %42, %44 : vector<256x128xf32>
    %cst_50 = arith.constant 0.000000e+00 : f32
    %46 = vector.broadcast %cst_50 : f32 to vector<256x128xf32>
    %47 = arith.maximumf %45, %46 : vector<256x128xf32>
    %48 = arith.truncf %47 : vector<256x128xf32> to vector<256x128xbf16>
    %c16_51 = arith.constant 16 : index
    %c0_52 = arith.constant 0 : index
    %49 = vector.load %arg20[%c16_51, %c0_52] : memref<288x128xbf16, #tpu.memory_space<vmem>>, vector<256x128xbf16>
    tpu.vector_store %arg20[%c16_51, %c0_52], %48 {strides = array<i32>} : memref<288x128xbf16, #tpu.memory_space<vmem>>, vector<256x128xbf16>,
    %c16_53 = arith.constant 16 : index
    %c0_54 = arith.constant 0 : index
    %50 = vector.load %arg19[%c16_53, %c0_54] : memref<288x128xbf16, #tpu.memory_space<vmem>>, vector<256x128xbf16>
    %c0_55 = arith.constant 0 : index
    %c0_56 = arith.constant 0 : index
    %51 = vector.load %arg20[%c0_55, %c0_56] : memref<288x128xbf16, #tpu.memory_space<vmem>>, vector<256x128xbf16>
    %c16_57 = arith.constant 16 : index
    %c0_58 = arith.constant 0 : index
    %52 = vector.load %arg20[%c16_57, %c0_58] : memref<288x128xbf16, #tpu.memory_space<vmem>>, vector<256x128xbf16>
    %c32_59 = arith.constant 32 : index
    %c0_60 = arith.constant 0 : index
    %53 = vector.load %arg20[%c32_59, %c0_60] : memref<288x128xbf16, #tpu.memory_space<vmem>>, vector<256x128xbf16>
    %c0_61 = arith.constant 0 : index
    %c0_62 = arith.constant 0 : index
    %c0_63 = arith.constant 0 : index
    %54 = vector.load %arg6[%c0_61, %c0_62, %c0_63] : memref<3x128x128xbf16, #tpu.memory_space<vmem>>, vector<1x128x128xbf16>
    %55 = vector.shape_cast %54 : vector<1x128x128xbf16> to vector<128x128xbf16>
    %cst_64 = arith.constant dense<0.000000e+00> : vector<256x128xf32>
    %56 = tpu.matmul %51, %55, %cst_64 {dimension_numbers = #tpu.dot_dimension_numbers<[1], [0], [0], [1], [0, 0, 1, 1], [], []>} : vector<256x128xbf16>, vector<128x128xbf16>, vector<256x128xf32> -> vector<256x128xf32>
    %c1_65 = arith.constant 1 : index
    %c0_66 = arith.constant 0 : index
    %c0_67 = arith.constant 0 : index
    %57 = vector.load %arg6[%c1_65, %c0_66, %c0_67] : memref<3x128x128xbf16, #tpu.memory_space<vmem>>, vector<1x128x128xbf16>
    %58 = vector.shape_cast %57 : vector<1x128x128xbf16> to vector<128x128xbf16>
    %cst_68 = arith.constant dense<0.000000e+00> : vector<256x128xf32>
    %59 = tpu.matmul %52, %58, %cst_68 {dimension_numbers = #tpu.dot_dimension_numbers<[1], [0], [0], [1], [0, 0, 1, 1], [], []>} : vector<256x128xbf16>, vector<128x128xbf16>, vector<256x128xf32> -> vector<256x128xf32>
    %60 = arith.addf %56, %59 : vector<256x128xf32>
    %c2_69 = arith.constant 2 : index
    %c0_70 = arith.constant 0 : index
    %c0_71 = arith.constant 0 : index
    %61 = vector.load %arg6[%c2_69, %c0_70, %c0_71] : memref<3x128x128xbf16, #tpu.memory_space<vmem>>, vector<1x128x128xbf16>
    %62 = vector.shape_cast %61 : vector<1x128x128xbf16> to vector<128x128xbf16>
    %cst_72 = arith.constant dense<0.000000e+00> : vector<256x128xf32>
    %63 = tpu.matmul %53, %62, %cst_72 {dimension_numbers = #tpu.dot_dimension_numbers<[1], [0], [0], [1], [0, 0, 1, 1], [], []>} : vector<256x128xbf16>, vector<128x128xbf16>, vector<256x128xf32> -> vector<256x128xf32>
    %64 = arith.addf %60, %63 : vector<256x128xf32>
    %c0_73 = arith.constant 0 : index
    %c0_74 = arith.constant 0 : index
    %65 = vector.load %arg7[%c0_73, %c0_74] : memref<1x128xf32, #tpu.memory_space<vmem>>, vector<1x128xf32>
    %66 = vector.broadcast %65 : vector<1x128xf32> to vector<256x128xf32>
    %67 = arith.addf %64, %66 : vector<256x128xf32>
    %68 = arith.extf %50 : vector<256x128xbf16> to vector<256x128xf32>
    %69 = arith.addf %67, %68 : vector<256x128xf32>
    %cst_75 = arith.constant 0.000000e+00 : f32
    %70 = vector.broadcast %cst_75 : f32 to vector<256x128xf32>
    %71 = arith.maximumf %69, %70 : vector<256x128xf32>
    %72 = arith.truncf %71 : vector<256x128xf32> to vector<256x128xbf16>
    %73 = vector.shape_cast %72 : vector<256x128xbf16> to vector<8x2x16x128xbf16>
    %74 = vector.extract_strided_slice %73 {offsets = [0, 1, 0, 0], sizes = [8, 1, 16, 128], strides = [1, 1, 1, 1]} : vector<8x2x16x128xbf16> to vector<8x1x16x128xbf16>
    %75 = vector.shape_cast %74 : vector<8x1x16x128xbf16> to vector<8x16x128xbf16>
    %76 = vector.shape_cast %75 : vector<8x16x128xbf16> to vector<128x128xbf16>
    %c16_76 = arith.constant 16 : index
    %c0_77 = arith.constant 0 : index
    %77 = vector.load %arg21[%c16_76, %c0_77] : memref<272x128xbf16, #tpu.memory_space<vmem>>, vector<128x128xbf16>
    tpu.vector_store %arg21[%c16_76, %c0_77], %76 {strides = array<i32>} : memref<272x128xbf16, #tpu.memory_space<vmem>>, vector<128x128xbf16>,
    %78 = vector.extract_strided_slice %73 {offsets = [0, 0, 0, 0], sizes = [8, 1, 16, 128], strides = [1, 1, 1, 1]} : vector<8x2x16x128xbf16> to vector<8x1x16x128xbf16>
    %79 = vector.shape_cast %78 : vector<8x1x16x128xbf16> to vector<8x16x128xbf16>
    %80 = vector.shape_cast %79 : vector<8x16x128xbf16> to vector<128x128xbf16>
    %c144_78 = arith.constant 144 : index
    %c0_79 = arith.constant 0 : index
    %81 = vector.load %arg21[%c144_78, %c0_79] : memref<272x128xbf16, #tpu.memory_space<vmem>>, vector<128x128xbf16>
    tpu.vector_store %arg21[%c144_78, %c0_79], %80 {strides = array<i32>} : memref<272x128xbf16, #tpu.memory_space<vmem>>, vector<128x128xbf16>,
    %c0_80 = arith.constant 0 : index
    %c0_81 = arith.constant 0 : index
    %82 = vector.load %arg21[%c0_80, %c0_81] : memref<272x128xbf16, #tpu.memory_space<vmem>>, vector<128x128xbf16>
    %c144_82 = arith.constant 144 : index
    %c0_83 = arith.constant 0 : index
    %83 = vector.load %arg21[%c144_82, %c0_83] : memref<272x128xbf16, #tpu.memory_space<vmem>>, vector<128x128xbf16>
    %c16_84 = arith.constant 16 : index
    %c0_85 = arith.constant 0 : index
    %84 = vector.load %arg21[%c16_84, %c0_85] : memref<272x128xbf16, #tpu.memory_space<vmem>>, vector<128x128xbf16>
    %c0_86 = arith.constant 0 : index
    %c0_87 = arith.constant 0 : index
    %c0_88 = arith.constant 0 : index
    %85 = vector.load %arg8[%c0_86, %c0_87, %c0_88] : memref<3x128x128xbf16, #tpu.memory_space<vmem>>, vector<1x128x128xbf16>
    %86 = vector.shape_cast %85 : vector<1x128x128xbf16> to vector<128x128xbf16>
    %cst_89 = arith.constant dense<0.000000e+00> : vector<128x128xf32>
    %87 = tpu.matmul %82, %86, %cst_89 {dimension_numbers = #tpu.dot_dimension_numbers<[1], [0], [0], [1], [0, 0, 1, 1], [], []>} : vector<128x128xbf16>, vector<128x128xbf16>, vector<128x128xf32> -> vector<128x128xf32>
    %c1_90 = arith.constant 1 : index
    %c0_91 = arith.constant 0 : index
    %c0_92 = arith.constant 0 : index
    %88 = vector.load %arg8[%c1_90, %c0_91, %c0_92] : memref<3x128x128xbf16, #tpu.memory_space<vmem>>, vector<1x128x128xbf16>
    %89 = vector.shape_cast %88 : vector<1x128x128xbf16> to vector<128x128xbf16>
    %cst_93 = arith.constant dense<0.000000e+00> : vector<128x128xf32>
    %90 = tpu.matmul %83, %89, %cst_93 {dimension_numbers = #tpu.dot_dimension_numbers<[1], [0], [0], [1], [0, 0, 1, 1], [], []>} : vector<128x128xbf16>, vector<128x128xbf16>, vector<128x128xf32> -> vector<128x128xf32>
    %91 = arith.addf %87, %90 : vector<128x128xf32>
    %c2_94 = arith.constant 2 : index
    %c0_95 = arith.constant 0 : index
    %c0_96 = arith.constant 0 : index
    %92 = vector.load %arg8[%c2_94, %c0_95, %c0_96] : memref<3x128x128xbf16, #tpu.memory_space<vmem>>, vector<1x128x128xbf16>
    %93 = vector.shape_cast %92 : vector<1x128x128xbf16> to vector<128x128xbf16>
    %cst_97 = arith.constant dense<0.000000e+00> : vector<128x128xf32>
    %94 = tpu.matmul %84, %93, %cst_97 {dimension_numbers = #tpu.dot_dimension_numbers<[1], [0], [0], [1], [0, 0, 1, 1], [], []>} : vector<128x128xbf16>, vector<128x128xbf16>, vector<128x128xf32> -> vector<128x128xf32>
    %95 = arith.addf %91, %94 : vector<128x128xf32>
    %c0_98 = arith.constant 0 : index
    %c0_99 = arith.constant 0 : index
    %96 = vector.load %arg9[%c0_98, %c0_99] : memref<1x128xf32, #tpu.memory_space<vmem>>, vector<1x128xf32>
    %97 = vector.broadcast %96 : vector<1x128xf32> to vector<128x128xf32>
    %98 = arith.addf %95, %97 : vector<128x128xf32>
    %cst_100 = arith.constant 0.000000e+00 : f32
    %99 = vector.broadcast %cst_100 : f32 to vector<128x128xf32>
    %100 = arith.maximumf %98, %99 : vector<128x128xf32>
    %101 = arith.truncf %100 : vector<128x128xf32> to vector<128x128xbf16>
    %c16_101 = arith.constant 16 : index
    %c0_102 = arith.constant 0 : index
    %102 = vector.load %arg22[%c16_101, %c0_102] : memref<160x128xbf16, #tpu.memory_space<vmem>>, vector<128x128xbf16>
    tpu.vector_store %arg22[%c16_101, %c0_102], %101 {strides = array<i32>} : memref<160x128xbf16, #tpu.memory_space<vmem>>, vector<128x128xbf16>,
    %c144_103 = arith.constant 144 : index
    %c0_104 = arith.constant 0 : index
    %103 = vector.load %arg21[%c144_103, %c0_104] : memref<272x128xbf16, #tpu.memory_space<vmem>>, vector<128x128xbf16>
    %c0_105 = arith.constant 0 : index
    %c0_106 = arith.constant 0 : index
    %104 = vector.load %arg10[%c0_105, %c0_106] : memref<128x128xbf16, #tpu.memory_space<vmem>>, vector<128x128xbf16>
    %cst_107 = arith.constant dense<0.000000e+00> : vector<128x128xf32>
    %105 = tpu.matmul %103, %104, %cst_107 {dimension_numbers = #tpu.dot_dimension_numbers<[1], [0], [0], [1], [0, 0, 1, 1], [], []>} : vector<128x128xbf16>, vector<128x128xbf16>, vector<128x128xf32> -> vector<128x128xf32>
    %c0_108 = arith.constant 0 : index
    %c0_109 = arith.constant 0 : index
    %106 = vector.load %arg11[%c0_108, %c0_109] : memref<1x128xf32, #tpu.memory_space<vmem>>, vector<1x128xf32>
    %107 = vector.broadcast %106 : vector<1x128xf32> to vector<128x128xf32>
    %108 = arith.addf %105, %107 : vector<128x128xf32>
    %c0_110 = arith.constant 0 : index
    %c0_111 = arith.constant 0 : index
    %109 = vector.load %arg22[%c0_110, %c0_111] : memref<160x128xbf16, #tpu.memory_space<vmem>>, vector<128x128xbf16>
    %c16_112 = arith.constant 16 : index
    %c0_113 = arith.constant 0 : index
    %110 = vector.load %arg22[%c16_112, %c0_113] : memref<160x128xbf16, #tpu.memory_space<vmem>>, vector<128x128xbf16>
    %c32_114 = arith.constant 32 : index
    %c0_115 = arith.constant 0 : index
    %111 = vector.load %arg22[%c32_114, %c0_115] : memref<160x128xbf16, #tpu.memory_space<vmem>>, vector<128x128xbf16>
    %c0_116 = arith.constant 0 : index
    %c0_117 = arith.constant 0 : index
    %c0_118 = arith.constant 0 : index
    %112 = vector.load %arg12[%c0_116, %c0_117, %c0_118] : memref<3x128x128xbf16, #tpu.memory_space<vmem>>, vector<1x128x128xbf16>
    %113 = vector.shape_cast %112 : vector<1x128x128xbf16> to vector<128x128xbf16>
    %cst_119 = arith.constant dense<0.000000e+00> : vector<128x128xf32>
    %114 = tpu.matmul %109, %113, %cst_119 {dimension_numbers = #tpu.dot_dimension_numbers<[1], [0], [0], [1], [0, 0, 1, 1], [], []>} : vector<128x128xbf16>, vector<128x128xbf16>, vector<128x128xf32> -> vector<128x128xf32>
    %c1_120 = arith.constant 1 : index
    %c0_121 = arith.constant 0 : index
    %c0_122 = arith.constant 0 : index
    %115 = vector.load %arg12[%c1_120, %c0_121, %c0_122] : memref<3x128x128xbf16, #tpu.memory_space<vmem>>, vector<1x128x128xbf16>
    %116 = vector.shape_cast %115 : vector<1x128x128xbf16> to vector<128x128xbf16>
    %cst_123 = arith.constant dense<0.000000e+00> : vector<128x128xf32>
    %117 = tpu.matmul %110, %116, %cst_123 {dimension_numbers = #tpu.dot_dimension_numbers<[1], [0], [0], [1], [0, 0, 1, 1], [], []>} : vector<128x128xbf16>, vector<128x128xbf16>, vector<128x128xf32> -> vector<128x128xf32>
    %118 = arith.addf %114, %117 : vector<128x128xf32>
    %c2_124 = arith.constant 2 : index
    %c0_125 = arith.constant 0 : index
    %c0_126 = arith.constant 0 : index
    %119 = vector.load %arg12[%c2_124, %c0_125, %c0_126] : memref<3x128x128xbf16, #tpu.memory_space<vmem>>, vector<1x128x128xbf16>
    %120 = vector.shape_cast %119 : vector<1x128x128xbf16> to vector<128x128xbf16>
    %cst_127 = arith.constant dense<0.000000e+00> : vector<128x128xf32>
    %121 = tpu.matmul %111, %120, %cst_127 {dimension_numbers = #tpu.dot_dimension_numbers<[1], [0], [0], [1], [0, 0, 1, 1], [], []>} : vector<128x128xbf16>, vector<128x128xbf16>, vector<128x128xf32> -> vector<128x128xf32>
    %122 = arith.addf %118, %121 : vector<128x128xf32>
    %c0_128 = arith.constant 0 : index
    %c0_129 = arith.constant 0 : index
    %123 = vector.load %arg13[%c0_128, %c0_129] : memref<1x128xf32, #tpu.memory_space<vmem>>, vector<1x128xf32>
    %124 = vector.broadcast %123 : vector<1x128xf32> to vector<128x128xf32>
    %125 = arith.addf %122, %124 : vector<128x128xf32>
    %126 = arith.addf %125, %108 : vector<128x128xf32>
    %cst_130 = arith.constant 0.000000e+00 : f32
    %127 = vector.broadcast %cst_130 : f32 to vector<128x128xf32>
    %128 = arith.maximumf %126, %127 : vector<128x128xf32>
    %129 = arith.truncf %128 : vector<128x128xf32> to vector<128x128xbf16>
    %cst_131 = arith.constant 0.000000e+00 : f32
    %130 = vector.broadcast %cst_131 : f32 to vector<16x128xf32>
    %131 = vector.extract_strided_slice %129 {offsets = [0, 0], sizes = [16, 128], strides = [1, 1]} : vector<128x128xbf16> to vector<16x128xbf16>
    %c0_132 = arith.constant 0 : index
    %c0_133 = arith.constant 0 : index
    %c0_134 = arith.constant 0 : index
    %132 = vector.load %arg14[%c0_132, %c0_133, %c0_134] : memref<8x128x128xbf16, #tpu.memory_space<vmem>>, vector<1x128x128xbf16>
    %133 = vector.shape_cast %132 : vector<1x128x128xbf16> to vector<128x128xbf16>
    %cst_135 = arith.constant dense<0.000000e+00> : vector<16x128xf32>
    %134 = tpu.matmul %131, %133, %cst_135 {dimension_numbers = #tpu.dot_dimension_numbers<[1], [0], [0], [1], [0, 0, 1, 1], [], []>} : vector<16x128xbf16>, vector<128x128xbf16>, vector<16x128xf32> -> vector<16x128xf32>
    %135 = arith.addf %130, %134 : vector<16x128xf32>
    %136 = vector.extract_strided_slice %129 {offsets = [16, 0], sizes = [16, 128], strides = [1, 1]} : vector<128x128xbf16> to vector<16x128xbf16>
    %c1_136 = arith.constant 1 : index
    %c0_137 = arith.constant 0 : index
    %c0_138 = arith.constant 0 : index
    %137 = vector.load %arg14[%c1_136, %c0_137, %c0_138] : memref<8x128x128xbf16, #tpu.memory_space<vmem>>, vector<1x128x128xbf16>
    %138 = vector.shape_cast %137 : vector<1x128x128xbf16> to vector<128x128xbf16>
    %cst_139 = arith.constant dense<0.000000e+00> : vector<16x128xf32>
    %139 = tpu.matmul %136, %138, %cst_139 {dimension_numbers = #tpu.dot_dimension_numbers<[1], [0], [0], [1], [0, 0, 1, 1], [], []>} : vector<16x128xbf16>, vector<128x128xbf16>, vector<16x128xf32> -> vector<16x128xf32>
    %140 = arith.addf %135, %139 : vector<16x128xf32>
    %141 = vector.extract_strided_slice %129 {offsets = [32, 0], sizes = [16, 128], strides = [1, 1]} : vector<128x128xbf16> to vector<16x128xbf16>
    %c2_140 = arith.constant 2 : index
    %c0_141 = arith.constant 0 : index
    %c0_142 = arith.constant 0 : index
    %142 = vector.load %arg14[%c2_140, %c0_141, %c0_142] : memref<8x128x128xbf16, #tpu.memory_space<vmem>>, vector<1x128x128xbf16>
    %143 = vector.shape_cast %142 : vector<1x128x128xbf16> to vector<128x128xbf16>
    %cst_143 = arith.constant dense<0.000000e+00> : vector<16x128xf32>
    %144 = tpu.matmul %141, %143, %cst_143 {dimension_numbers = #tpu.dot_dimension_numbers<[1], [0], [0], [1], [0, 0, 1, 1], [], []>} : vector<16x128xbf16>, vector<128x128xbf16>, vector<16x128xf32> -> vector<16x128xf32>
    %145 = arith.addf %140, %144 : vector<16x128xf32>
    %146 = vector.extract_strided_slice %129 {offsets = [48, 0], sizes = [16, 128], strides = [1, 1]} : vector<128x128xbf16> to vector<16x128xbf16>
    %c3 = arith.constant 3 : index
    %c0_144 = arith.constant 0 : index
    %c0_145 = arith.constant 0 : index
    %147 = vector.load %arg14[%c3, %c0_144, %c0_145] : memref<8x128x128xbf16, #tpu.memory_space<vmem>>, vector<1x128x128xbf16>
    %148 = vector.shape_cast %147 : vector<1x128x128xbf16> to vector<128x128xbf16>
    %cst_146 = arith.constant dense<0.000000e+00> : vector<16x128xf32>
    %149 = tpu.matmul %146, %148, %cst_146 {dimension_numbers = #tpu.dot_dimension_numbers<[1], [0], [0], [1], [0, 0, 1, 1], [], []>} : vector<16x128xbf16>, vector<128x128xbf16>, vector<16x128xf32> -> vector<16x128xf32>
    %150 = arith.addf %145, %149 : vector<16x128xf32>
    %151 = vector.extract_strided_slice %129 {offsets = [64, 0], sizes = [16, 128], strides = [1, 1]} : vector<128x128xbf16> to vector<16x128xbf16>
    %c4 = arith.constant 4 : index
    %c0_147 = arith.constant 0 : index
    %c0_148 = arith.constant 0 : index
    %152 = vector.load %arg14[%c4, %c0_147, %c0_148] : memref<8x128x128xbf16, #tpu.memory_space<vmem>>, vector<1x128x128xbf16>
    %153 = vector.shape_cast %152 : vector<1x128x128xbf16> to vector<128x128xbf16>
    %cst_149 = arith.constant dense<0.000000e+00> : vector<16x128xf32>
    %154 = tpu.matmul %151, %153, %cst_149 {dimension_numbers = #tpu.dot_dimension_numbers<[1], [0], [0], [1], [0, 0, 1, 1], [], []>} : vector<16x128xbf16>, vector<128x128xbf16>, vector<16x128xf32> -> vector<16x128xf32>
    %155 = arith.addf %150, %154 : vector<16x128xf32>
    %156 = vector.extract_strided_slice %129 {offsets = [80, 0], sizes = [16, 128], strides = [1, 1]} : vector<128x128xbf16> to vector<16x128xbf16>
    %c5 = arith.constant 5 : index
    %c0_150 = arith.constant 0 : index
    %c0_151 = arith.constant 0 : index
    %157 = vector.load %arg14[%c5, %c0_150, %c0_151] : memref<8x128x128xbf16, #tpu.memory_space<vmem>>, vector<1x128x128xbf16>
    %158 = vector.shape_cast %157 : vector<1x128x128xbf16> to vector<128x128xbf16>
    %cst_152 = arith.constant dense<0.000000e+00> : vector<16x128xf32>
    %159 = tpu.matmul %156, %158, %cst_152 {dimension_numbers = #tpu.dot_dimension_numbers<[1], [0], [0], [1], [0, 0, 1, 1], [], []>} : vector<16x128xbf16>, vector<128x128xbf16>, vector<16x128xf32> -> vector<16x128xf32>
    %160 = arith.addf %155, %159 : vector<16x128xf32>
    %161 = vector.extract_strided_slice %129 {offsets = [96, 0], sizes = [16, 128], strides = [1, 1]} : vector<128x128xbf16> to vector<16x128xbf16>
    %c6 = arith.constant 6 : index
    %c0_153 = arith.constant 0 : index
    %c0_154 = arith.constant 0 : index
    %162 = vector.load %arg14[%c6, %c0_153, %c0_154] : memref<8x128x128xbf16, #tpu.memory_space<vmem>>, vector<1x128x128xbf16>
    %163 = vector.shape_cast %162 : vector<1x128x128xbf16> to vector<128x128xbf16>
    %cst_155 = arith.constant dense<0.000000e+00> : vector<16x128xf32>
    %164 = tpu.matmul %161, %163, %cst_155 {dimension_numbers = #tpu.dot_dimension_numbers<[1], [0], [0], [1], [0, 0, 1, 1], [], []>} : vector<16x128xbf16>, vector<128x128xbf16>, vector<16x128xf32> -> vector<16x128xf32>
    %165 = arith.addf %160, %164 : vector<16x128xf32>
    %166 = vector.extract_strided_slice %129 {offsets = [112, 0], sizes = [16, 128], strides = [1, 1]} : vector<128x128xbf16> to vector<16x128xbf16>
    %c7 = arith.constant 7 : index
    %c0_156 = arith.constant 0 : index
    %c0_157 = arith.constant 0 : index
    %167 = vector.load %arg14[%c7, %c0_156, %c0_157] : memref<8x128x128xbf16, #tpu.memory_space<vmem>>, vector<1x128x128xbf16>
    %168 = vector.shape_cast %167 : vector<1x128x128xbf16> to vector<128x128xbf16>
    %cst_158 = arith.constant dense<0.000000e+00> : vector<16x128xf32>
    %169 = tpu.matmul %166, %168, %cst_158 {dimension_numbers = #tpu.dot_dimension_numbers<[1], [0], [0], [1], [0, 0, 1, 1], [], []>} : vector<16x128xbf16>, vector<128x128xbf16>, vector<16x128xf32> -> vector<16x128xf32>
    %170 = arith.addf %165, %169 : vector<16x128xf32>
    %c0_159 = arith.constant 0 : index
    %c0_160 = arith.constant 0 : index
    %171 = vector.load %arg15[%c0_159, %c0_160] : memref<1x128xf32, #tpu.memory_space<vmem>>, vector<1x128xf32>
    %172 = vector.broadcast %171 : vector<1x128xf32> to vector<16x128xf32>
    %173 = arith.addf %170, %172 : vector<16x128xf32>
    %cst_161 = arith.constant 0.000000e+00 : f32
    %174 = vector.broadcast %cst_161 : f32 to vector<16x128xf32>
    %175 = arith.maximumf %173, %174 : vector<16x128xf32>
    %176 = arith.truncf %175 : vector<16x128xf32> to vector<16x128xbf16>
    %c0_162 = arith.constant 0 : index
    %c0_163 = arith.constant 0 : index
    %177 = vector.load %arg16[%c0_162, %c0_163] : memref<128x128xbf16, #tpu.memory_space<vmem>>, vector<128x128xbf16>
    %cst_164 = arith.constant dense<0.000000e+00> : vector<16x128xf32>
    %178 = tpu.matmul %176, %177, %cst_164 {dimension_numbers = #tpu.dot_dimension_numbers<[1], [0], [0], [1], [0, 0, 1, 1], [], []>} : vector<16x128xbf16>, vector<128x128xbf16>, vector<16x128xf32> -> vector<16x128xf32>
    %c0_165 = arith.constant 0 : index
    %c0_166 = arith.constant 0 : index
    %179 = vector.load %arg17[%c0_165, %c0_166] : memref<1x128xf32, #tpu.memory_space<vmem>>, vector<1x128xf32>
    %180 = vector.broadcast %179 : vector<1x128xf32> to vector<16x128xf32>
    %181 = arith.addf %178, %180 : vector<16x128xf32>
    %c0_167 = arith.constant 0 : index
    %c0_168 = arith.constant 0 : index
    %182 = vector.load %arg18[%c0_167, %c0_168] : memref<16x128xf32, #tpu.memory_space<vmem>>, vector<16x128xf32>
    tpu.vector_store %arg18[%c0_167, %c0_168], %181 {strides = array<i32>} : memref<16x128xf32, #tpu.memory_space<vmem>>, vector<16x128xf32>,
    return
  }
  func.func @transform_0(%arg0: i32) -> (i32, i32) {
    %c0_i32 = arith.constant 0 : i32
    %c0_i32_0 = arith.constant 0 : i32
    return %arg0, %c0_i32 : i32, i32
  }
  func.func @transform_1(%arg0: i32) -> (i32, i32, i32) {
    %c0_i32 = arith.constant 0 : i32
    %c0_i32_0 = arith.constant 0 : i32
    %c0_i32_1 = arith.constant 0 : i32
    %c0_i32_2 = arith.constant 0 : i32
    return %c0_i32, %c0_i32_0, %c0_i32_1 : i32, i32, i32
  }
  func.func @transform_2(%arg0: i32) -> (i32, i32) {
    %c0_i32 = arith.constant 0 : i32
    %c0_i32_0 = arith.constant 0 : i32
    %c0_i32_1 = arith.constant 0 : i32
    return %c0_i32, %c0_i32_0 : i32, i32
  }
  func.func @transform_3(%arg0: i32) -> (i32, i32, i32) {
    %c0_i32 = arith.constant 0 : i32
    %c0_i32_0 = arith.constant 0 : i32
    %c0_i32_1 = arith.constant 0 : i32
    %c0_i32_2 = arith.constant 0 : i32
    return %c0_i32, %c0_i32_0, %c0_i32_1 : i32, i32, i32
  }
  func.func @transform_4(%arg0: i32) -> (i32, i32) {
    %c0_i32 = arith.constant 0 : i32
    %c0_i32_0 = arith.constant 0 : i32
    %c0_i32_1 = arith.constant 0 : i32
    return %c0_i32, %c0_i32_0 : i32, i32
  }
  func.func @transform_5(%arg0: i32) -> (i32, i32, i32) {
    %c0_i32 = arith.constant 0 : i32
    %c0_i32_0 = arith.constant 0 : i32
    %c0_i32_1 = arith.constant 0 : i32
    %c0_i32_2 = arith.constant 0 : i32
    return %c0_i32, %c0_i32_0, %c0_i32_1 : i32, i32, i32
  }
  func.func @transform_6(%arg0: i32) -> (i32, i32) {
    %c0_i32 = arith.constant 0 : i32
    %c0_i32_0 = arith.constant 0 : i32
    %c0_i32_1 = arith.constant 0 : i32
    return %c0_i32, %c0_i32_0 : i32, i32
  }
  func.func @transform_7(%arg0: i32) -> (i32, i32, i32) {
    %c0_i32 = arith.constant 0 : i32
    %c0_i32_0 = arith.constant 0 : i32
    %c0_i32_1 = arith.constant 0 : i32
    %c0_i32_2 = arith.constant 0 : i32
    return %c0_i32, %c0_i32_0, %c0_i32_1 : i32, i32, i32
  }
  func.func @transform_8(%arg0: i32) -> (i32, i32) {
    %c0_i32 = arith.constant 0 : i32
    %c0_i32_0 = arith.constant 0 : i32
    %c0_i32_1 = arith.constant 0 : i32
    return %c0_i32, %c0_i32_0 : i32, i32
  }
  func.func @transform_9(%arg0: i32) -> (i32, i32) {
    %c0_i32 = arith.constant 0 : i32
    %c0_i32_0 = arith.constant 0 : i32
    %c0_i32_1 = arith.constant 0 : i32
    return %c0_i32, %c0_i32_0 : i32, i32
  }
  func.func @transform_10(%arg0: i32) -> (i32, i32) {
    %c0_i32 = arith.constant 0 : i32
    %c0_i32_0 = arith.constant 0 : i32
    %c0_i32_1 = arith.constant 0 : i32
    return %c0_i32, %c0_i32_0 : i32, i32
  }
  func.func @transform_11(%arg0: i32) -> (i32, i32, i32) {
    %c0_i32 = arith.constant 0 : i32
    %c0_i32_0 = arith.constant 0 : i32
    %c0_i32_1 = arith.constant 0 : i32
    %c0_i32_2 = arith.constant 0 : i32
    return %c0_i32, %c0_i32_0, %c0_i32_1 : i32, i32, i32
  }
  func.func @transform_12(%arg0: i32) -> (i32, i32) {
    %c0_i32 = arith.constant 0 : i32
    %c0_i32_0 = arith.constant 0 : i32
    %c0_i32_1 = arith.constant 0 : i32
    return %c0_i32, %c0_i32_0 : i32, i32
  }
  func.func @transform_13(%arg0: i32) -> (i32, i32, i32) {
    %c0_i32 = arith.constant 0 : i32
    %c0_i32_0 = arith.constant 0 : i32
    %c0_i32_1 = arith.constant 0 : i32
    %c0_i32_2 = arith.constant 0 : i32
    return %c0_i32, %c0_i32_0, %c0_i32_1 : i32, i32, i32
  }
  func.func @transform_14(%arg0: i32) -> (i32, i32) {
    %c0_i32 = arith.constant 0 : i32
    %c0_i32_0 = arith.constant 0 : i32
    %c0_i32_1 = arith.constant 0 : i32
    return %c0_i32, %c0_i32_0 : i32, i32
  }
  func.func @transform_15(%arg0: i32) -> (i32, i32) {
    %c0_i32 = arith.constant 0 : i32
    %c0_i32_0 = arith.constant 0 : i32
    %c0_i32_1 = arith.constant 0 : i32
    return %c0_i32, %c0_i32_0 : i32, i32
  }
  func.func @transform_16(%arg0: i32) -> (i32, i32) {
    %c0_i32 = arith.constant 0 : i32
    %c0_i32_0 = arith.constant 0 : i32
    %c0_i32_1 = arith.constant 0 : i32
    return %c0_i32, %c0_i32_0 : i32, i32
  }
  func.func @transform_17(%arg0: i32) -> (i32, i32) {
    %c0_i32 = arith.constant 0 : i32
    %c0_i32_0 = arith.constant 0 : i32
    return %arg0, %c0_i32 : i32, i32
  }
}

</mosaic_0001>

<llo_original>
// kernel: resnet_forward.1
$region0: #{resnet_forward.1}
  #allocation0 [shape = 'u32[]', space=smem, size = 0x4, offset = 0x4, fixed_abs, tag = 'smem constant byte address 0x4 - core index']
  #allocation1 [shape = 'u32[144,128]{1,0:T(1,128)}', space=vmem, size = 0x12000, scoped, tag = 'internal scratch']
  #allocation2 [shape = 'bf16[288,128]{1,0:T(16,128)(2,1)}', space=vmem, size = 0x12000, scoped, tag = 'scratch operand']
  #allocation3 [shape = 'bf16[288,128]{1,0:T(16,128)(2,1)}', space=vmem, size = 0x12000, scoped, tag = 'scratch operand']
  #allocation4 [shape = 'bf16[272,128]{1,0:T(16,128)(2,1)}', space=vmem, size = 0x11000, scoped, tag = 'scratch operand']
  #allocation5 [shape = 'bf16[160,128]{1,0:T(16,128)(2,1)}', space=vmem, size = 0xa000, scoped, tag = 'scratch operand']
  %s0 = inlined_call_operand.vmem [shape: bf16[1088,128], index: 0, kind: input, shape index: {}]
  %s1 = inlined_call_operand.vmem [shape: bf16[3,128,128], index: 1, kind: input, shape index: {}]
  %s2 = inlined_call_operand.vmem [shape: f32[1,128], index: 2, kind: input, shape index: {}]
  %s3 = inlined_call_operand.vmem [shape: bf16[3,128,128], index: 3, kind: input, shape index: {}]
  %s4 = inlined_call_operand.vmem [shape: f32[1,128], index: 4, kind: input, shape index: {}]
  %s5 = inlined_call_operand.vmem [shape: bf16[3,128,128], index: 5, kind: input, shape index: {}]
  %s6 = inlined_call_operand.vmem [shape: f32[1,128], index: 6, kind: input, shape index: {}]
  %s7 = inlined_call_operand.vmem [shape: bf16[3,128,128], index: 7, kind: input, shape index: {}]
  %s8 = inlined_call_operand.vmem [shape: f32[1,128], index: 8, kind: input, shape index: {}]
  %s9 = inlined_call_operand.vmem [shape: bf16[128,128], index: 9, kind: input, shape index: {}]
  %s10 = inlined_call_operand.vmem [shape: f32[1,128], index: 10, kind: input, shape index: {}]
  %s11 = inlined_call_operand.vmem [shape: bf16[3,128,128], index: 11, kind: input, shape index: {}]
  %s12 = inlined_call_operand.vmem [shape: f32[1,128], index: 12, kind: input, shape index: {}]
  %s13 = inlined_call_operand.vmem [shape: bf16[8,128,128], index: 13, kind: input, shape index: {}]
  %s14 = inlined_call_operand.vmem [shape: f32[1,128], index: 14, kind: input, shape index: {}]
  %s15 = inlined_call_operand.vmem [shape: bf16[128,128], index: 15, kind: input, shape index: {}]
  %s16 = inlined_call_operand.vmem [shape: f32[1,128], index: 16, kind: input, shape index: {}]
  %s17 = inlined_call_operand.vmem [shape: f32[32,128], index: 17, kind: output, shape index: {}]
  %s18 = sld [smem:[#allocation0]]
  $region101: #{resnet_forward.1} parent=0
    _
  %s20 = ssub.s32 1, %s18
  %s21 = scalar_select 0, %s20, %s18
  loop: start=0, step=1, limit=4
  $region2: #{resnet_forward.1} parent=0 // loop_pre_header
    _
  $region3: #{resnet_forward.1} parent=0 // loop_header
    %s23 = sphi 0, %s27
    %p24 = scmp.ge.s32.totalorder %s23, 4
    %s33 = sphi 0, %s35
    %s36 = sphi 0, %s33
    %s37 = sphi 0, %s36
    %s53 = sphi 0, %s37
    %s57 = sphi 0, %s57
    %s59 = sphi 0, %s57
    %s60 = sphi 0, %s59
    %s74 = sphi 0, %s60
    %s78 = sphi 0, %s78
    %s80 = sphi 0, %s78
    %s81 = sphi 0, %s80
    %s95 = sphi 0, %s81
    %s99 = sphi 0, %s99
    %s101 = sphi 0, %s99
    %s102 = sphi 0, %s101
    %s116 = sphi 0, %s102
    %s120 = sphi 0, %s120
    %s122 = sphi 0, %s120
    %s123 = sphi 0, %s122
    %s137 = sphi 0, %s123
    %s141 = sphi 0, %s141
    %s143 = sphi 0, %s141
    %s144 = sphi 0, %s143
    %s158 = sphi 0, %s144
    %s162 = sphi 0, %s162
    %s164 = sphi 0, %s162
    %s165 = sphi 0, %s164
    %s179 = sphi 0, %s165
    %s183 = sphi 0, %s183
    %s185 = sphi 0, %s183
    %s186 = sphi 0, %s185
    %s200 = sphi 0, %s186
    %s204 = sphi 0, %s204
    %s206 = sphi 0, %s204
    %s207 = sphi 0, %s206
    %s221 = sphi 0, %s207
    %s225 = sphi 0, %s225
    %s227 = sphi 0, %s225
    %s228 = sphi 0, %s227
    %s242 = sphi 0, %s228
    %s246 = sphi 0, %s246
    %s248 = sphi 0, %s246
    %s249 = sphi 0, %s248
    %s263 = sphi 0, %s249
    %s267 = sphi 0, %s267
    %s269 = sphi 0, %s267
    %s270 = sphi 0, %s269
    %s284 = sphi 0, %s270
    %s288 = sphi 0, %s288
    %s290 = sphi 0, %s288
    %s291 = sphi 0, %s290
    %s305 = sphi 0, %s291
    %s309 = sphi 0, %s309
    %s311 = sphi 0, %s309
    %s312 = sphi 0, %s311
    %s326 = sphi 0, %s312
    %s330 = sphi 0, %s330
    %s332 = sphi 0, %s330
    %s333 = sphi 0, %s332
    %s347 = sphi 0, %s333
    %s351 = sphi 0, %s351
    %s353 = sphi 0, %s351
    %s354 = sphi 0, %s353
    %s368 = sphi 0, %s354
    %s372 = sphi 0, %s372
    %s374 = sphi 0, %s372
    %s375 = sphi 0, %s374
    %s389 = sphi 0, %s375
    %s395 = sphi 0, %s397
    %s398 = sphi 0, %s395
    %s399 = sphi 0, %s398
    %s415 = sphi 0, %s399
  $region4: #{resnet_forward.1} parent=0 // loop_header_branch
    %26 = sbr.rel (%p24) target = $region8
  $region5: #{resnet_forward.1} parent=0 // loop_body
    %s28 = ssub.s32 %s23, 1
    %s29 = ssub.s32 %s23, 2
    %s30 = sadd.s32 %s23, 1
    %s31 = ssub.s32 %s23, %s30
    %p32 = scmp.eq.s32.totalorder %s31, 0
    %s34 = sadd.s32 %s33, 1
    %s35 = scalar_select %p32, %s33, %s34
    %p38 = pneg %p32
    %p39 = scmp.eq.s32.totalorder %s23, 1
    %p40 = por %p38, %p39
    %p41 = scmp.ne.s32.totalorder %s33, %s36
    %p42 = scmp.eq.s32.totalorder %s23, 0
    %p43 = por %p41, %p42
    %p44 = scmp.ne.s32.totalorder %s33, %s36
    %p45 = scmp.eq.s32.totalorder %s28, 1
    %p46 = por %p44, %p45
    %p47 = scmp.ne.s32.totalorder %s36, %s37
    %p48 = scmp.eq.s32.totalorder %s28, 0
    %p49 = por %p47, %p48
    %p50 = scmp.ne.s32.totalorder %s36, %s37
    %p51 = scmp.eq.s32.totalorder %s29, 1
    %p52 = por %p50, %p51
    %p54 = scmp.ne.s32.totalorder %s37, %s53
    %p55 = scmp.eq.s32.totalorder %s29, 0
    %p56 = por %p54, %p55
    %s58 = sadd.s32 %s57, 1
    %p61 = scmp.eq.s32.totalorder %s23, 1
    %p62 = scmp.ne.s32.totalorder %s57, %s59
    %p63 = scmp.eq.s32.totalorder %s23, 0
    %p64 = por %p62, %p63
    %p65 = scmp.ne.s32.totalorder %s57, %s59
    %p66 = scmp.eq.s32.totalorder %s28, 1
    %p67 = por %p65, %p66
    %p68 = scmp.ne.s32.totalorder %s59, %s60
    %p69 = scmp.eq.s32.totalorder %s28, 0
    %p70 = por %p68, %p69
    %p71 = scmp.ne.s32.totalorder %s59, %s60
    %p72 = scmp.eq.s32.totalorder %s29, 1
    %p73 = por %p71, %p72
    %p75 = scmp.ne.s32.totalorder %s60, %s74
    %p76 = scmp.eq.s32.totalorder %s29, 0
    %p77 = por %p75, %p76
    %s79 = sadd.s32 %s78, 1
    %p82 = scmp.eq.s32.totalorder %s23, 1
    %p83 = scmp.ne.s32.totalorder %s78, %s80
    %p84 = scmp.eq.s32.totalorder %s23, 0
    %p85 = por %p83, %p84
    %p86 = scmp.ne.s32.totalorder %s78, %s80
    %p87 = scmp.eq.s32.totalorder %s28, 1
    %p88 = por %p86, %p87
    %p89 = scmp.ne.s32.totalorder %s80, %s81
    %p90 = scmp.eq.s32.totalorder %s28, 0
    %p91 = por %p89, %p90
    %p92 = scmp.ne.s32.totalorder %s80, %s81
    %p93 = scmp.eq.s32.totalorder %s29, 1
    %p94 = por %p92, %p93
    %p96 = scmp.ne.s32.totalorder %s81, %s95
    %p97 = scmp.eq.s32.totalorder %s29, 0
    %p98 = por %p96, %p97
    %s100 = sadd.s32 %s99, 1
    %p103 = scmp.eq.s32.totalorder %s23, 1
    %p104 = scmp.ne.s32.totalorder %s99, %s101
    %p105 = scmp.eq.s32.totalorder %s23, 0
    %p106 = por %p104, %p105
    %p107 = scmp.ne.s32.totalorder %s99, %s101
    %p108 = scmp.eq.s32.totalorder %s28, 1
    %p109 = por %p107, %p108
    %p110 = scmp.ne.s32.totalorder %s101, %s102
    %p111 = scmp.eq.s32.totalorder %s28, 0
    %p112 = por %p110, %p111
    %p113 = scmp.ne.s32.totalorder %s101, %s102
    %p114 = scmp.eq.s32.totalorder %s29, 1
    %p115 = por %p113, %p114
    %p117 = scmp.ne.s32.totalorder %s102, %s116
    %p118 = scmp.eq.s32.totalorder %s29, 0
    %p119 = por %p117, %p118
    %s121 = sadd.s32 %s120, 1
    %p124 = scmp.eq.s32.totalorder %s23, 1
    %p125 = scmp.ne.s32.totalorder %s120, %s122
    %p126 = scmp.eq.s32.totalorder %s23, 0
    %p127 = por %p125, %p126
    %p128 = scmp.ne.s32.totalorder %s120, %s122
    %p129 = scmp.eq.s32.totalorder %s28, 1
    %p130 = por %p128, %p129
    %p131 = scmp.ne.s32.totalorder %s122, %s123
    %p132 = scmp.eq.s32.totalorder %s28, 0
    %p133 = por %p131, %p132
    %p134 = scmp.ne.s32.totalorder %s122, %s123
    %p135 = scmp.eq.s32.totalorder %s29, 1
    %p136 = por %p134, %p135
    %p138 = scmp.ne.s32.totalorder %s123, %s137
    %p139 = scmp.eq.s32.totalorder %s29, 0
    %p140 = por %p138, %p139
    %s142 = sadd.s32 %s141, 1
    %p145 = scmp.eq.s32.totalorder %s23, 1
    %p146 = scmp.ne.s32.totalorder %s141, %s143
    %p147 = scmp.eq.s32.totalorder %s23, 0
    %p148 = por %p146, %p147
    %p149 = scmp.ne.s32.totalorder %s141, %s143
    %p150 = scmp.eq.s32.totalorder %s28, 1
    %p151 = por %p149, %p150
    %p152 = scmp.ne.s32.totalorder %s143, %s144
    %p153 = scmp.eq.s32.totalorder %s28, 0
    %p154 = por %p152, %p153
    %p155 = scmp.ne.s32.totalorder %s143, %s144
    %p156 = scmp.eq.s32.totalorder %s29, 1
    %p157 = por %p155, %p156
    %p159 = scmp.ne.s32.totalorder %s144, %s158
    %p160 = scmp.eq.s32.totalorder %s29, 0
    %p161 = por %p159, %p160
    %s163 = sadd.s32 %s162, 1
    %p166 = scmp.eq.s32.totalorder %s23, 1
    %p167 = scmp.ne.s32.totalorder %s162, %s164
    %p168 = scmp.eq.s32.totalorder %s23, 0
    %p169 = por %p167, %p168
    %p170 = scmp.ne.s32.totalorder %s162, %s164
    %p171 = scmp.eq.s32.totalorder %s28, 1
    %p172 = por %p170, %p171
    %p173 = scmp.ne.s32.totalorder %s164, %s165
    %p174 = scmp.eq.s32.totalorder %s28, 0
    %p175 = por %p173, %p174
    %p176 = scmp.ne.s32.totalorder %s164, %s165
    %p177 = scmp.eq.s32.totalorder %s29, 1
    %p178 = por %p176, %p177
    %p180 = scmp.ne.s32.totalorder %s165, %s179
    %p181 = scmp.eq.s32.totalorder %s29, 0
    %p182 = por %p180, %p181
    %s184 = sadd.s32 %s183, 1
    %p187 = scmp.eq.s32.totalorder %s23, 1
    %p188 = scmp.ne.s32.totalorder %s183, %s185
    %p189 = scmp.eq.s32.totalorder %s23, 0
    %p190 = por %p188, %p189
    %p191 = scmp.ne.s32.totalorder %s183, %s185
    %p192 = scmp.eq.s32.totalorder %s28, 1
    %p193 = por %p191, %p192
    %p194 = scmp.ne.s32.totalorder %s185, %s186
    %p195 = scmp.eq.s32.totalorder %s28, 0
    %p196 = por %p194, %p195
    %p197 = scmp.ne.s32.totalorder %s185, %s186
    %p198 = scmp.eq.s32.totalorder %s29, 1
    %p199 = por %p197, %p198
    %p201 = scmp.ne.s32.totalorder %s186, %s200
    %p202 = scmp.eq.s32.totalorder %s29, 0
    %p203 = por %p201, %p202
    %s205 = sadd.s32 %s204, 1
    %p208 = scmp.eq.s32.totalorder %s23, 1
    %p209 = scmp.ne.s32.totalorder %s204, %s206
    %p210 = scmp.eq.s32.totalorder %s23, 0
    %p211 = por %p209, %p210
    %p212 = scmp.ne.s32.totalorder %s204, %s206
    %p213 = scmp.eq.s32.totalorder %s28, 1
    %p214 = por %p212, %p213
    %p215 = scmp.ne.s32.totalorder %s206, %s207
    %p216 = scmp.eq.s32.totalorder %s28, 0
    %p217 = por %p215, %p216
    %p218 = scmp.ne.s32.totalorder %s206, %s207
    %p219 = scmp.eq.s32.totalorder %s29, 1
    %p220 = por %p218, %p219
    %p222 = scmp.ne.s32.totalorder %s207, %s221
    %p223 = scmp.eq.s32.totalorder %s29, 0
    %p224 = por %p222, %p223
    %s226 = sadd.s32 %s225, 1
    %p229 = scmp.eq.s32.totalorder %s23, 1
    %p230 = scmp.ne.s32.totalorder %s225, %s227
    %p231 = scmp.eq.s32.totalorder %s23, 0
    %p232 = por %p230, %p231
    %p233 = scmp.ne.s32.totalorder %s225, %s227
    %p234 = scmp.eq.s32.totalorder %s28, 1
    %p235 = por %p233, %p234
    %p236 = scmp.ne.s32.totalorder %s227, %s228
    %p237 = scmp.eq.s32.totalorder %s28, 0
    %p238 = por %p236, %p237
    %p239 = scmp.ne.s32.totalorder %s227, %s228
    %p240 = scmp.eq.s32.totalorder %s29, 1
    %p241 = por %p239, %p240
    %p243 = scmp.ne.s32.totalorder %s228, %s242
    %p244 = scmp.eq.s32.totalorder %s29, 0
    %p245 = por %p243, %p244
    %s247 = sadd.s32 %s246, 1
    %p250 = scmp.eq.s32.totalorder %s23, 1
    %p251 = scmp.ne.s32.totalorder %s246, %s248
    %p252 = scmp.eq.s32.totalorder %s23, 0
    %p253 = por %p251, %p252
    %p254 = scmp.ne.s32.totalorder %s246, %s248
    %p255 = scmp.eq.s32.totalorder %s28, 1
    %p256 = por %p254, %p255
    %p257 = scmp.ne.s32.totalorder %s248, %s249
    %p258 = scmp.eq.s32.totalorder %s28, 0
    %p259 = por %p257, %p258
    %p260 = scmp.ne.s32.totalorder %s248, %s249
    %p261 = scmp.eq.s32.totalorder %s29, 1
    %p262 = por %p260, %p261
    %p264 = scmp.ne.s32.totalorder %s249, %s263
    %p265 = scmp.eq.s32.totalorder %s29, 0
    %p266 = por %p264, %p265
    %s268 = sadd.s32 %s267, 1
    %p271 = scmp.eq.s32.totalorder %s23, 1
    %p272 = scmp.ne.s32.totalorder %s267, %s269
    %p273 = scmp.eq.s32.totalorder %s23, 0
    %p274 = por %p272, %p273
    %p275 = scmp.ne.s32.totalorder %s267, %s269
    %p276 = scmp.eq.s32.totalorder %s28, 1
    %p277 = por %p275, %p276
    %p278 = scmp.ne.s32.totalorder %s269, %s270
    %p279 = scmp.eq.s32.totalorder %s28, 0
    %p280 = por %p278, %p279
    %p281 = scmp.ne.s32.totalorder %s269, %s270
    %p282 = scmp.eq.s32.totalorder %s29, 1
    %p283 = por %p281, %p282
    %p285 = scmp.ne.s32.totalorder %s270, %s284
    %p286 = scmp.eq.s32.totalorder %s29, 0
    %p287 = por %p285, %p286
    %s289 = sadd.s32 %s288, 1
    %p292 = scmp.eq.s32.totalorder %s23, 1
    %p293 = scmp.ne.s32.totalorder %s288, %s290
    %p294 = scmp.eq.s32.totalorder %s23, 0
    %p295 = por %p293, %p294
    %p296 = scmp.ne.s32.totalorder %s288, %s290
    %p297 = scmp.eq.s32.totalorder %s28, 1
    %p298 = por %p296, %p297
    %p299 = scmp.ne.s32.totalorder %s290, %s291
    %p300 = scmp.eq.s32.totalorder %s28, 0
    %p301 = por %p299, %p300
    %p302 = scmp.ne.s32.totalorder %s290, %s291
    %p303 = scmp.eq.s32.totalorder %s29, 1
    %p304 = por %p302, %p303
    %p306 = scmp.ne.s32.totalorder %s291, %s305
    %p307 = scmp.eq.s32.totalorder %s29, 0
    %p308 = por %p306, %p307
    %s310 = sadd.s32 %s309, 1
    %p313 = scmp.eq.s32.totalorder %s23, 1
    %p314 = scmp.ne.s32.totalorder %s309, %s311
    %p315 = scmp.eq.s32.totalorder %s23, 0
    %p316 = por %p314, %p315
    %p317 = scmp.ne.s32.totalorder %s309, %s311
    %p318 = scmp.eq.s32.totalorder %s28, 1
    %p319 = por %p317, %p318
    %p320 = scmp.ne.s32.totalorder %s311, %s312
    %p321 = scmp.eq.s32.totalorder %s28, 0
    %p322 = por %p320, %p321
    %p323 = scmp.ne.s32.totalorder %s311, %s312
    %p324 = scmp.eq.s32.totalorder %s29, 1
    %p325 = por %p323, %p324
    %p327 = scmp.ne.s32.totalorder %s312, %s326
    %p328 = scmp.eq.s32.totalorder %s29, 0
    %p329 = por %p327, %p328
    %s331 = sadd.s32 %s330, 1
    %p334 = scmp.eq.s32.totalorder %s23, 1
    %p335 = scmp.ne.s32.totalorder %s330, %s332
    %p336 = scmp.eq.s32.totalorder %s23, 0
    %p337 = por %p335, %p336
    %p338 = scmp.ne.s32.totalorder %s330, %s332
    %p339 = scmp.eq.s32.totalorder %s28, 1
    %p340 = por %p338, %p339
    %p341 = scmp.ne.s32.totalorder %s332, %s333
    %p342 = scmp.eq.s32.totalorder %s28, 0
    %p343 = por %p341, %p342
    %p344 = scmp.ne.s32.totalorder %s332, %s333
    %p345 = scmp.eq.s32.totalorder %s29, 1
    %p346 = por %p344, %p345
    %p348 = scmp.ne.s32.totalorder %s333, %s347
    %p349 = scmp.eq.s32.totalorder %s29, 0
    %p350 = por %p348, %p349
    %s352 = sadd.s32 %s351, 1
    %p355 = scmp.eq.s32.totalorder %s23, 1
    %p356 = scmp.ne.s32.totalorder %s351, %s353
    %p357 = scmp.eq.s32.totalorder %s23, 0
    %p358 = por %p356, %p357
    %p359 = scmp.ne.s32.totalorder %s351, %s353
    %p360 = scmp.eq.s32.totalorder %s28, 1
    %p361 = por %p359, %p360
    %p362 = scmp.ne.s32.totalorder %s353, %s354
    %p363 = scmp.eq.s32.totalorder %s28, 0
    %p364 = por %p362, %p363
    %p365 = scmp.ne.s32.totalorder %s353, %s354
    %p366 = scmp.eq.s32.totalorder %s29, 1
    %p367 = por %p365, %p366
    %p369 = scmp.ne.s32.totalorder %s354, %s368
    %p370 = scmp.eq.s32.totalorder %s29, 0
    %p371 = por %p369, %p370
    %s373 = sadd.s32 %s372, 1
    %p376 = scmp.eq.s32.totalorder %s23, 1
    %p377 = scmp.ne.s32.totalorder %s372, %s374
    %p378 = scmp.eq.s32.totalorder %s23, 0
    %p379 = por %p377, %p378
    %p380 = scmp.ne.s32.totalorder %s372, %s374
    %p381 = scmp.eq.s32.totalorder %s28, 1
    %p382 = por %p380, %p381
    %p383 = scmp.ne.s32.totalorder %s374, %s375
    %p384 = scmp.eq.s32.totalorder %s28, 0
    %p385 = por %p383, %p384
    %p386 = scmp.ne.s32.totalorder %s374, %s375
    %p387 = scmp.eq.s32.totalorder %s29, 1
    %p388 = por %p386, %p387
    %p390 = scmp.ne.s32.totalorder %s375, %s389
    %p391 = scmp.eq.s32.totalorder %s29, 0
    %p392 = por %p390, %p391
    %s393 = ssub.s32 %s23, %s30
    %p394 = scmp.eq.s32.totalorder %s393, 0
    %s396 = sadd.s32 %s395, 1
    %s397 = scalar_select %p394, %s395, %s396
    %p400 = pneg %p394
    %p401 = scmp.eq.s32.totalorder %s23, 1
    %p402 = por %p400, %p401
    %p403 = scmp.ne.s32.totalorder %s395, %s398
    %p404 = scmp.eq.s32.totalorder %s23, 0
    %p405 = por %p403, %p404
    %p406 = scmp.ne.s32.totalorder %s395, %s398
    %p407 = scmp.eq.s32.totalorder %s28, 1
    %p408 = por %p406, %p407
    %p409 = scmp.ne.s32.totalorder %s398, %s399
    %p410 = scmp.eq.s32.totalorder %s28, 0
    %p411 = por %p409, %p410
    %p412 = scmp.ne.s32.totalorder %s398, %s399
    %p413 = scmp.eq.s32.totalorder %s29, 1
    %p414 = por %p412, %p413
    %p416 = scmp.ne.s32.totalorder %s399, %s415
    %p417 = scmp.eq.s32.totalorder %s29, 0
    %p418 = por %p416, %p417
    %p419 = scmp.le.s32.totalorder 1, %s23
    %p420 = scmp.lt.s32.totalorder %s23, 3
    %p421 = pnand %p419, %p420
    %p422 = pneg %p421
    // Predicated region
    $region9: #{resnet_forward.1} parent=5 // pred_check
      _
    $region10: #{resnet_forward.1} parent=5 // pred_check_branch
      %424 = sbr.rel (%p421) target = $region12
    $region11: #{resnet_forward.1} parent=5 // pred_region
      %s425 = ssub.s32 %s23, 1
      // Predicated region
      $region13: #{resnet_forward.1} parent=11 // pred_check
        %p426 = pneg %p70
      $region14: #{resnet_forward.1} parent=11 // pred_check_branch
        %428 = sbr.rel (%p426) target = $region16
      $region15: #{resnet_forward.1} parent=11 // pred_region
        _
      $region16: #{resnet_forward.1} parent=11 // pred_fallthru
        _
      // Predicated region
      $region17: #{resnet_forward.1} parent=11 // pred_check
        %p429 = pneg %p91
      $region18: #{resnet_forward.1} parent=11 // pred_check_branch
        %431 = sbr.rel (%p429) target = $region20
      $region19: #{resnet_forward.1} parent=11 // pred_region
        _
      $region20: #{resnet_forward.1} parent=11 // pred_fallthru
        _
      // Predicated region
      $region21: #{resnet_forward.1} parent=11 // pred_check
        %p432 = pneg %p112
      $region22: #{resnet_forward.1} parent=11 // pred_check_branch
        %434 = sbr.rel (%p432) target = $region24
      $region23: #{resnet_forward.1} parent=11 // pred_region
        _
      $region24: #{resnet_forward.1} parent=11 // pred_fallthru
        _
      // Predicated region
      $region25: #{resnet_forward.1} parent=11 // pred_check
        %p435 = pneg %p133
      $region26: #{resnet_forward.1} parent=11 // pred_check_branch
        %437 = sbr.rel (%p435) target = $region28
      $region27: #{resnet_forward.1} parent=11 // pred_region
        _
      $region28: #{resnet_forward.1} parent=11 // pred_fallthru
        _
      // Predicated region
      $region29: #{resnet_forward.1} parent=11 // pred_check
        %p438 = pneg %p154
      $region30: #{resnet_forward.1} parent=11 // pred_check_branch
        %440 = sbr.rel (%p438) target = $region32
      $region31: #{resnet_forward.1} parent=11 // pred_region
        _
      $region32: #{resnet_forward.1} parent=11 // pred_fallthru
        _
      // Predicated region
      $region33: #{resnet_forward.1} parent=11 // pred_check
        %p441 = pneg %p175
      $region34: #{resnet_forward.1} parent=11 // pred_check_branch
        %443 = sbr.rel (%p441) target = $region36
      $region35: #{resnet_forward.1} parent=11 // pred_region
        _
      $region36: #{resnet_forward.1} parent=11 // pred_fallthru
        _
      // Predicated region
      $region37: #{resnet_forward.1} parent=11 // pred_check
        %p444 = pneg %p196
      $region38: #{resnet_forward.1} parent=11 // pred_check_branch
        %446 = sbr.rel (%p444) target = $region40
      $region39: #{resnet_forward.1} parent=11 // pred_region
        _
      $region40: #{resnet_forward.1} parent=11 // pred_fallthru
        _
      // Predicated region
      $region41: #{resnet_forward.1} parent=11 // pred_check
        %p447 = pneg %p217
      $region42: #{resnet_forward.1} parent=11 // pred_check_branch
        %449 = sbr.rel (%p447) target = $region44
      $region43: #{resnet_forward.1} parent=11 // pred_region
        _
      $region44: #{resnet_forward.1} parent=11 // pred_fallthru
        _
      // Predicated region
      $region45: #{resnet_forward.1} parent=11 // pred_check
        %p450 = pneg %p238
      $region46: #{resnet_forward.1} parent=11 // pred_check_branch
        %452 = sbr.rel (%p450) target = $region48
      $region47: #{resnet_forward.1} parent=11 // pred_region
        _
      $region48: #{resnet_forward.1} parent=11 // pred_fallthru
        _
      // Predicated region
      $region49: #{resnet_forward.1} parent=11 // pred_check
        %p453 = pneg %p259
      $region50: #{resnet_forward.1} parent=11 // pred_check_branch
        %455 = sbr.rel (%p453) target = $region52
      $region51: #{resnet_forward.1} parent=11 // pred_region
        _
      $region52: #{resnet_forward.1} parent=11 // pred_fallthru
        _
      // Predicated region
      $region53: #{resnet_forward.1} parent=11 // pred_check
        %p456 = pneg %p280
      $region54: #{resnet_forward.1} parent=11 // pred_check_branch
        %458 = sbr.rel (%p456) target = $region56
      $region55: #{resnet_forward.1} parent=11 // pred_region
        _
      $region56: #{resnet_forward.1} parent=11 // pred_fallthru
        _
      // Predicated region
      $region57: #{resnet_forward.1} parent=11 // pred_check
        %p459 = pneg %p301
      $region58: #{resnet_forward.1} parent=11 // pred_check_branch
        %461 = sbr.rel (%p459) target = $region60
      $region59: #{resnet_forward.1} parent=11 // pred_region
        _
      $region60: #{resnet_forward.1} parent=11 // pred_fallthru
        _
      // Predicated region
      $region61: #{resnet_forward.1} parent=11 // pred_check
        %p462 = pneg %p322
      $region62: #{resnet_forward.1} parent=11 // pred_check_branch
        %464 = sbr.rel (%p462) target = $region64
      $region63: #{resnet_forward.1} parent=11 // pred_region
        _
      $region64: #{resnet_forward.1} parent=11 // pred_fallthru
        _
      // Predicated region
      $region65: #{resnet_forward.1} parent=11 // pred_check
        %p465 = pneg %p343
      $region66: #{resnet_forward.1} parent=11 // pred_check_branch
        %467 = sbr.rel (%p465) target = $region68
      $region67: #{resnet_forward.1} parent=11 // pred_region
        _
      $region68: #{resnet_forward.1} parent=11 // pred_fallthru
        _
      // Predicated region
      $region69: #{resnet_forward.1} parent=11 // pred_check
        %p468 = pneg %p364
      $region70: #{resnet_forward.1} parent=11 // pred_check_branch
        %470 = sbr.rel (%p468) target = $region72
      $region71: #{resnet_forward.1} parent=11 // pred_region
        _
      $region72: #{resnet_forward.1} parent=11 // pred_fallthru
        _
      // Predicated region
      $region73: #{resnet_forward.1} parent=11 // pred_check
        %p471 = pneg %p385
      $region74: #{resnet_forward.1} parent=11 // pred_check_branch
        %473 = sbr.rel (%p471) target = $region76
      $region75: #{resnet_forward.1} parent=11 // pred_region
        _
      $region76: #{resnet_forward.1} parent=11 // pred_fallthru
        _
    $region12: #{resnet_forward.1} parent=5 // pred_fallthru
      _
    %p474 = scmp.lt.s32.totalorder %s23, 2
    // Predicated region
    $region77: #{resnet_forward.1} parent=5 // pred_check
      %p475 = pneg %p474
    $region78: #{resnet_forward.1} parent=5 // pred_check_branch
      %477 = sbr.rel (%p475) target = $region80
    $region79: #{resnet_forward.1} parent=5 // pred_region
      // Predicated region
      $region81: #{resnet_forward.1} parent=79 // pred_check
        %p478 = pneg %p43
      $region82: #{resnet_forward.1} parent=79 // pred_check_branch
        %480 = sbr.rel (%p478) target = $region84
      $region83: #{resnet_forward.1} parent=79 // pred_region
        %s481 = smul.u32 68, %s23
        %p482 = scmp.lt.s32.totalorder %s481, 135
        %s483 = scalar_select %p482, %s481, 135
        %s484 = smul.addr %s483, 4
        %s485 = scalar_lea.vmem %s0, %s484
        %s486 = smul.u32 68, %s23
      $region84: #{resnet_forward.1} parent=79 // pred_fallthru
        _
    $region80: #{resnet_forward.1} parent=5 // pred_fallthru
      _
    %p487 = scmp.le.s32.totalorder 1, %s23
    %p488 = scmp.lt.s32.totalorder %s23, 3
    %p489 = pnand %p487, %p488
    %p490 = pneg %p489
    // Predicated region
    $region85: #{resnet_forward.1} parent=5 // pred_check
      _
    $region86: #{resnet_forward.1} parent=5 // pred_check_branch
      %492 = sbr.rel (%p489) target = $region88
    $region87: #{resnet_forward.1} parent=5 // pred_region
      %s493 = ssub.s32 %s23, 1
      %s494 = smul.u32 68, %s28
      %p495 = scmp.lt.s32.totalorder %s494, 135
      %s496 = scalar_select %p495, %s494, 135
      %s497 = smul.addr %s496, 4
      %s498 = scalar_lea.vmem %s0, %s497
      %p499 = pneg %p49
      %p500 = pneg %p46
      %p501 = pneg %p70
      %p502 = pneg %p67
      %p503 = pneg %p91
      %p504 = pneg %p88
      %p505 = pneg %p112
      %p506 = pneg %p109
      %p507 = pneg %p133
      %p508 = pneg %p130
      %p509 = pneg %p154
      %p510 = pneg %p151
      %p511 = pneg %p175
      %p512 = pneg %p172
      %p513 = pneg %p196
      %p514 = pneg %p193
      %p515 = pneg %p217
      %p516 = pneg %p214
      %p517 = pneg %p238
      %p518 = pneg %p235
      %p519 = pneg %p259
      %p520 = pneg %p256
      %p521 = pneg %p280
      %p522 = pneg %p277
      %p523 = pneg %p301
      %p524 = pneg %p298
      %p525 = pneg %p322
      %p526 = pneg %p319
      %p527 = pneg %p343
      %p528 = pneg %p340
      %p529 = pneg %p364
      %p530 = pneg %p361
      %p531 = pneg %p385
      %p532 = pneg %p382
      %p533 = pneg %p411
      %p534 = pneg %p408
      %s535 = smul.u32 2, %s28
      %p536 = scmp.lt.s32.totalorder %s535, 3
      %s537 = scalar_select %p536, %s535, 3
      %s538 = smul.addr %s537, 8
      %s539 = scalar_lea.vmem %s17, %s538
      %s540 = smul.u32 68, %s28
      %p541 = scmp.lt.s32.totalorder %s540, 135
      %s542 = scalar_select %p541, %s540, 135
      %s543 = smul.addr %s542, 4
      %s544 = scalar_lea.vmem %s0, %s543
      %s545 = smul.u32 68, %s28
      %s546 = smul.u32 2, %s28
      %p547 = scmp.lt.s32.totalorder %s546, 3
      %s548 = scalar_select %p547, %s546, 3
      %s549 = smul.addr %s548, 8
      %s550 = scalar_lea.vmem %s17, %s549
      %s551 = smul.u32 2, %s28
      %553 = vst [vmem:[#allocation2] sm:$0xff] 0
      %554 = vst [vmem:[#allocation2 + $0x88] sm:$0xff] 0
      %555 = vst [vmem:[#allocation3] sm:$0xff] 0
      %556 = vst [vmem:[#allocation3 + $0x88] sm:$0xff] 0
      %557 = vst [vmem:[#allocation4] sm:$0xff] 0
      %558 = vst [vmem:[#allocation5] sm:$0xff] 0
      %559 = vst [vmem:[#allocation5 + $0x48] sm:$0xff] 0
      %v560 = vld [vmem:[%s544] sm:$0xf]
      %v561 = vld [vmem:[%s544 + $0x4] sm:$0xf]
      %v562 = vld [vmem:[%s544 + $0x8] sm:$0xf]
      %v563 = vld [vmem:[%s544 + $0xc] sm:$0xf]
      %v564 = vld [vmem:[%s544 + $0x10] sm:$0xf]
      %v565 = vld [vmem:[%s544 + $0x14] sm:$0xf]
      %v566 = vld [vmem:[%s544 + $0x18] sm:$0xf]
      %v567 = vld [vmem:[%s544 + $0x1c] sm:$0xf]
      %v568 = vld [vmem:[%s544 + $0x20] sm:$0xf]
      %v569 = vld [vmem:[%s544 + $0x24] sm:$0xf]
      %v570 = vld [vmem:[%s544 + $0x28] sm:$0xf]
      %v571 = vld [vmem:[%s544 + $0x2c] sm:$0xf]
      %v572 = vld [vmem:[%s544 + $0x30] sm:$0xf]
      %v573 = vld [vmem:[%s544 + $0x34] sm:$0xf]
      %v574 = vld [vmem:[%s544 + $0x38] sm:$0xf]
      %v575 = vld [vmem:[%s544 + $0x3c] sm:$0xf]
      %v576 = vld [vmem:[%s544 + $0x40] sm:$0xf]
      %v577 = vld [vmem:[%s544 + $0x44] sm:$0xf]
      %v578 = vld [vmem:[%s544 + $0x48] sm:$0xf]
      %v579 = vld [vmem:[%s544 + $0x4c] sm:$0xf]
      %v580 = vld [vmem:[%s544 + $0x50] sm:$0xf]
      %v581 = vld [vmem:[%s544 + $0x54] sm:$0xf]
      %v582 = vld [vmem:[%s544 + $0x58] sm:$0xf]
      %v583 = vld [vmem:[%s544 + $0x5c] sm:$0xf]
      %v584 = vld [vmem:[%s544 + $0x60] sm:$0xf]
      %v585 = vld [vmem:[%s544 + $0x64] sm:$0xf]
      %v586 = vld [vmem:[%s544 + $0x68] sm:$0xf]
      %v587 = vld [vmem:[%s544 + $0x6c] sm:$0xf]
      %v588 = vld [vmem:[%s544 + $0x70] sm:$0xf]
      %v589 = vld [vmem:[%s544 + $0x74] sm:$0xf]
      %v590 = vld [vmem:[%s544 + $0x78] sm:$0xf]
      %v591 = vld [vmem:[%s544 + $0x7c] sm:$0xf]
      %v592 = vld [vmem:[%s544 + $0x88] sm:$0xf]
      %v593 = vld [vmem:[%s544 + $0x8c] sm:$0xf]
      %v594 = vld [vmem:[%s544 + $0x90] sm:$0xf]
      %v595 = vld [vmem:[%s544 + $0x94] sm:$0xf]
      %v596 = vld [vmem:[%s544 + $0x98] sm:$0xf]
      %v597 = vld [vmem:[%s544 + $0x9c] sm:$0xf]
      %v598 = vld [vmem:[%s544 + $0xa0] sm:$0xf]
      %v599 = vld [vmem:[%s544 + $0xa4] sm:$0xf]
      %v600 = vld [vmem:[%s544 + $0xa8] sm:$0xf]
      %v601 = vld [vmem:[%s544 + $0xac] sm:$0xf]
      %v602 = vld [vmem:[%s544 + $0xb0] sm:$0xf]
      %v603 = vld [vmem:[%s544 + $0xb4] sm:$0xf]
      %v604 = vld [vmem:[%s544 + $0xb8] sm:$0xf]
      %v605 = vld [vmem:[%s544 + $0xbc] sm:$0xf]
      %v606 = vld [vmem:[%s544 + $0xc0] sm:$0xf]
      %v607 = vld [vmem:[%s544 + $0xc4] sm:$0xf]
      %v608 = vld [vmem:[%s544 + $0xc8] sm:$0xf]
      %v609 = vld [vmem:[%s544 + $0xcc] sm:$0xf]
      %v610 = vld [vmem:[%s544 + $0xd0] sm:$0xf]
      %v611 = vld [vmem:[%s544 + $0xd4] sm:$0xf]
      %v612 = vld [vmem:[%s544 + $0xd8] sm:$0xf]
      %v613 = vld [vmem:[%s544 + $0xdc] sm:$0xf]
      %v614 = vld [vmem:[%s544 + $0xe0] sm:$0xf]
      %v615 = vld [vmem:[%s544 + $0xe4] sm:$0xf]
      %v616 = vld [vmem:[%s544 + $0xe8] sm:$0xf]
      %v617 = vld [vmem:[%s544 + $0xec] sm:$0xf]
      %v618 = vld [vmem:[%s544 + $0xf0] sm:$0xf]
      %v619 = vld [vmem:[%s544 + $0xf4] sm:$0xf]
      %v620 = vld [vmem:[%s544 + $0xf8] sm:$0xf]
      %v621 = vld [vmem:[%s544 + $0xfc] sm:$0xf]
      %v622 = vld [vmem:[%s544 + $0x100] sm:$0xf]
      %v623 = vld [vmem:[%s544 + $0x104] sm:$0xf]
      %v624 = vld [vmem:[%s544 + $0x80] sm:$0xf]
      %v625 = vld [vmem:[%s544 + $0x84] sm:$0xf]
      %v626 = vld [vmem:[%s1] sm:$0xf]
      %v627 = vld [vmem:[%s1 + $0x4] sm:$0xf]
      %v628 = vld [vmem:[%s1 + $0x8] sm:$0xf]
      %v629 = vld [vmem:[%s1 + $0xc] sm:$0xf]
      %v630 = vld [vmem:[%s1 + $0x10] sm:$0xf]
      %v631 = vld [vmem:[%s1 + $0x14] sm:$0xf]
      %v632 = vld [vmem:[%s1 + $0x18] sm:$0xf]
      %v633 = vld [vmem:[%s1 + $0x1c] sm:$0xf]
      %v634 = vld [vmem:[%s1 + $0x20] sm:$0xf]
      %v635 = vld [vmem:[%s1 + $0x24] sm:$0xf]
      %v636 = vld [vmem:[%s1 + $0x28] sm:$0xf]
      %v637 = vld [vmem:[%s1 + $0x2c] sm:$0xf]
      %v638 = vld [vmem:[%s1 + $0x30] sm:$0xf]
      %v639 = vld [vmem:[%s1 + $0x34] sm:$0xf]
      %v640 = vld [vmem:[%s1 + $0x38] sm:$0xf]
      %v641 = vld [vmem:[%s1 + $0x3c] sm:$0xf]
      %s642 = scalar_lea.vmem %s1, 64
      %v643 = vld [vmem:[%s642] sm:$0xf]
      %v644 = vld [vmem:[%s642 + $0x4] sm:$0xf]
      %v645 = vld [vmem:[%s642 + $0x8] sm:$0xf]
      %v646 = vld [vmem:[%s642 + $0xc] sm:$0xf]
      %v647 = vld [vmem:[%s642 + $0x10] sm:$0xf]
      %v648 = vld [vmem:[%s642 + $0x14] sm:$0xf]
      %v649 = vld [vmem:[%s642 + $0x18] sm:$0xf]
      %v650 = vld [vmem:[%s642 + $0x1c] sm:$0xf]
      %v651 = vld [vmem:[%s642 + $0x20] sm:$0xf]
      %v652 = vld [vmem:[%s642 + $0x24] sm:$0xf]
      %v653 = vld [vmem:[%s642 + $0x28] sm:$0xf]
      %v654 = vld [vmem:[%s642 + $0x2c] sm:$0xf]
      %v655 = vld [vmem:[%s642 + $0x30] sm:$0xf]
      %v656 = vld [vmem:[%s642 + $0x34] sm:$0xf]
      %v657 = vld [vmem:[%s642 + $0x38] sm:$0xf]
      %v658 = vld [vmem:[%s642 + $0x3c] sm:$0xf]
      %v691 = vunpack.c.l.b16 %v592
      %v692 = vunpack.c.l.b16 %v593
      %v693 = vunpack.c.l.b16 %v594
      %v694 = vunpack.c.l.b16 %v595
      %v695 = vunpack.c.l.b16 %v596
      %v696 = vunpack.c.l.b16 %v597
      %v697 = vunpack.c.l.b16 %v598
      %v698 = vunpack.c.l.b16 %v599
      %v699 = vunpack.c.l.b16 %v600
      %v700 = vunpack.c.l.b16 %v601
      %v701 = vunpack.c.l.b16 %v602
      %v702 = vunpack.c.l.b16 %v603
      %v703 = vunpack.c.l.b16 %v604
      %v704 = vunpack.c.l.b16 %v605
      %v705 = vunpack.c.l.b16 %v606
      %v706 = vunpack.c.l.b16 %v607
      %v707 = vunpack.c.l.b16 %v608
      %v708 = vunpack.c.l.b16 %v609
      %v709 = vunpack.c.l.b16 %v610
      %v710 = vunpack.c.l.b16 %v611
      %v711 = vunpack.c.l.b16 %v612
      %v712 = vunpack.c.l.b16 %v613
      %v713 = vunpack.c.l.b16 %v614
      %v714 = vunpack.c.l.b16 %v615
      %v715 = vunpack.c.l.b16 %v616
      %v716 = vunpack.c.l.b16 %v617
      %v717 = vunpack.c.l.b16 %v618
      %v718 = vunpack.c.l.b16 %v619
      %v719 = vunpack.c.l.b16 %v620
      %v720 = vunpack.c.l.b16 %v621
      %v721 = vunpack.c.l.b16 %v622
      %v722 = vunpack.c.l.b16 %v623
      %v723 = vpack.c.b16 %v692, %v691
      %v724 = vpack.c.b16 %v694, %v693
      %v725 = vpack.c.b16 %v696, %v695
      %v726 = vpack.c.b16 %v698, %v697
      %v727 = vpack.c.b16 %v700, %v699
      %v728 = vpack.c.b16 %v702, %v701
      %v729 = vpack.c.b16 %v704, %v703
      %v730 = vpack.c.b16 %v706, %v705
      %v731 = vpack.c.b16 %v708, %v707
      %v732 = vpack.c.b16 %v710, %v709
      %v733 = vpack.c.b16 %v712, %v711
      %v734 = vpack.c.b16 %v714, %v713
      %v735 = vpack.c.b16 %v716, %v715
      %v736 = vpack.c.b16 %v718, %v717
      %v737 = vpack.c.b16 %v720, %v719
      %v738 = vpack.c.b16 %v722, %v721
      %v771 = vunpack.c.l.b16 %v643
      %v772 = vunpack.c.l.b16 %v644
      %v773 = vunpack.c.l.b16 %v645
      %v774 = vunpack.c.l.b16 %v646
      %v775 = vunpack.c.l.b16 %v647
      %v776 = vunpack.c.l.b16 %v648
      %v777 = vunpack.c.l.b16 %v649
      %v778 = vunpack.c.l.b16 %v650
      %v779 = vunpack.c.l.b16 %v651
      %v780 = vunpack.c.l.b16 %v652
      %v781 = vunpack.c.l.b16 %v653
      %v782 = vunpack.c.l.b16 %v654
      %v783 = vunpack.c.l.b16 %v655
      %v784 = vunpack.c.l.b16 %v656
      %v785 = vunpack.c.l.b16 %v657
      %v786 = vunpack.c.l.b16 %v658
      %v787 = vpack.c.b16 %v772, %v771
      %v788 = vpack.c.b16 %v774, %v773
      %v789 = vpack.c.b16 %v776, %v775
      %v790 = vpack.c.b16 %v778, %v777
      %v791 = vpack.c.b16 %v780, %v779
      %v792 = vpack.c.b16 %v782, %v781
      %v793 = vpack.c.b16 %v784, %v783
      %v794 = vpack.c.b16 %v786, %v785
      %803 = vmatprep.subr.bf16.mxu0 0
      %804 = vmatpush1.bf16.msra.mxu0 %v787
      %805 = vmatprep.subr.bf16.mxu0 0
      %806 = vmatpush1.bf16.msra.mxu0 %v788
      %807 = vmatprep.subr.bf16.mxu0 0
      %808 = vmatpush1.bf16.msra.mxu0 %v789
      %809 = vmatprep.subr.bf16.mxu0 0
      %810 = vmatpush1.bf16.msra.mxu0 %v790
      %811 = vmatprep.subr.bf16.mxu0 0
      %812 = vmatpush1.bf16.msra.mxu0 %v791
      %813 = vmatprep.subr.bf16.mxu0 0
      %814 = vmatpush1.bf16.msra.mxu0 %v792
      %815 = vmatprep.subr.bf16.mxu0 0
      %816 = vmatpush1.bf16.msra.mxu0 %v793
      %817 = vmatprep.subr.bf16.mxu0 0
      %818 = vmatpush1.bf16.msra.mxu0 %v794
      %819 = vmatprep.subr.bf16.mxu0 0
      %820 = vmatpush1.bf16.msra.mxu0 0
      %821 = vmatprep.subr.bf16.mxu0 0
      %822 = vmatpush1.bf16.msra.mxu0 0
      %823 = vmatprep.subr.bf16.mxu0 0
      %824 = vmatpush1.bf16.msra.mxu0 0
      %825 = vmatprep.subr.bf16.mxu0 0
      %826 = vmatpush1.bf16.msra.mxu0 0
      %827 = vmatprep.subr.bf16.mxu0 0
      %828 = vmatpush1.bf16.msra.mxu0 0
      %829 = vmatprep.subr.bf16.mxu0 0
      %830 = vmatpush1.bf16.msra.mxu0 0
      %831 = vmatprep.subr.bf16.mxu0 0
      %832 = vmatpush1.bf16.msra.mxu0 0
      %833 = vmatprep.subr.bf16.mxu0 0
      %834 = vmatpush1.bf16.msra.mxu0 0
      %835 = vmatprep.mubr.bf16.mxu0 0
      %836 = vmatmul.mubr.bf16.gmra.mrb[0].mxu0 %v723
      %v837 = vpop.f32.mrb[0].mxu0
      %v838 = vadd.f32 0.0, %v837
      %v839 = vpop.f32.mrb[0].mxu0
      %v840 = vpop.f32.mrb[0].mxu0
      %v841 = vadd.f32 0.0, %v840
      %v842 = vpop.f32.mrb[0].mxu0
      %843 = vmatprep.mubr.bf16.mxu0 0
      %844 = vmatmul.mubr.bf16.gmra.mrb[0].mxu0 %v724
      %v845 = vpop.f32.mrb[0].mxu0
      %v846 = vadd.f32 0.0, %v845
      %v847 = vpop.f32.mrb[0].mxu0
      %v848 = vpop.f32.mrb[0].mxu0
      %v849 = vadd.f32 0.0, %v848
      %v850 = vpop.f32.mrb[0].mxu0
      %851 = vmatprep.mubr.bf16.mxu0 0
      %852 = vmatmul.mubr.bf16.gmra.mrb[0].mxu0 %v725
      %v853 = vpop.f32.mrb[0].mxu0
      %v854 = vadd.f32 0.0, %v853
      %v855 = vpop.f32.mrb[0].mxu0
      %v856 = vpop.f32.mrb[0].mxu0
      %v857 = vadd.f32 0.0, %v856
      %v858 = vpop.f32.mrb[0].mxu0
      %859 = vmatprep.mubr.bf16.mxu0 0
      %860 = vmatmul.mubr.bf16.gmra.mrb[0].mxu0 %v726
      %v861 = vpop.f32.mrb[0].mxu0
      %v862 = vadd.f32 0.0, %v861
      %v863 = vpop.f32.mrb[0].mxu0
      %v864 = vpop.f32.mrb[0].mxu0
      %v865 = vadd.f32 0.0, %v864
      %v866 = vpop.f32.mrb[0].mxu0
      %867 = vmatprep.mubr.bf16.mxu0 0
      %868 = vmatmul.mubr.bf16.gmra.mrb[0].mxu0 %v727
      %v869 = vpop.f32.mrb[0].mxu0
      %v870 = vadd.f32 0.0, %v869
      %v871 = vpop.f32.mrb[0].mxu0
      %v872 = vpop.f32.mrb[0].mxu0
      %v873 = vadd.f32 0.0, %v872
      %v874 = vpop.f32.mrb[0].mxu0
      %875 = vmatprep.mubr.bf16.mxu0 0
      %876 = vmatmul.mubr.bf16.gmra.mrb[0].mxu0 %v728
      %v877 = vpop.f32.mrb[0].mxu0
      %v878 = vadd.f32 0.0, %v877
      %v879 = vpop.f32.mrb[0].mxu0
      %v880 = vpop.f32.mrb[0].mxu0
      %v881 = vadd.f32 0.0, %v880
      %v882 = vpop.f32.mrb[0].mxu0
      %883 = vmatprep.mubr.bf16.mxu0 0
      %884 = vmatmul.mubr.bf16.gmra.mrb[0].mxu0 %v729
      %v885 = vpop.f32.mrb[0].mxu0
      %v886 = vadd.f32 0.0, %v885
      %v887 = vpop.f32.mrb[0].mxu0
      %v888 = vpop.f32.mrb[0].mxu0
      %v889 = vadd.f32 0.0, %v888
      %v890 = vpop.f32.mrb[0].mxu0
      %891 = vmatprep.mubr.bf16.mxu0 0
      %892 = vmatmul.mubr.bf16.gmra.mrb[0].mxu0 %v730
      %v893 = vpop.f32.mrb[0].mxu0
      %v894 = vadd.f32 0.0, %v893
      %v895 = vpop.f32.mrb[0].mxu0
      %v896 = vpop.f32.mrb[0].mxu0
      %v897 = vadd.f32 0.0, %v896
      %v898 = vpop.f32.mrb[0].mxu0
      %899 = vmatprep.mubr.bf16.mxu0 0
      %900 = vmatmul.mubr.bf16.gmra.mrb[0].mxu0 %v731
      %v901 = vpop.f32.mrb[0].mxu0
      %v902 = vadd.f32 0.0, %v901
      %v903 = vpop.f32.mrb[0].mxu0
      %v904 = vpop.f32.mrb[0].mxu0
      %v905 = vadd.f32 0.0, %v904
      %v906 = vpop.f32.mrb[0].mxu0
      %907 = vmatprep.mubr.bf16.mxu0 0
      %908 = vmatmul.mubr.bf16.gmra.mrb[0].mxu0 %v732
      %v909 = vpop.f32.mrb[0].mxu0
      %v910 = vadd.f32 0.0, %v909
      %v911 = vpop.f32.mrb[0].mxu0
      %v912 = vpop.f32.mrb[0].mxu0
      %v913 = vadd.f32 0.0, %v912
      %v914 = vpop.f32.mrb[0].mxu0
      %915 = vmatprep.mubr.bf16.mxu0 0
      %916 = vmatmul.mubr.bf16.gmra.mrb[0].mxu0 %v733
      %v917 = vpop.f32.mrb[0].mxu0
      %v918 = vadd.f32 0.0, %v917
      %v919 = vpop.f32.mrb[0].mxu0
      %v920 = vpop.f32.mrb[0].mxu0
      %v921 = vadd.f32 0.0, %v920
      %v922 = vpop.f32.mrb[0].mxu0
      %923 = vmatprep.mubr.bf16.mxu0 0
      %924 = vmatmul.mubr.bf16.gmra.mrb[0].mxu0 %v734
      %v925 = vpop.f32.mrb[0].mxu0
      %v926 = vadd.f32 0.0, %v925
      %v927 = vpop.f32.mrb[0].mxu0
      %v928 = vpop.f32.mrb[0].mxu0
      %v929 = vadd.f32 0.0, %v928
      %v930 = vpop.f32.mrb[0].mxu0
      %931 = vmatprep.mubr.bf16.mxu0 0
      %932 = vmatmul.mubr.bf16.gmra.mrb[0].mxu0 %v735
      %v933 = vpop.f32.mrb[0].mxu0
      %v934 = vadd.f32 0.0, %v933
      %v935 = vpop.f32.mrb[0].mxu0
      %v936 = vpop.f32.mrb[0].mxu0
      %v937 = vadd.f32 0.0, %v936
      %v938 = vpop.f32.mrb[0].mxu0
      %939 = vmatprep.mubr.bf16.mxu0 0
      %940 = vmatmul.mubr.bf16.gmra.mrb[0].mxu0 %v736
      %v941 = vpop.f32.mrb[0].mxu0
      %v942 = vadd.f32 0.0, %v941
      %v943 = vpop.f32.mrb[0].mxu0
      %v944 = vpop.f32.mrb[0].mxu0
      %v945 = vadd.f32 0.0, %v944
      %v946 = vpop.f32.mrb[0].mxu0
      %947 = vmatprep.mubr.bf16.mxu0 0
      %948 = vmatmul.mubr.bf16.gmra.mrb[0].mxu0 %v737
      %v949 = vpop.f32.mrb[0].mxu0
      %v950 = vadd.f32 0.0, %v949
      %v951 = vpop.f32.mrb[0].mxu0
      %v952 = vpop.f32.mrb[0].mxu0
      %v953 = vadd.f32 0.0, %v952
      %v954 = vpop.f32.mrb[0].mxu0
      %955 = vmatprep.mubr.bf16.mxu0 0
      %956 = vmatmul.mubr.bf16.gmra.mrb[0].mxu0 %v738
      %v957 = vpop.f32.mrb[0].mxu0
      %v958 = vadd.f32 0.0, %v957
      %v959 = vpop.f32.mrb[0].mxu0
      %v960 = vpop.f32.mrb[0].mxu0
      %v961 = vadd.f32 0.0, %v960
      %v962 = vpop.f32.mrb[0].mxu0
      %963 = vdwg.mxu0
      %v996 = vunpack.c.l.b16 %v560
      %v997 = vunpack.c.l.b16 %v561
      %v998 = vunpack.c.l.b16 %v562
      %v999 = vunpack.c.l.b16 %v563
      %v1000 = vunpack.c.l.b16 %v564
      %v1001 = vunpack.c.l.b16 %v565
      %v1002 = vunpack.c.l.b16 %v566
      %v1003 = vunpack.c.l.b16 %v567
      %v1004 = vunpack.c.l.b16 %v568
      %v1005 = vunpack.c.l.b16 %v569
      %v1006 = vunpack.c.l.b16 %v570
      %v1007 = vunpack.c.l.b16 %v571
      %v1008 = vunpack.c.l.b16 %v572
      %v1009 = vunpack.c.l.b16 %v573
      %v1010 = vunpack.c.l.b16 %v574
      %v1011 = vunpack.c.l.b16 %v575
      %v1012 = vunpack.c.l.b16 %v576
      %v1013 = vunpack.c.l.b16 %v577
      %v1014 = vunpack.c.l.b16 %v578
      %v1015 = vunpack.c.l.b16 %v579
      %v1016 = vunpack.c.l.b16 %v580
      %v1017 = vunpack.c.l.b16 %v581
      %v1018 = vunpack.c.l.b16 %v582
      %v1019 = vunpack.c.l.b16 %v583
      %v1020 = vunpack.c.l.b16 %v584
      %v1021 = vunpack.c.l.b16 %v585
      %v1022 = vunpack.c.l.b16 %v586
      %v1023 = vunpack.c.l.b16 %v587
      %v1024 = vunpack.c.l.b16 %v588
      %v1025 = vunpack.c.l.b16 %v589
      %v1026 = vunpack.c.l.b16 %v590
      %v1027 = vunpack.c.l.b16 %v591
      %v1028 = vpack.c.b16 %v997, %v996
      %v1029 = vpack.c.b16 %v999, %v998
      %v1030 = vpack.c.b16 %v1001, %v1000
      %v1031 = vpack.c.b16 %v1003, %v1002
      %v1032 = vpack.c.b16 %v1005, %v1004
      %v1033 = vpack.c.b16 %v1007, %v1006
      %v1034 = vpack.c.b16 %v1009, %v1008
      %v1035 = vpack.c.b16 %v1011, %v1010
      %v1036 = vpack.c.b16 %v1013, %v1012
      %v1037 = vpack.c.b16 %v1015, %v1014
      %v1038 = vpack.c.b16 %v1017, %v1016
      %v1039 = vpack.c.b16 %v1019, %v1018
      %v1040 = vpack.c.b16 %v1021, %v1020
      %v1041 = vpack.c.b16 %v1023, %v1022
      %v1042 = vpack.c.b16 %v1025, %v1024
      %v1043 = vpack.c.b16 %v1027, %v1026
      %v1076 = vunpack.c.l.b16 %v626
      %v1077 = vunpack.c.l.b16 %v627
      %v1078 = vunpack.c.l.b16 %v628
      %v1079 = vunpack.c.l.b16 %v629
      %v1080 = vunpack.c.l.b16 %v630
      %v1081 = vunpack.c.l.b16 %v631
      %v1082 = vunpack.c.l.b16 %v632
      %v1083 = vunpack.c.l.b16 %v633
      %v1084 = vunpack.c.l.b16 %v634
      %v1085 = vunpack.c.l.b16 %v635
      %v1086 = vunpack.c.l.b16 %v636
      %v1087 = vunpack.c.l.b16 %v637
      %v1088 = vunpack.c.l.b16 %v638
      %v1089 = vunpack.c.l.b16 %v639
      %v1090 = vunpack.c.l.b16 %v640
      %v1091 = vunpack.c.l.b16 %v641
      %v1092 = vpack.c.b16 %v1077, %v1076
      %v1093 = vpack.c.b16 %v1079, %v1078
      %v1094 = vpack.c.b16 %v1081, %v1080
      %v1095 = vpack.c.b16 %v1083, %v1082
      %v1096 = vpack.c.b16 %v1085, %v1084
      %v1097 = vpack.c.b16 %v1087, %v1086
      %v1098 = vpack.c.b16 %v1089, %v1088
      %v1099 = vpack.c.b16 %v1091, %v1090
      %1108 = vmatprep.subr.bf16.mxu0 0
      %1109 = vmatpush1.bf16.msra.mxu0 %v1092
      %1110 = vmatprep.subr.bf16.mxu0 0
      %1111 = vmatpush1.bf16.msra.mxu0 %v1093
      %1112 = vmatprep.subr.bf16.mxu0 0
      %1113 = vmatpush1.bf16.msra.mxu0 %v1094
      %1114 = vmatprep.subr.bf16.mxu0 0
      %1115 = vmatpush1.bf16.msra.mxu0 %v1095
      %1116 = vmatprep.subr.bf16.mxu0 0
      %1117 = vmatpush1.bf16.msra.mxu0 %v1096
      %1118 = vmatprep.subr.bf16.mxu0 0
      %1119 = vmatpush1.bf16.msra.mxu0 %v1097
      %1120 = vmatprep.subr.bf16.mxu0 0
      %1121 = vmatpush1.bf16.msra.mxu0 %v1098
      %1122 = vmatprep.subr.bf16.mxu0 0
      %1123 = vmatpush1.bf16.msra.mxu0 %v1099
      %1124 = vmatprep.subr.bf16.mxu0 0
      %1125 = vmatpush1.bf16.msra.mxu0 0
      %1126 = vmatprep.subr.bf16.mxu0 0
      %1127 = vmatpush1.bf16.msra.mxu0 0
      %1128 = vmatprep.subr.bf16.mxu0 0
      %1129 = vmatpush1.bf16.msra.mxu0 0
      %1130 = vmatprep.subr.bf16.mxu0 0
      %1131 = vmatpush1.bf16.msra.mxu0 0
      %1132 = vmatprep.subr.bf16.mxu0 0
      %1133 = vmatpush1.bf16.msra.mxu0 0
      %1134 = vmatprep.subr.bf16.mxu0 0
      %1135 = vmatpush1.bf16.msra.mxu0 0
      %1136 = vmatprep.subr.bf16.mxu0 0
      %1137 = vmatpush1.bf16.msra.mxu0 0
      %1138 = vmatprep.subr.bf16.mxu0 0
      %1139 = vmatpush1.bf16.msra.mxu0 0
      %1140 = vmatprep.mubr.bf16.mxu0 0
      %1141 = vmatmul.mubr.bf16.gmra.mrb[0].mxu0 %v1028
      %v1142 = vpop.f32.mrb[0].mxu0
      %v1143 = vadd.f32 %v838, %v1142
      %v1144 = vpop.f32.mrb[0].mxu0
      %v1145 = vpop.f32.mrb[0].mxu0
      %v1146 = vadd.f32 %v841, %v1145
      %v1147 = vpop.f32.mrb[0].mxu0
      %1148 = vmatprep.mubr.bf16.mxu0 0
      %1149 = vmatmul.mubr.bf16.gmra.mrb[0].mxu0 %v1029
      %v1150 = vpop.f32.mrb[0].mxu0
      %v1151 = vadd.f32 %v846, %v1150
      %v1152 = vpop.f32.mrb[0].mxu0
      %v1153 = vpop.f32.mrb[0].mxu0
      %v1154 = vadd.f32 %v849, %v1153
      %v1155 = vpop.f32.mrb[0].mxu0
      %1156 = vmatprep.mubr.bf16.mxu0 0
      %1157 = vmatmul.mubr.bf16.gmra.mrb[0].mxu0 %v1030
      %v1158 = vpop.f32.mrb[0].mxu0
      %v1159 = vadd.f32 %v854, %v1158
      %v1160 = vpop.f32.mrb[0].mxu0
      %v1161 = vpop.f32.mrb[0].mxu0
      %v1162 = vadd.f32 %v857, %v1161
      %v1163 = vpop.f32.mrb[0].mxu0
      %1164 = vmatprep.mubr.bf16.mxu0 0
      %1165 = vmatmul.mubr.bf16.gmra.mrb[0].mxu0 %v1031
      %v1166 = vpop.f32.mrb[0].mxu0
      %v1167 = vadd.f32 %v862, %v1166
      %v1168 = vpop.f32.mrb[0].mxu0
      %v1169 = vpop.f32.mrb[0].mxu0
      %v1170 = vadd.f32 %v865, %v1169
      %v1171 = vpop.f32.mrb[0].mxu0
      %1172 = vmatprep.mubr.bf16.mxu0 0
      %1173 = vmatmul.mubr.bf16.gmra.mrb[0].mxu0 %v1032
      %v1174 = vpop.f32.mrb[0].mxu0
      %v1175 = vadd.f32 %v870, %v1174
      %v1176 = vpop.f32.mrb[0].mxu0
      %v1177 = vpop.f32.mrb[0].mxu0
      %v1178 = vadd.f32 %v873, %v1177
      %v1179 = vpop.f32.mrb[0].mxu0
      %1180 = vmatprep.mubr.bf16.mxu0 0
      %1181 = vmatmul.mubr.bf16.gmra.mrb[0].mxu0 %v1033
      %v1182 = vpop.f32.mrb[0].mxu0
      %v1183 = vadd.f32 %v878, %v1182
      %v1184 = vpop.f32.mrb[0].mxu0
      %v1185 = vpop.f32.mrb[0].mxu0
      %v1186 = vadd.f32 %v881, %v1185
      %v1187 = vpop.f32.mrb[0].mxu0
      %1188 = vmatprep.mubr.bf16.mxu0 0
      %1189 = vmatmul.mubr.bf16.gmra.mrb[0].mxu0 %v1034
      %v1190 = vpop.f32.mrb[0].mxu0
      %v1191 = vadd.f32 %v886, %v1190
      %v1192 = vpop.f32.mrb[0].mxu0
      %v1193 = vpop.f32.mrb[0].mxu0
      %v1194 = vadd.f32 %v889, %v1193
      %v1195 = vpop.f32.mrb[0].mxu0
      %1196 = vmatprep.mubr.bf16.mxu0 0
      %1197 = vmatmul.mubr.bf16.gmra.mrb[0].mxu0 %v1035
      %v1198 = vpop.f32.mrb[0].mxu0
      %v1199 = vadd.f32 %v894, %v1198
      %v1200 = vpop.f32.mrb[0].mxu0
      %v1201 = vpop.f32.mrb[0].mxu0
      %v1202 = vadd.f32 %v897, %v1201
      %v1203 = vpop.f32.mrb[0].mxu0
      %1204 = vmatprep.mubr.bf16.mxu0 0
      %1205 = vmatmul.mubr.bf16.gmra.mrb[0].mxu0 %v1036
      %v1206 = vpop.f32.mrb[0].mxu0
      %v1207 = vadd.f32 %v902, %v1206
      %v1208 = vpop.f32.mrb[0].mxu0
      %v1209 = vpop.f32.mrb[0].mxu0
      %v1210 = vadd.f32 %v905, %v1209
      %v1211 = vpop.f32.mrb[0].mxu0
      %1212 = vmatprep.mubr.bf16.mxu0 0
      %1213 = vmatmul.mubr.bf16.gmra.mrb[0].mxu0 %v1037
      %v1214 = vpop.f32.mrb[0].mxu0
      %v1215 = vadd.f32 %v910, %v1214
      %v1216 = vpop.f32.mrb[0].mxu0
      %v1217 = vpop.f32.mrb[0].mxu0
      %v1218 = vadd.f32 %v913, %v1217
      %v1219 = vpop.f32.mrb[0].mxu0
      %1220 = vmatprep.mubr.bf16.mxu0 0
      %1221 = vmatmul.mubr.bf16.gmra.mrb[0].mxu0 %v1038
      %v1222 = vpop.f32.mrb[0].mxu0
      %v1223 = vadd.f32 %v918, %v1222
      %v1224 = vpop.f32.mrb[0].mxu0
      %v1225 = vpop.f32.mrb[0].mxu0
      %v1226 = vadd.f32 %v921, %v1225
      %v1227 = vpop.f32.mrb[0].mxu0
      %1228 = vmatprep.mubr.bf16.mxu0 0
      %1229 = vmatmul.mubr.bf16.gmra.mrb[0].mxu0 %v1039
      %v1230 = vpop.f32.mrb[0].mxu0
      %v1231 = vadd.f32 %v926, %v1230
      %v1232 = vpop.f32.mrb[0].mxu0
      %v1233 = vpop.f32.mrb[0].mxu0
      %v1234 = vadd.f32 %v929, %v1233
      %v1235 = vpop.f32.mrb[0].mxu0
      %1236 = vmatprep.mubr.bf16.mxu0 0
      %1237 = vmatmul.mubr.bf16.gmra.mrb[0].mxu0 %v1040
      %v1238 = vpop.f32.mrb[0].mxu0
      %v1239 = vadd.f32 %v934, %v1238
      %v1240 = vpop.f32.mrb[0].mxu0
      %v1241 = vpop.f32.mrb[0].mxu0
      %v1242 = vadd.f32 %v937, %v1241
      %v1243 = vpop.f32.mrb[0].mxu0
      %1244 = vmatprep.mubr.bf16.mxu0 0
      %1245 = vmatmul.mubr.bf16.gmra.mrb[0].mxu0 %v1041
      %v1246 = vpop.f32.mrb[0].mxu0
      %v1247 = vadd.f32 %v942, %v1246
      %v1248 = vpop.f32.mrb[0].mxu0
      %v1249 = vpop.f32.mrb[0].mxu0
      %v1250 = vadd.f32 %v945, %v1249
      %v1251 = vpop.f32.mrb[0].mxu0
      %1252 = vmatprep.mubr.bf16.mxu0 0
      %1253 = vmatmul.mubr.bf16.gmra.mrb[0].mxu0 %v1042
      %v1254 = vpop.f32.mrb[0].mxu0
      %v1255 = vadd.f32 %v950, %v1254
      %v1256 = vpop.f32.mrb[0].mxu0
      %v1257 = vpop.f32.mrb[0].mxu0
      %v1258 = vadd.f32 %v953, %v1257
      %v1259 = vpop.f32.mrb[0].mxu0
      %1260 = vmatprep.mubr.bf16.mxu0 0
      %1261 = vmatmul.mubr.bf16.gmra.mrb[0].mxu0 %v1043
      %v1262 = vpop.f32.mrb[0].mxu0
      %v1263 = vadd.f32 %v958, %v1262
      %v1264 = vpop.f32.mrb[0].mxu0
      %v1265 = vpop.f32.mrb[0].mxu0
      %v1266 = vadd.f32 %v961, %v1265
      %v1267 = vpop.f32.mrb[0].mxu0
      %1268 = vdwg.mxu0
      %s1269 = scalar_lea.vmem %s1, 128
      %v1270 = vld [vmem:[%s1269] sm:$0xf]
      %v1271 = vld [vmem:[%s1269 + $0x4] sm:$0xf]
      %v1272 = vld [vmem:[%s1269 + $0x8] sm:$0xf]
      %v1273 = vld [vmem:[%s1269 + $0xc] sm:$0xf]
      %v1274 = vld [vmem:[%s1269 + $0x10] sm:$0xf]
      %v1275 = vld [vmem:[%s1269 + $0x14] sm:$0xf]
      %v1276 = vld [vmem:[%s1269 + $0x18] sm:$0xf]
      %v1277 = vld [vmem:[%s1269 + $0x1c] sm:$0xf]
      %v1278 = vld [vmem:[%s1269 + $0x20] sm:$0xf]
      %v1279 = vld [vmem:[%s1269 + $0x24] sm:$0xf]
      %v1280 = vld [vmem:[%s1269 + $0x28] sm:$0xf]
      %v1281 = vld [vmem:[%s1269 + $0x2c] sm:$0xf]
      %v1282 = vld [vmem:[%s1269 + $0x30] sm:$0xf]
      %v1283 = vld [vmem:[%s1269 + $0x34] sm:$0xf]
      %v1284 = vld [vmem:[%s1269 + $0x38] sm:$0xf]
      %v1285 = vld [vmem:[%s1269 + $0x3c] sm:$0xf]
      %v1288 = vunpack.c.l.b16 %v624
      %v1289 = vunpack.c.l.b16 %v625
      %v1290 = vpack.c.b16 %v1289, %v1288
      %v1308 = vunpack.c.l.b16 %v1270
      %v1309 = vunpack.c.l.b16 %v1271
      %v1310 = vunpack.c.l.b16 %v1272
      %v1311 = vunpack.c.l.b16 %v1273
      %v1312 = vunpack.c.l.b16 %v1274
      %v1313 = vunpack.c.l.b16 %v1275
      %v1314 = vunpack.c.l.b16 %v1276
      %v1315 = vunpack.c.l.b16 %v1277
      %v1316 = vunpack.c.l.b16 %v1278
      %v1317 = vunpack.c.l.b16 %v1279
      %v1318 = vunpack.c.l.b16 %v1280
      %v1319 = vunpack.c.l.b16 %v1281
      %v1320 = vunpack.c.l.b16 %v1282
      %v1321 = vunpack.c.l.b16 %v1283
      %v1322 = vunpack.c.l.b16 %v1284
      %v1323 = vunpack.c.l.b16 %v1285
      %v1324 = vpack.c.b16 %v1309, %v1308
      %v1325 = vpack.c.b16 %v1311, %v1310
      %v1326 = vpack.c.b16 %v1313, %v1312
      %v1327 = vpack.c.b16 %v1315, %v1314
      %v1328 = vpack.c.b16 %v1317, %v1316
      %v1329 = vpack.c.b16 %v1319, %v1318
      %v1330 = vpack.c.b16 %v1321, %v1320
      %v1331 = vpack.c.b16 %v1323, %v1322
      %1340 = vmatprep.subr.bf16.mxu0 0
      %1341 = vmatpush1.bf16.msra.mxu0 %v1324
      %1342 = vmatprep.subr.bf16.mxu0 0
      %1343 = vmatpush1.bf16.msra.mxu0 %v1325
      %1344 = vmatprep.subr.bf16.mxu0 0
      %1345 = vmatpush1.bf16.msra.mxu0 %v1326
      %1346 = vmatprep.subr.bf16.mxu0 0
      %1347 = vmatpush1.bf16.msra.mxu0 %v1327
      %1348 = vmatprep.subr.bf16.mxu0 0
      %1349 = vmatpush1.bf16.msra.mxu0 %v1328
      %1350 = vmatprep.subr.bf16.mxu0 0
      %1351 = vmatpush1.bf16.msra.mxu0 %v1329
      %1352 = vmatprep.subr.bf16.mxu0 0
      %1353 = vmatpush1.bf16.msra.mxu0 %v1330
      %1354 = vmatprep.subr.bf16.mxu0 0
      %1355 = vmatpush1.bf16.msra.mxu0 %v1331
      %1356 = vmatprep.subr.bf16.mxu0 0
      %1357 = vmatpush1.bf16.msra.mxu0 0
      %1358 = vmatprep.subr.bf16.mxu0 0
      %1359 = vmatpush1.bf16.msra.mxu0 0
      %1360 = vmatprep.subr.bf16.mxu0 0
      %1361 = vmatpush1.bf16.msra.mxu0 0
      %1362 = vmatprep.subr.bf16.mxu0 0
      %1363 = vmatpush1.bf16.msra.mxu0 0
      %1364 = vmatprep.subr.bf16.mxu0 0
      %1365 = vmatpush1.bf16.msra.mxu0 0
      %1366 = vmatprep.subr.bf16.mxu0 0
      %1367 = vmatpush1.bf16.msra.mxu0 0
      %1368 = vmatprep.subr.bf16.mxu0 0
      %1369 = vmatpush1.bf16.msra.mxu0 0
      %1370 = vmatprep.subr.bf16.mxu0 0
      %1371 = vmatpush1.bf16.msra.mxu0 0
      %1372 = vmatprep.mubr.bf16.mxu0 0
      %1373 = vmatmul.mubr.bf16.gmra.mrb[0].mxu0 %v1029
      %v1374 = vpop.f32.mrb[0].mxu0
      %v1375 = vadd.f32 0.0, %v1374
      %v1376 = vpop.f32.mrb[0].mxu0
      %v1377 = vpop.f32.mrb[0].mxu0
      %v1378 = vadd.f32 0.0, %v1377
      %v1379 = vpop.f32.mrb[0].mxu0
      %1380 = vmatprep.mubr.bf16.mxu0 0
      %1381 = vmatmul.mubr.bf16.gmra.mrb[0].mxu0 %v1030
      %v1382 = vpop.f32.mrb[0].mxu0
      %v1383 = vadd.f32 0.0, %v1382
      %v1384 = vpop.f32.mrb[0].mxu0
      %v1385 = vpop.f32.mrb[0].mxu0
      %v1386 = vadd.f32 0.0, %v1385
      %v1387 = vpop.f32.mrb[0].mxu0
      %1388 = vmatprep.mubr.bf16.mxu0 0
      %1389 = vmatmul.mubr.bf16.gmra.mrb[0].mxu0 %v1031
      %v1390 = vpop.f32.mrb[0].mxu0
      %v1391 = vadd.f32 0.0, %v1390
      %v1392 = vpop.f32.mrb[0].mxu0
      %v1393 = vpop.f32.mrb[0].mxu0
      %v1394 = vadd.f32 0.0, %v1393
      %v1395 = vpop.f32.mrb[0].mxu0
      %1396 = vmatprep.mubr.bf16.mxu0 0
      %1397 = vmatmul.mubr.bf16.gmra.mrb[0].mxu0 %v1032
      %v1398 = vpop.f32.mrb[0].mxu0
      %v1399 = vadd.f32 0.0, %v1398
      %v1400 = vpop.f32.mrb[0].mxu0
      %v1401 = vpop.f32.mrb[0].mxu0
      %v1402 = vadd.f32 0.0, %v1401
      %v1403 = vpop.f32.mrb[0].mxu0
      %1404 = vmatprep.mubr.bf16.mxu0 0
      %1405 = vmatmul.mubr.bf16.gmra.mrb[0].mxu0 %v1033
      %v1406 = vpop.f32.mrb[0].mxu0
      %v1407 = vadd.f32 0.0, %v1406
      %v1408 = vpop.f32.mrb[0].mxu0
      %v1409 = vpop.f32.mrb[0].mxu0
      %v1410 = vadd.f32 0.0, %v1409
      %v1411 = vpop.f32.mrb[0].mxu0
      %1412 = vmatprep.mubr.bf16.mxu0 0
      %1413 = vmatmul.mubr.bf16.gmra.mrb[0].mxu0 %v1034
      %v1414 = vpop.f32.mrb[0].mxu0
      %v1415 = vadd.f32 0.0, %v1414
      %v1416 = vpop.f32.mrb[0].mxu0
      %v1417 = vpop.f32.mrb[0].mxu0
      %v1418 = vadd.f32 0.0, %v1417
      %v1419 = vpop.f32.mrb[0].mxu0
      %1420 = vmatprep.mubr.bf16.mxu0 0
      %1421 = vmatmul.mubr.bf16.gmra.mrb[0].mxu0 %v1035
      %v1422 = vpop.f32.mrb[0].mxu0
      %v1423 = vadd.f32 0.0, %v1422
      %v1424 = vpop.f32.mrb[0].mxu0
      %v1425 = vpop.f32.mrb[0].mxu0
      %v1426 = vadd.f32 0.0, %v1425
      %v1427 = vpop.f32.mrb[0].mxu0
      %1428 = vmatprep.mubr.bf16.mxu0 0
      %1429 = vmatmul.mubr.bf16.gmra.mrb[0].mxu0 %v1036
      %v1430 = vpop.f32.mrb[0].mxu0
      %v1431 = vadd.f32 0.0, %v1430
      %v1432 = vpop.f32.mrb[0].mxu0
      %v1433 = vpop.f32.mrb[0].mxu0
      %v1434 = vadd.f32 0.0, %v1433
      %v1435 = vpop.f32.mrb[0].mxu0
      %1436 = vmatprep.mubr.bf16.mxu0 0
      %1437 = vmatmul.mubr.bf16.gmra.mrb[0].mxu0 %v1037
      %v1438 = vpop.f32.mrb[0].mxu0
      %v1439 = vadd.f32 0.0, %v1438
      %v1440 = vpop.f32.mrb[0].mxu0
      %v1441 = vpop.f32.mrb[0].mxu0
      %v1442 = vadd.f32 0.0, %v1441
      %v1443 = vpop.f32.mrb[0].mxu0
      %1444 = vmatprep.mubr.bf16.mxu0 0
      %1445 = vmatmul.mubr.bf16.gmra.mrb[0].mxu0 %v1038
      %v1446 = vpop.f32.mrb[0].mxu0
      %v1447 = vadd.f32 0.0, %v1446
      %v1448 = vpop.f32.mrb[0].mxu0
      %v1449 = vpop.f32.mrb[0].mxu0
      %v1450 = vadd.f32 0.0, %v1449
      %v1451 = vpop.f32.mrb[0].mxu0
      %1452 = vmatprep.mubr.bf16.mxu0 0
      %1453 = vmatmul.mubr.bf16.gmra.mrb[0].mxu0 %v1039
      %v1454 = vpop.f32.mrb[0].mxu0
      %v1455 = vadd.f32 0.0, %v1454
      %v1456 = vpop.f32.mrb[0].mxu0
      %v1457 = vpop.f32.mrb[0].mxu0
      %v1458 = vadd.f32 0.0, %v1457
      %v1459 = vpop.f32.mrb[0].mxu0
      %1460 = vmatprep.mubr.bf16.mxu0 0
      %1461 = vmatmul.mubr.bf16.gmra.mrb[0].mxu0 %v1040
      %v1462 = vpop.f32.mrb[0].mxu0
      %v1463 = vadd.f32 0.0, %v1462
      %v1464 = vpop.f32.mrb[0].mxu0
      %v1465 = vpop.f32.mrb[0].mxu0
      %v1466 = vadd.f32 0.0, %v1465
      %v1467 = vpop.f32.mrb[0].mxu0
      %1468 = vmatprep.mubr.bf16.mxu0 0
      %1469 = vmatmul.mubr.bf16.gmra.mrb[0].mxu0 %v1041
      %v1470 = vpop.f32.mrb[0].mxu0
      %v1471 = vadd.f32 0.0, %v1470
      %v1472 = vpop.f32.mrb[0].mxu0
      %v1473 = vpop.f32.mrb[0].mxu0
      %v1474 = vadd.f32 0.0, %v1473
      %v1475 = vpop.f32.mrb[0].mxu0
      %1476 = vmatprep.mubr.bf16.mxu0 0
      %1477 = vmatmul.mubr.bf16.gmra.mrb[0].mxu0 %v1042
      %v1478 = vpop.f32.mrb[0].mxu0
      %v1479 = vadd.f32 0.0, %v1478
      %v1480 = vpop.f32.mrb[0].mxu0
      %v1481 = vpop.f32.mrb[0].mxu0
      %v1482 = vadd.f32 0.0, %v1481
      %v1483 = vpop.f32.mrb[0].mxu0
      %1484 = vmatprep.mubr.bf16.mxu0 0
      %1485 = vmatmul.mubr.bf16.gmra.mrb[0].mxu0 %v1043
      %v1486 = vpop.f32.mrb[0].mxu0
      %v1487 = vadd.f32 0.0, %v1486
      %v1488 = vpop.f32.mrb[0].mxu0
      %v1489 = vpop.f32.mrb[0].mxu0
      %v1490 = vadd.f32 0.0, %v1489
      %v1491 = vpop.f32.mrb[0].mxu0
      %1492 = vmatprep.mubr.bf16.mxu0 0
      %1493 = vmatmul.mubr.bf16.gmra.mrb[0].mxu0 %v1290
      %v1494 = vpop.f32.mrb[0].mxu0
      %v1495 = vadd.f32 0.0, %v1494
      %v1496 = vpop.f32.mrb[0].mxu0
      %v1497 = vpop.f32.mrb[0].mxu0
      %v1498 = vadd.f32 0.0, %v1497
      %v1499 = vpop.f32.mrb[0].mxu0
      %1500 = vdwg.mxu0
      %v1501 = vadd.f32 %v1143, %v1375
      %v1502 = vadd.f32 %v1146, %v1378
      %v1503 = vadd.f32 %v1151, %v1383
      %v1504 = vadd.f32 %v1154, %v1386
      %v1505 = vadd.f32 %v1159, %v1391
      %v1506 = vadd.f32 %v1162, %v1394
      %v1507 = vadd.f32 %v1167, %v1399
      %v1508 = vadd.f32 %v1170, %v1402
      %v1509 = vadd.f32 %v1175, %v1407
      %v1510 = vadd.f32 %v1178, %v1410
      %v1511 = vadd.f32 %v1183, %v1415
      %v1512 = vadd.f32 %v1186, %v1418
      %v1513 = vadd.f32 %v1191, %v1423
      %v1514 = vadd.f32 %v1194, %v1426
      %v1515 = vadd.f32 %v1199, %v1431
      %v1516 = vadd.f32 %v1202, %v1434
      %v1517 = vadd.f32 %v1207, %v1439
      %v1518 = vadd.f32 %v1210, %v1442
      %v1519 = vadd.f32 %v1215, %v1447
      %v1520 = vadd.f32 %v1218, %v1450
      %v1521 = vadd.f32 %v1223, %v1455
      %v1522 = vadd.f32 %v1226, %v1458
      %v1523 = vadd.f32 %v1231, %v1463
      %v1524 = vadd.f32 %v1234, %v1466
      %v1525 = vadd.f32 %v1239, %v1471
      %v1526 = vadd.f32 %v1242, %v1474
      %v1527 = vadd.f32 %v1247, %v1479
      %v1528 = vadd.f32 %v1250, %v1482
      %v1529 = vadd.f32 %v1255, %v1487
      %v1530 = vadd.f32 %v1258, %v1490
      %v1531 = vadd.f32 %v1263, %v1495
      %v1532 = vadd.f32 %v1266, %v1498
      %v1533 = vld [vmem:[%s2] sm:$0x1]
      %v1535 = vlaneseq
      %v1536 = vshrl.u32 %v1535, 7
      %v1537 = vsub.s32 0, %v1536
      %v1538 = vrot.slane %v1533, %v1537
      %v1540 = vadd.f32 %v1501, %v1538
      %v1541 = vadd.f32 %v1502, %v1538
      %v1542 = vadd.f32 %v1503, %v1538
      %v1543 = vadd.f32 %v1504, %v1538
      %v1544 = vadd.f32 %v1505, %v1538
      %v1545 = vadd.f32 %v1506, %v1538
      %v1546 = vadd.f32 %v1507, %v1538
      %v1547 = vadd.f32 %v1508, %v1538
      %v1548 = vadd.f32 %v1509, %v1538
      %v1549 = vadd.f32 %v1510, %v1538
      %v1550 = vadd.f32 %v1511, %v1538
      %v1551 = vadd.f32 %v1512, %v1538
      %v1552 = vadd.f32 %v1513, %v1538
      %v1553 = vadd.f32 %v1514, %v1538
      %v1554 = vadd.f32 %v1515, %v1538
      %v1555 = vadd.f32 %v1516, %v1538
      %v1556 = vadd.f32 %v1517, %v1538
      %v1557 = vadd.f32 %v1518, %v1538
      %v1558 = vadd.f32 %v1519, %v1538
      %v1559 = vadd.f32 %v1520, %v1538
      %v1560 = vadd.f32 %v1521, %v1538
      %v1561 = vadd.f32 %v1522, %v1538
      %v1562 = vadd.f32 %v1523, %v1538
      %v1563 = vadd.f32 %v1524, %v1538
      %v1564 = vadd.f32 %v1525, %v1538
      %v1565 = vadd.f32 %v1526, %v1538
      %v1566 = vadd.f32 %v1527, %v1538
      %v1567 = vadd.f32 %v1528, %v1538
      %v1568 = vadd.f32 %v1529, %v1538
      %v1569 = vadd.f32 %v1530, %v1538
      %v1570 = vadd.f32 %v1531, %v1538
      %v1571 = vadd.f32 %v1532, %v1538
      %v1572 = vmax.f32 %v1540, 0.0
      %v1573 = vmax.f32 %v1541, 0.0
      %v1574 = vmax.f32 %v1542, 0.0
      %v1575 = vmax.f32 %v1543, 0.0
      %v1576 = vmax.f32 %v1544, 0.0
      %v1577 = vmax.f32 %v1545, 0.0
      %v1578 = vmax.f32 %v1546, 0.0
      %v1579 = vmax.f32 %v1547, 0.0
      %v1580 = vmax.f32 %v1548, 0.0
      %v1581 = vmax.f32 %v1549, 0.0
      %v1582 = vmax.f32 %v1550, 0.0
      %v1583 = vmax.f32 %v1551, 0.0
      %v1584 = vmax.f32 %v1552, 0.0
      %v1585 = vmax.f32 %v1553, 0.0
      %v1586 = vmax.f32 %v1554, 0.0
      %v1587 = vmax.f32 %v1555, 0.0
      %v1588 = vmax.f32 %v1556, 0.0
      %v1589 = vmax.f32 %v1557, 0.0
      %v1590 = vmax.f32 %v1558, 0.0
      %v1591 = vmax.f32 %v1559, 0.0
      %v1592 = vmax.f32 %v1560, 0.0
      %v1593 = vmax.f32 %v1561, 0.0
      %v1594 = vmax.f32 %v1562, 0.0
      %v1595 = vmax.f32 %v1563, 0.0
      %v1596 = vmax.f32 %v1564, 0.0
      %v1597 = vmax.f32 %v1565, 0.0
      %v1598 = vmax.f32 %v1566, 0.0
      %v1599 = vmax.f32 %v1567, 0.0
      %v1600 = vmax.f32 %v1568, 0.0
      %v1601 = vmax.f32 %v1569, 0.0
      %v1602 = vmax.f32 %v1570, 0.0
      %v1603 = vmax.f32 %v1571, 0.0
      %v1604 = vpack.c.bf16 %v1573, %v1572
      %v1605 = vpack.c.bf16 %v1575, %v1574
      %v1606 = vpack.c.bf16 %v1577, %v1576
      %v1607 = vpack.c.bf16 %v1579, %v1578
      %v1608 = vpack.c.bf16 %v1581, %v1580
      %v1609 = vpack.c.bf16 %v1583, %v1582
      %v1610 = vpack.c.bf16 %v1585, %v1584
      %v1611 = vpack.c.bf16 %v1587, %v1586
      %v1612 = vpack.c.bf16 %v1589, %v1588
      %v1613 = vpack.c.bf16 %v1591, %v1590
      %v1614 = vpack.c.bf16 %v1593, %v1592
      %v1615 = vpack.c.bf16 %v1595, %v1594
      %v1616 = vpack.c.bf16 %v1597, %v1596
      %v1617 = vpack.c.bf16 %v1599, %v1598
      %v1618 = vpack.c.bf16 %v1601, %v1600
      %v1619 = vpack.c.bf16 %v1603, %v1602
      %1620 = vst [vmem:[#allocation2 + $0x8] sm:$0xff] %v1604
      %1621 = vst [vmem:[#allocation2 + $0x10] sm:$0xff] %v1605
      %1622 = vst [vmem:[#allocation2 + $0x18] sm:$0xff] %v1606
      %1623 = vst [vmem:[#allocation2 + $0x20] sm:$0xff] %v1607
      %1624 = vst [vmem:[#allocation2 + $0x28] sm:$0xff] %v1608
      %1625 = vst [vmem:[#allocation2 + $0x30] sm:$0xff] %v1609
      %1626 = vst [vmem:[#allocation2 + $0x38] sm:$0xff] %v1610
      %1627 = vst [vmem:[#allocation2 + $0x40] sm:$0xff] %v1611
      %1628 = vst [vmem:[#allocation2 + $0x48] sm:$0xff] %v1612
      %1629 = vst [vmem:[#allocation2 + $0x50] sm:$0xff] %v1613
      %1630 = vst [vmem:[#allocation2 + $0x58] sm:$0xff] %v1614
      %1631 = vst [vmem:[#allocation2 + $0x60] sm:$0xff] %v1615
      %1632 = vst [vmem:[#allocation2 + $0x68] sm:$0xff] %v1616
      %1633 = vst [vmem:[#allocation2 + $0x70] sm:$0xff] %v1617
      %1634 = vst [vmem:[#allocation2 + $0x78] sm:$0xff] %v1618
      %1635 = vst [vmem:[#allocation2 + $0x80] sm:$0xff] %v1619
      %v1636 = vld [vmem:[#allocation2] sm:$0xff]
      %v1637 = vld [vmem:[#allocation2 + $0x8] sm:$0xff]
      %v1638 = vld [vmem:[#allocation2 + $0x10] sm:$0xff]
      %v1639 = vld [vmem:[#allocation2 + $0x18] sm:$0xff]
      %v1640 = vld [vmem:[#allocation2 + $0x20] sm:$0xff]
      %v1641 = vld [vmem:[#allocation2 + $0x28] sm:$0xff]
      %v1642 = vld [vmem:[#allocation2 + $0x30] sm:$0xff]
      %v1643 = vld [vmem:[#allocation2 + $0x38] sm:$0xff]
      %v1644 = vld [vmem:[#allocation2 + $0x40] sm:$0xff]
      %v1645 = vld [vmem:[#allocation2 + $0x48] sm:$0xff]
      %v1646 = vld [vmem:[#allocation2 + $0x50] sm:$0xff]
      %v1647 = vld [vmem:[#allocation2 + $0x58] sm:$0xff]
      %v1648 = vld [vmem:[#allocation2 + $0x60] sm:$0xff]
      %v1649 = vld [vmem:[#allocation2 + $0x68] sm:$0xff]
      %v1650 = vld [vmem:[#allocation2 + $0x70] sm:$0xff]
      %v1651 = vld [vmem:[#allocation2 + $0x78] sm:$0xff]
      %v1652 = vld [vmem:[#allocation2 + $0x80] sm:$0xff]
      %v1653 = vld [vmem:[#allocation2 + $0x10] sm:$0xff]
      %v1654 = vld [vmem:[#allocation2 + $0x18] sm:$0xff]
      %v1655 = vld [vmem:[#allocation2 + $0x20] sm:$0xff]
      %v1656 = vld [vmem:[#allocation2 + $0x28] sm:$0xff]
      %v1657 = vld [vmem:[#allocation2 + $0x30] sm:$0xff]
      %v1658 = vld [vmem:[#allocation2 + $0x38] sm:$0xff]
      %v1659 = vld [vmem:[#allocation2 + $0x40] sm:$0xff]
      %v1660 = vld [vmem:[#allocation2 + $0x48] sm:$0xff]
      %v1661 = vld [vmem:[#allocation2 + $0x50] sm:$0xff]
      %v1662 = vld [vmem:[#allocation2 + $0x58] sm:$0xff]
      %v1663 = vld [vmem:[#allocation2 + $0x60] sm:$0xff]
      %v1664 = vld [vmem:[#allocation2 + $0x68] sm:$0xff]
      %v1665 = vld [vmem:[#allocation2 + $0x70] sm:$0xff]
      %v1666 = vld [vmem:[#allocation2 + $0x78] sm:$0xff]
      %v1667 = vld [vmem:[#allocation2 + $0x80] sm:$0xff]
      %v1668 = vld [vmem:[#allocation2 + $0x88] sm:$0xff]
      %v1669 = vld [vmem:[%s3] sm:$0xf]
      %v1670 = vld [vmem:[%s3 + $0x4] sm:$0xf]
      %v1671 = vld [vmem:[%s3 + $0x8] sm:$0xf]
      %v1672 = vld [vmem:[%s3 + $0xc] sm:$0xf]
      %v1673 = vld [vmem:[%s3 + $0x10] sm:$0xf]
      %v1674 = vld [vmem:[%s3 + $0x14] sm:$0xf]
      %v1675 = vld [vmem:[%s3 + $0x18] sm:$0xf]
      %v1676 = vld [vmem:[%s3 + $0x1c] sm:$0xf]
      %v1677 = vld [vmem:[%s3 + $0x20] sm:$0xf]
      %v1678 = vld [vmem:[%s3 + $0x24] sm:$0xf]
      %v1679 = vld [vmem:[%s3 + $0x28] sm:$0xf]
      %v1680 = vld [vmem:[%s3 + $0x2c] sm:$0xf]
      %v1681 = vld [vmem:[%s3 + $0x30] sm:$0xf]
      %v1682 = vld [vmem:[%s3 + $0x34] sm:$0xf]
      %v1683 = vld [vmem:[%s3 + $0x38] sm:$0xf]
      %v1684 = vld [vmem:[%s3 + $0x3c] sm:$0xf]
      %s1685 = scalar_lea.vmem %s3, 64
      %v1686 = vld [vmem:[%s1685] sm:$0xf]
      %v1687 = vld [vmem:[%s1685 + $0x4] sm:$0xf]
      %v1688 = vld [vmem:[%s1685 + $0x8] sm:$0xf]
      %v1689 = vld [vmem:[%s1685 + $0xc] sm:$0xf]
      %v1690 = vld [vmem:[%s1685 + $0x10] sm:$0xf]
      %v1691 = vld [vmem:[%s1685 + $0x14] sm:$0xf]
      %v1692 = vld [vmem:[%s1685 + $0x18] sm:$0xf]
      %v1693 = vld [vmem:[%s1685 + $0x1c] sm:$0xf]
      %v1694 = vld [vmem:[%s1685 + $0x20] sm:$0xf]
      %v1695 = vld [vmem:[%s1685 + $0x24] sm:$0xf]
      %v1696 = vld [vmem:[%s1685 + $0x28] sm:$0xf]
      %v1697 = vld [vmem:[%s1685 + $0x2c] sm:$0xf]
      %v1698 = vld [vmem:[%s1685 + $0x30] sm:$0xf]
      %v1699 = vld [vmem:[%s1685 + $0x34] sm:$0xf]
      %v1700 = vld [vmem:[%s1685 + $0x38] sm:$0xf]
      %v1701 = vld [vmem:[%s1685 + $0x3c] sm:$0xf]
      %v1718 = vunpack.c.l.b16 %v1686
      %v1719 = vunpack.c.l.b16 %v1687
      %v1720 = vunpack.c.l.b16 %v1688
      %v1721 = vunpack.c.l.b16 %v1689
      %v1722 = vunpack.c.l.b16 %v1690
      %v1723 = vunpack.c.l.b16 %v1691
      %v1724 = vunpack.c.l.b16 %v1692
      %v1725 = vunpack.c.l.b16 %v1693
      %v1726 = vunpack.c.l.b16 %v1694
      %v1727 = vunpack.c.l.b16 %v1695
      %v1728 = vunpack.c.l.b16 %v1696
      %v1729 = vunpack.c.l.b16 %v1697
      %v1730 = vunpack.c.l.b16 %v1698
      %v1731 = vunpack.c.l.b16 %v1699
      %v1732 = vunpack.c.l.b16 %v1700
      %v1733 = vunpack.c.l.b16 %v1701
      %v1734 = vpack.c.b16 %v1719, %v1718
      %v1735 = vpack.c.b16 %v1721, %v1720
      %v1736 = vpack.c.b16 %v1723, %v1722
      %v1737 = vpack.c.b16 %v1725, %v1724
      %v1738 = vpack.c.b16 %v1727, %v1726
      %v1739 = vpack.c.b16 %v1729, %v1728
      %v1740 = vpack.c.b16 %v1731, %v1730
      %v1741 = vpack.c.b16 %v1733, %v1732
      %1750 = vmatprep.subr.bf16.mxu0 0
      %1751 = vmatpush1.bf16.msra.mxu0 %v1734
      %1752 = vmatprep.subr.bf16.mxu0 0
      %1753 = vmatpush1.bf16.msra.mxu0 %v1735
      %1754 = vmatprep.subr.bf16.mxu0 0
      %1755 = vmatpush1.bf16.msra.mxu0 %v1736
      %1756 = vmatprep.subr.bf16.mxu0 0
      %1757 = vmatpush1.bf16.msra.mxu0 %v1737
      %1758 = vmatprep.subr.bf16.mxu0 0
      %1759 = vmatpush1.bf16.msra.mxu0 %v1738
      %1760 = vmatprep.subr.bf16.mxu0 0
      %1761 = vmatpush1.bf16.msra.mxu0 %v1739
      %1762 = vmatprep.subr.bf16.mxu0 0
      %1763 = vmatpush1.bf16.msra.mxu0 %v1740
      %1764 = vmatprep.subr.bf16.mxu0 0
      %1765 = vmatpush1.bf16.msra.mxu0 %v1741
      %1766 = vmatprep.subr.bf16.mxu0 0
      %1767 = vmatpush1.bf16.msra.mxu0 0
      %1768 = vmatprep.subr.bf16.mxu0 0
      %1769 = vmatpush1.bf16.msra.mxu0 0
      %1770 = vmatprep.subr.bf16.mxu0 0
      %1771 = vmatpush1.bf16.msra.mxu0 0
      %1772 = vmatprep.subr.bf16.mxu0 0
      %1773 = vmatpush1.bf16.msra.mxu0 0
      %1774 = vmatprep.subr.bf16.mxu0 0
      %1775 = vmatpush1.bf16.msra.mxu0 0
      %1776 = vmatprep.subr.bf16.mxu0 0
      %1777 = vmatpush1.bf16.msra.mxu0 0
      %1778 = vmatprep.subr.bf16.mxu0 0
      %1779 = vmatpush1.bf16.msra.mxu0 0
      %1780 = vmatprep.subr.bf16.mxu0 0
      %1781 = vmatpush1.bf16.msra.mxu0 0
      %1782 = vmatprep.mubr.bf16.mxu0 0
      %1783 = vmatmul.mubr.bf16.gmra.mrb[0].mxu0 %v1637
      %v1784 = vpop.f32.mrb[0].mxu0
      %v1785 = vadd.f32 0.0, %v1784
      %v1786 = vpop.f32.mrb[0].mxu0
      %v1787 = vpop.f32.mrb[0].mxu0
      %v1788 = vadd.f32 0.0, %v1787
      %v1789 = vpop.f32.mrb[0].mxu0
      %1790 = vmatprep.mubr.bf16.mxu0 0
      %1791 = vmatmul.mubr.bf16.gmra.mrb[0].mxu0 %v1638
      %v1792 = vpop.f32.mrb[0].mxu0
      %v1793 = vadd.f32 0.0, %v1792
      %v1794 = vpop.f32.mrb[0].mxu0
      %v1795 = vpop.f32.mrb[0].mxu0
      %v1796 = vadd.f32 0.0, %v1795
      %v1797 = vpop.f32.mrb[0].mxu0
      %1798 = vmatprep.mubr.bf16.mxu0 0
      %1799 = vmatmul.mubr.bf16.gmra.mrb[0].mxu0 %v1639
      %v1800 = vpop.f32.mrb[0].mxu0
      %v1801 = vadd.f32 0.0, %v1800
      %v1802 = vpop.f32.mrb[0].mxu0
      %v1803 = vpop.f32.mrb[0].mxu0
      %v1804 = vadd.f32 0.0, %v1803
      %v1805 = vpop.f32.mrb[0].mxu0
      %1806 = vmatprep.mubr.bf16.mxu0 0
      %1807 = vmatmul.mubr.bf16.gmra.mrb[0].mxu0 %v1640
      %v1808 = vpop.f32.mrb[0].mxu0
      %v1809 = vadd.f32 0.0, %v1808
      %v1810 = vpop.f32.mrb[0].mxu0
      %v1811 = vpop.f32.mrb[0].mxu0
      %v1812 = vadd.f32 0.0, %v1811
      %v1813 = vpop.f32.mrb[0].mxu0
      %1814 = vmatprep.mubr.bf16.mxu0 0
      %1815 = vmatmul.mubr.bf16.gmra.mrb[0].mxu0 %v1641
      %v1816 = vpop.f32.mrb[0].mxu0
      %v1817 = vadd.f32 0.0, %v1816
      %v1818 = vpop.f32.mrb[0].mxu0
      %v1819 = vpop.f32.mrb[0].mxu0
      %v1820 = vadd.f32 0.0, %v1819
      %v1821 = vpop.f32.mrb[0].mxu0
      %1822 = vmatprep.mubr.bf16.mxu0 0
      %1823 = vmatmul.mubr.bf16.gmra.mrb[0].mxu0 %v1642
      %v1824 = vpop.f32.mrb[0].mxu0
      %v1825 = vadd.f32 0.0, %v1824
      %v1826 = vpop.f32.mrb[0].mxu0
      %v1827 = vpop.f32.mrb[0].mxu0
      %v1828 = vadd.f32 0.0, %v1827
      %v1829 = vpop.f32.mrb[0].mxu0
      %1830 = vmatprep.mubr.bf16.mxu0 0
      %1831 = vmatmul.mubr.bf16.gmra.mrb[0].mxu0 %v1643
      %v1832 = vpop.f32.mrb[0].mxu0
      %v1833 = vadd.f32 0.0, %v1832
      %v1834 = vpop.f32.mrb[0].mxu0
      %v1835 = vpop.f32.mrb[0].mxu0
      %v1836 = vadd.f32 0.0, %v1835
      %v1837 = vpop.f32.mrb[0].mxu0
      %1838 = vmatprep.mubr.bf16.mxu0 0
      %1839 = vmatmul.mubr.bf16.gmra.mrb[0].mxu0 %v1644
      %v1840 = vpop.f32.mrb[0].mxu0
      %v1841 = vadd.f32 0.0, %v1840
      %v1842 = vpop.f32.mrb[0].mxu0
      %v1843 = vpop.f32.mrb[0].mxu0
      %v1844 = vadd.f32 0.0, %v1843
      %v1845 = vpop.f32.mrb[0].mxu0
      %1846 = vmatprep.mubr.bf16.mxu0 0
      %1847 = vmatmul.mubr.bf16.gmra.mrb[0].mxu0 %v1645
      %v1848 = vpop.f32.mrb[0].mxu0
      %v1849 = vadd.f32 0.0, %v1848
      %v1850 = vpop.f32.mrb[0].mxu0
      %v1851 = vpop.f32.mrb[0].mxu0
      %v1852 = vadd.f32 0.0, %v1851
      %v1853 = vpop.f32.mrb[0].mxu0
      %1854 = vmatprep.mubr.bf16.mxu0 0
      %1855 = vmatmul.mubr.bf16.gmra.mrb[0].mxu0 %v1646
      %v1856 = vpop.f32.mrb[0].mxu0
      %v1857 = vadd.f32 0.0, %v1856
      %v1858 = vpop.f32.mrb[0].mxu0
      %v1859 = vpop.f32.mrb[0].mxu0
      %v1860 = vadd.f32 0.0, %v1859
      %v1861 = vpop.f32.mrb[0].mxu0
      %1862 = vmatprep.mubr.bf16.mxu0 0
      %1863 = vmatmul.mubr.bf16.gmra.mrb[0].mxu0 %v1647
      %v1864 = vpop.f32.mrb[0].mxu0
      %v1865 = vadd.f32 0.0, %v1864
      %v1866 = vpop.f32.mrb[0].mxu0
      %v1867 = vpop.f32.mrb[0].mxu0
      %v1868 = vadd.f32 0.0, %v1867
      %v1869 = vpop.f32.mrb[0].mxu0
      %1870 = vmatprep.mubr.bf16.mxu0 0
      %1871 = vmatmul.mubr.bf16.gmra.mrb[0].mxu0 %v1648
      %v1872 = vpop.f32.mrb[0].mxu0
      %v1873 = vadd.f32 0.0, %v1872
      %v1874 = vpop.f32.mrb[0].mxu0
      %v1875 = vpop.f32.mrb[0].mxu0
      %v1876 = vadd.f32 0.0, %v1875
      %v1877 = vpop.f32.mrb[0].mxu0
      %1878 = vmatprep.mubr.bf16.mxu0 0
      %1879 = vmatmul.mubr.bf16.gmra.mrb[0].mxu0 %v1649
      %v1880 = vpop.f32.mrb[0].mxu0
      %v1881 = vadd.f32 0.0, %v1880
      %v1882 = vpop.f32.mrb[0].mxu0
      %v1883 = vpop.f32.mrb[0].mxu0
      %v1884 = vadd.f32 0.0, %v1883
      %v1885 = vpop.f32.mrb[0].mxu0
      %1886 = vmatprep.mubr.bf16.mxu0 0
      %1887 = vmatmul.mubr.bf16.gmra.mrb[0].mxu0 %v1650
      %v1888 = vpop.f32.mrb[0].mxu0
      %v1889 = vadd.f32 0.0, %v1888
      %v1890 = vpop.f32.mrb[0].mxu0
      %v1891 = vpop.f32.mrb[0].mxu0
      %v1892 = vadd.f32 0.0, %v1891
      %v1893 = vpop.f32.mrb[0].mxu0
      %1894 = vmatprep.mubr.bf16.mxu0 0
      %1895 = vmatmul.mubr.bf16.gmra.mrb[0].mxu0 %v1651
      %v1896 = vpop.f32.mrb[0].mxu0
      %v1897 = vadd.f32 0.0, %v1896
      %v1898 = vpop.f32.mrb[0].mxu0
      %v1899 = vpop.f32.mrb[0].mxu0
      %v1900 = vadd.f32 0.0, %v1899
      %v1901 = vpop.f32.mrb[0].mxu0
      %1902 = vmatprep.mubr.bf16.mxu0 0
      %1903 = vmatmul.mubr.bf16.gmra.mrb[0].mxu0 %v1652
      %v1904 = vpop.f32.mrb[0].mxu0
      %v1905 = vadd.f32 0.0, %v1904
      %v1906 = vpop.f32.mrb[0].mxu0
      %v1907 = vpop.f32.mrb[0].mxu0
      %v1908 = vadd.f32 0.0, %v1907
      %v1909 = vpop.f32.mrb[0].mxu0
      %1910 = vdwg.mxu0
      %v1927 = vunpack.c.l.b16 %v1669
      %v1928 = vunpack.c.l.b16 %v1670
      %v1929 = vunpack.c.l.b16 %v1671
      %v1930 = vunpack.c.l.b16 %v1672
      %v1931 = vunpack.c.l.b16 %v1673
      %v1932 = vunpack.c.l.b16 %v1674
      %v1933 = vunpack.c.l.b16 %v1675
      %v1934 = vunpack.c.l.b16 %v1676
      %v1935 = vunpack.c.l.b16 %v1677
      %v1936 = vunpack.c.l.b16 %v1678
      %v1937 = vunpack.c.l.b16 %v1679
      %v1938 = vunpack.c.l.b16 %v1680
      %v1939 = vunpack.c.l.b16 %v1681
      %v1940 = vunpack.c.l.b16 %v1682
      %v1941 = vunpack.c.l.b16 %v1683
      %v1942 = vunpack.c.l.b16 %v1684
      %v1943 = vpack.c.b16 %v1928, %v1927
      %v1944 = vpack.c.b16 %v1930, %v1929
      %v1945 = vpack.c.b16 %v1932, %v1931
      %v1946 = vpack.c.b16 %v1934, %v1933
      %v1947 = vpack.c.b16 %v1936, %v1935
      %v1948 = vpack.c.b16 %v1938, %v1937
      %v1949 = vpack.c.b16 %v1940, %v1939
      %v1950 = vpack.c.b16 %v1942, %v1941
      %1959 = vmatprep.subr.bf16.mxu0 0
      %1960 = vmatpush1.bf16.msra.mxu0 %v1943
      %1961 = vmatprep.subr.bf16.mxu0 0
      %1962 = vmatpush1.bf16.msra.mxu0 %v1944
      %1963 = vmatprep.subr.bf16.mxu0 0
      %1964 = vmatpush1.bf16.msra.mxu0 %v1945
      %1965 = vmatprep.subr.bf16.mxu0 0
      %1966 = vmatpush1.bf16.msra.mxu0 %v1946
      %1967 = vmatprep.subr.bf16.mxu0 0
      %1968 = vmatpush1.bf16.msra.mxu0 %v1947
      %1969 = vmatprep.subr.bf16.mxu0 0
      %1970 = vmatpush1.bf16.msra.mxu0 %v1948
      %1971 = vmatprep.subr.bf16.mxu0 0
      %1972 = vmatpush1.bf16.msra.mxu0 %v1949
      %1973 = vmatprep.subr.bf16.mxu0 0
      %1974 = vmatpush1.bf16.msra.mxu0 %v1950
      %1975 = vmatprep.subr.bf16.mxu0 0
      %1976 = vmatpush1.bf16.msra.mxu0 0
      %1977 = vmatprep.subr.bf16.mxu0 0
      %1978 = vmatpush1.bf16.msra.mxu0 0
      %1979 = vmatprep.subr.bf16.mxu0 0
      %1980 = vmatpush1.bf16.msra.mxu0 0
      %1981 = vmatprep.subr.bf16.mxu0 0
      %1982 = vmatpush1.bf16.msra.mxu0 0
      %1983 = vmatprep.subr.bf16.mxu0 0
      %1984 = vmatpush1.bf16.msra.mxu0 0
      %1985 = vmatprep.subr.bf16.mxu0 0
      %1986 = vmatpush1.bf16.msra.mxu0 0
      %1987 = vmatprep.subr.bf16.mxu0 0
      %1988 = vmatpush1.bf16.msra.mxu0 0
      %1989 = vmatprep.subr.bf16.mxu0 0
      %1990 = vmatpush1.bf16.msra.mxu0 0
      %1991 = vmatprep.mubr.bf16.mxu0 0
      %1992 = vmatmul.mubr.bf16.gmra.mrb[0].mxu0 %v1636
      %v1993 = vpop.f32.mrb[0].mxu0
      %v1994 = vadd.f32 %v1785, %v1993
      %v1995 = vpop.f32.mrb[0].mxu0
      %v1996 = vpop.f32.mrb[0].mxu0
      %v1997 = vadd.f32 %v1788, %v1996
      %v1998 = vpop.f32.mrb[0].mxu0
      %1999 = vmatprep.mubr.bf16.mxu0 0
      %2000 = vmatmul.mubr.bf16.gmra.mrb[0].mxu0 %v1637
      %v2001 = vpop.f32.mrb[0].mxu0
      %v2002 = vadd.f32 %v1793, %v2001
      %v2003 = vpop.f32.mrb[0].mxu0
      %v2004 = vpop.f32.mrb[0].mxu0
      %v2005 = vadd.f32 %v1796, %v2004
      %v2006 = vpop.f32.mrb[0].mxu0
      %2007 = vmatprep.mubr.bf16.mxu0 0
      %2008 = vmatmul.mubr.bf16.gmra.mrb[0].mxu0 %v1638
      %v2009 = vpop.f32.mrb[0].mxu0
      %v2010 = vadd.f32 %v1801, %v2009
      %v2011 = vpop.f32.mrb[0].mxu0
      %v2012 = vpop.f32.mrb[0].mxu0
      %v2013 = vadd.f32 %v1804, %v2012
      %v2014 = vpop.f32.mrb[0].mxu0
      %2015 = vmatprep.mubr.bf16.mxu0 0
      %2016 = vmatmul.mubr.bf16.gmra.mrb[0].mxu0 %v1639
      %v2017 = vpop.f32.mrb[0].mxu0
      %v2018 = vadd.f32 %v1809, %v2017
      %v2019 = vpop.f32.mrb[0].mxu0
      %v2020 = vpop.f32.mrb[0].mxu0
      %v2021 = vadd.f32 %v1812, %v2020
      %v2022 = vpop.f32.mrb[0].mxu0
      %2023 = vmatprep.mubr.bf16.mxu0 0
      %2024 = vmatmul.mubr.bf16.gmra.mrb[0].mxu0 %v1640
      %v2025 = vpop.f32.mrb[0].mxu0
      %v2026 = vadd.f32 %v1817, %v2025
      %v2027 = vpop.f32.mrb[0].mxu0
      %v2028 = vpop.f32.mrb[0].mxu0
      %v2029 = vadd.f32 %v1820, %v2028
      %v2030 = vpop.f32.mrb[0].mxu0
      %2031 = vmatprep.mubr.bf16.mxu0 0
      %2032 = vmatmul.mubr.bf16.gmra.mrb[0].mxu0 %v1641
      %v2033 = vpop.f32.mrb[0].mxu0
      %v2034 = vadd.f32 %v1825, %v2033
      %v2035 = vpop.f32.mrb[0].mxu0
      %v2036 = vpop.f32.mrb[0].mxu0
      %v2037 = vadd.f32 %v1828, %v2036
      %v2038 = vpop.f32.mrb[0].mxu0
      %2039 = vmatprep.mubr.bf16.mxu0 0
      %2040 = vmatmul.mubr.bf16.gmra.mrb[0].mxu0 %v1642
      %v2041 = vpop.f32.mrb[0].mxu0
      %v2042 = vadd.f32 %v1833, %v2041
      %v2043 = vpop.f32.mrb[0].mxu0
      %v2044 = vpop.f32.mrb[0].mxu0
      %v2045 = vadd.f32 %v1836, %v2044
      %v2046 = vpop.f32.mrb[0].mxu0
      %2047 = vmatprep.mubr.bf16.mxu0 0
      %2048 = vmatmul.mubr.bf16.gmra.mrb[0].mxu0 %v1643
      %v2049 = vpop.f32.mrb[0].mxu0
      %v2050 = vadd.f32 %v1841, %v2049
      %v2051 = vpop.f32.mrb[0].mxu0
      %v2052 = vpop.f32.mrb[0].mxu0
      %v2053 = vadd.f32 %v1844, %v2052
      %v2054 = vpop.f32.mrb[0].mxu0
      %2055 = vmatprep.mubr.bf16.mxu0 0
      %2056 = vmatmul.mubr.bf16.gmra.mrb[0].mxu0 %v1644
      %v2057 = vpop.f32.mrb[0].mxu0
      %v2058 = vadd.f32 %v1849, %v2057
      %v2059 = vpop.f32.mrb[0].mxu0
      %v2060 = vpop.f32.mrb[0].mxu0
      %v2061 = vadd.f32 %v1852, %v2060
      %v2062 = vpop.f32.mrb[0].mxu0
      %2063 = vmatprep.mubr.bf16.mxu0 0
      %2064 = vmatmul.mubr.bf16.gmra.mrb[0].mxu0 %v1645
      %v2065 = vpop.f32.mrb[0].mxu0
      %v2066 = vadd.f32 %v1857, %v2065
      %v2067 = vpop.f32.mrb[0].mxu0
      %v2068 = vpop.f32.mrb[0].mxu0
      %v2069 = vadd.f32 %v1860, %v2068
      %v2070 = vpop.f32.mrb[0].mxu0
      %2071 = vmatprep.mubr.bf16.mxu0 0
      %2072 = vmatmul.mubr.bf16.gmra.mrb[0].mxu0 %v1646
      %v2073 = vpop.f32.mrb[0].mxu0
      %v2074 = vadd.f32 %v1865, %v2073
      %v2075 = vpop.f32.mrb[0].mxu0
      %v2076 = vpop.f32.mrb[0].mxu0
      %v2077 = vadd.f32 %v1868, %v2076
      %v2078 = vpop.f32.mrb[0].mxu0
      %2079 = vmatprep.mubr.bf16.mxu0 0
      %2080 = vmatmul.mubr.bf16.gmra.mrb[0].mxu0 %v1647
      %v2081 = vpop.f32.mrb[0].mxu0
      %v2082 = vadd.f32 %v1873, %v2081
      %v2083 = vpop.f32.mrb[0].mxu0
      %v2084 = vpop.f32.mrb[0].mxu0
      %v2085 = vadd.f32 %v1876, %v2084
      %v2086 = vpop.f32.mrb[0].mxu0
      %2087 = vmatprep.mubr.bf16.mxu0 0
      %2088 = vmatmul.mubr.bf16.gmra.mrb[0].mxu0 %v1648
      %v2089 = vpop.f32.mrb[0].mxu0
      %v2090 = vadd.f32 %v1881, %v2089
      %v2091 = vpop.f32.mrb[0].mxu0
      %v2092 = vpop.f32.mrb[0].mxu0
      %v2093 = vadd.f32 %v1884, %v2092
      %v2094 = vpop.f32.mrb[0].mxu0
      %2095 = vmatprep.mubr.bf16.mxu0 0
      %2096 = vmatmul.mubr.bf16.gmra.mrb[0].mxu0 %v1649
      %v2097 = vpop.f32.mrb[0].mxu0
      %v2098 = vadd.f32 %v1889, %v2097
      %v2099 = vpop.f32.mrb[0].mxu0
      %v2100 = vpop.f32.mrb[0].mxu0
      %v2101 = vadd.f32 %v1892, %v2100
      %v2102 = vpop.f32.mrb[0].mxu0
      %2103 = vmatprep.mubr.bf16.mxu0 0
      %2104 = vmatmul.mubr.bf16.gmra.mrb[0].mxu0 %v1650
      %v2105 = vpop.f32.mrb[0].mxu0
      %v2106 = vadd.f32 %v1897, %v2105
      %v2107 = vpop.f32.mrb[0].mxu0
      %v2108 = vpop.f32.mrb[0].mxu0
      %v2109 = vadd.f32 %v1900, %v2108
      %v2110 = vpop.f32.mrb[0].mxu0
      %2111 = vmatprep.mubr.bf16.mxu0 0
      %2112 = vmatmul.mubr.bf16.gmra.mrb[0].mxu0 %v1651
      %v2113 = vpop.f32.mrb[0].mxu0
      %v2114 = vadd.f32 %v1905, %v2113
      %v2115 = vpop.f32.mrb[0].mxu0
      %v2116 = vpop.f32.mrb[0].mxu0
      %v2117 = vadd.f32 %v1908, %v2116
      %v2118 = vpop.f32.mrb[0].mxu0
      %2119 = vdwg.mxu0
      %s2120 = scalar_lea.vmem %s3, 128
      %v2121 = vld [vmem:[%s2120] sm:$0xf]
      %v2122 = vld [vmem:[%s2120 + $0x4] sm:$0xf]
      %v2123 = vld [vmem:[%s2120 + $0x8] sm:$0xf]
      %v2124 = vld [vmem:[%s2120 + $0xc] sm:$0xf]
      %v2125 = vld [vmem:[%s2120 + $0x10] sm:$0xf]
      %v2126 = vld [vmem:[%s2120 + $0x14] sm:$0xf]
      %v2127 = vld [vmem:[%s2120 + $0x18] sm:$0xf]
      %v2128 = vld [vmem:[%s2120 + $0x1c] sm:$0xf]
      %v2129 = vld [vmem:[%s2120 + $0x20] sm:$0xf]
      %v2130 = vld [vmem:[%s2120 + $0x24] sm:$0xf]
      %v2131 = vld [vmem:[%s2120 + $0x28] sm:$0xf]
      %v2132 = vld [vmem:[%s2120 + $0x2c] sm:$0xf]
      %v2133 = vld [vmem:[%s2120 + $0x30] sm:$0xf]
      %v2134 = vld [vmem:[%s2120 + $0x34] sm:$0xf]
      %v2135 = vld [vmem:[%s2120 + $0x38] sm:$0xf]
      %v2136 = vld [vmem:[%s2120 + $0x3c] sm:$0xf]
      %v2153 = vunpack.c.l.b16 %v2121
      %v2154 = vunpack.c.l.b16 %v2122
      %v2155 = vunpack.c.l.b16 %v2123
      %v2156 = vunpack.c.l.b16 %v2124
      %v2157 = vunpack.c.l.b16 %v2125
      %v2158 = vunpack.c.l.b16 %v2126
      %v2159 = vunpack.c.l.b16 %v2127
      %v2160 = vunpack.c.l.b16 %v2128
      %v2161 = vunpack.c.l.b16 %v2129
      %v2162 = vunpack.c.l.b16 %v2130
      %v2163 = vunpack.c.l.b16 %v2131
      %v2164 = vunpack.c.l.b16 %v2132
      %v2165 = vunpack.c.l.b16 %v2133
      %v2166 = vunpack.c.l.b16 %v2134
      %v2167 = vunpack.c.l.b16 %v2135
      %v2168 = vunpack.c.l.b16 %v2136
      %v2169 = vpack.c.b16 %v2154, %v2153
      %v2170 = vpack.c.b16 %v2156, %v2155
      %v2171 = vpack.c.b16 %v2158, %v2157
      %v2172 = vpack.c.b16 %v2160, %v2159
      %v2173 = vpack.c.b16 %v2162, %v2161
      %v2174 = vpack.c.b16 %v2164, %v2163
      %v2175 = vpack.c.b16 %v2166, %v2165
      %v2176 = vpack.c.b16 %v2168, %v2167
      %2185 = vmatprep.subr.bf16.mxu0 0
      %2186 = vmatpush1.bf16.msra.mxu0 %v2169
      %2187 = vmatprep.subr.bf16.mxu0 0
      %2188 = vmatpush1.bf16.msra.mxu0 %v2170
      %2189 = vmatprep.subr.bf16.mxu0 0
      %2190 = vmatpush1.bf16.msra.mxu0 %v2171
      %2191 = vmatprep.subr.bf16.mxu0 0
      %2192 = vmatpush1.bf16.msra.mxu0 %v2172
      %2193 = vmatprep.subr.bf16.mxu0 0
      %2194 = vmatpush1.bf16.msra.mxu0 %v2173
      %2195 = vmatprep.subr.bf16.mxu0 0
      %2196 = vmatpush1.bf16.msra.mxu0 %v2174
      %2197 = vmatprep.subr.bf16.mxu0 0
      %2198 = vmatpush1.bf16.msra.mxu0 %v2175
      %2199 = vmatprep.subr.bf16.mxu0 0
      %2200 = vmatpush1.bf16.msra.mxu0 %v2176
      %2201 = vmatprep.subr.bf16.mxu0 0
      %2202 = vmatpush1.bf16.msra.mxu0 0
      %2203 = vmatprep.subr.bf16.mxu0 0
      %2204 = vmatpush1.bf16.msra.mxu0 0
      %2205 = vmatprep.subr.bf16.mxu0 0
      %2206 = vmatpush1.bf16.msra.mxu0 0
      %2207 = vmatprep.subr.bf16.mxu0 0
      %2208 = vmatpush1.bf16.msra.mxu0 0
      %2209 = vmatprep.subr.bf16.mxu0 0
      %2210 = vmatpush1.bf16.msra.mxu0 0
      %2211 = vmatprep.subr.bf16.mxu0 0
      %2212 = vmatpush1.bf16.msra.mxu0 0
      %2213 = vmatprep.subr.bf16.mxu0 0
      %2214 = vmatpush1.bf16.msra.mxu0 0
      %2215 = vmatprep.subr.bf16.mxu0 0
      %2216 = vmatpush1.bf16.msra.mxu0 0
      %2217 = vmatprep.mubr.bf16.mxu0 0
      %2218 = vmatmul.mubr.bf16.gmra.mrb[0].mxu0 %v1653
      %v2219 = vpop.f32.mrb[0].mxu0
      %v2220 = vadd.f32 0.0, %v2219
      %v2221 = vpop.f32.mrb[0].mxu0
      %v2222 = vpop.f32.mrb[0].mxu0
      %v2223 = vadd.f32 0.0, %v2222
      %v2224 = vpop.f32.mrb[0].mxu0
      %2225 = vmatprep.mubr.bf16.mxu0 0
      %2226 = vmatmul.mubr.bf16.gmra.mrb[0].mxu0 %v1654
      %v2227 = vpop.f32.mrb[0].mxu0
      %v2228 = vadd.f32 0.0, %v2227
      %v2229 = vpop.f32.mrb[0].mxu0
      %v2230 = vpop.f32.mrb[0].mxu0
      %v2231 = vadd.f32 0.0, %v2230
      %v2232 = vpop.f32.mrb[0].mxu0
      %2233 = vmatprep.mubr.bf16.mxu0 0
      %2234 = vmatmul.mubr.bf16.gmra.mrb[0].mxu0 %v1655
      %v2235 = vpop.f32.mrb[0].mxu0
      %v2236 = vadd.f32 0.0, %v2235
      %v2237 = vpop.f32.mrb[0].mxu0
      %v2238 = vpop.f32.mrb[0].mxu0
      %v2239 = vadd.f32 0.0, %v2238
      %v2240 = vpop.f32.mrb[0].mxu0
      %2241 = vmatprep.mubr.bf16.mxu0 0
      %2242 = vmatmul.mubr.bf16.gmra.mrb[0].mxu0 %v1656
      %v2243 = vpop.f32.mrb[0].mxu0
      %v2244 = vadd.f32 0.0, %v2243
      %v2245 = vpop.f32.mrb[0].mxu0
      %v2246 = vpop.f32.mrb[0].mxu0
      %v2247 = vadd.f32 0.0, %v2246
      %v2248 = vpop.f32.mrb[0].mxu0
      %2249 = vmatprep.mubr.bf16.mxu0 0
      %2250 = vmatmul.mubr.bf16.gmra.mrb[0].mxu0 %v1657
      %v2251 = vpop.f32.mrb[0].mxu0
      %v2252 = vadd.f32 0.0, %v2251
      %v2253 = vpop.f32.mrb[0].mxu0
      %v2254 = vpop.f32.mrb[0].mxu0
      %v2255 = vadd.f32 0.0, %v2254
      %v2256 = vpop.f32.mrb[0].mxu0
      %2257 = vmatprep.mubr.bf16.mxu0 0
      %2258 = vmatmul.mubr.bf16.gmra.mrb[0].mxu0 %v1658
      %v2259 = vpop.f32.mrb[0].mxu0
      %v2260 = vadd.f32 0.0, %v2259
      %v2261 = vpop.f32.mrb[0].mxu0
      %v2262 = vpop.f32.mrb[0].mxu0
      %v2263 = vadd.f32 0.0, %v2262
      %v2264 = vpop.f32.mrb[0].mxu0
      %2265 = vmatprep.mubr.bf16.mxu0 0
      %2266 = vmatmul.mubr.bf16.gmra.mrb[0].mxu0 %v1659
      %v2267 = vpop.f32.mrb[0].mxu0
      %v2268 = vadd.f32 0.0, %v2267
      %v2269 = vpop.f32.mrb[0].mxu0
      %v2270 = vpop.f32.mrb[0].mxu0
      %v2271 = vadd.f32 0.0, %v2270
      %v2272 = vpop.f32.mrb[0].mxu0
      %2273 = vmatprep.mubr.bf16.mxu0 0
      %2274 = vmatmul.mubr.bf16.gmra.mrb[0].mxu0 %v1660
      %v2275 = vpop.f32.mrb[0].mxu0
      %v2276 = vadd.f32 0.0, %v2275
      %v2277 = vpop.f32.mrb[0].mxu0
      %v2278 = vpop.f32.mrb[0].mxu0
      %v2279 = vadd.f32 0.0, %v2278
      %v2280 = vpop.f32.mrb[0].mxu0
      %2281 = vmatprep.mubr.bf16.mxu0 0
      %2282 = vmatmul.mubr.bf16.gmra.mrb[0].mxu0 %v1661
      %v2283 = vpop.f32.mrb[0].mxu0
      %v2284 = vadd.f32 0.0, %v2283
      %v2285 = vpop.f32.mrb[0].mxu0
      %v2286 = vpop.f32.mrb[0].mxu0
      %v2287 = vadd.f32 0.0, %v2286
      %v2288 = vpop.f32.mrb[0].mxu0
      %2289 = vmatprep.mubr.bf16.mxu0 0
      %2290 = vmatmul.mubr.bf16.gmra.mrb[0].mxu0 %v1662
      %v2291 = vpop.f32.mrb[0].mxu0
      %v2292 = vadd.f32 0.0, %v2291
      %v2293 = vpop.f32.mrb[0].mxu0
      %v2294 = vpop.f32.mrb[0].mxu0
      %v2295 = vadd.f32 0.0, %v2294
      %v2296 = vpop.f32.mrb[0].mxu0
      %2297 = vmatprep.mubr.bf16.mxu0 0
      %2298 = vmatmul.mubr.bf16.gmra.mrb[0].mxu0 %v1663
      %v2299 = vpop.f32.mrb[0].mxu0
      %v2300 = vadd.f32 0.0, %v2299
      %v2301 = vpop.f32.mrb[0].mxu0
      %v2302 = vpop.f32.mrb[0].mxu0
      %v2303 = vadd.f32 0.0, %v2302
      %v2304 = vpop.f32.mrb[0].mxu0
      %2305 = vmatprep.mubr.bf16.mxu0 0
      %2306 = vmatmul.mubr.bf16.gmra.mrb[0].mxu0 %v1664
      %v2307 = vpop.f32.mrb[0].mxu0
      %v2308 = vadd.f32 0.0, %v2307
      %v2309 = vpop.f32.mrb[0].mxu0
      %v2310 = vpop.f32.mrb[0].mxu0
      %v2311 = vadd.f32 0.0, %v2310
      %v2312 = vpop.f32.mrb[0].mxu0
      %2313 = vmatprep.mubr.bf16.mxu0 0
      %2314 = vmatmul.mubr.bf16.gmra.mrb[0].mxu0 %v1665
      %v2315 = vpop.f32.mrb[0].mxu0
      %v2316 = vadd.f32 0.0, %v2315
      %v2317 = vpop.f32.mrb[0].mxu0
      %v2318 = vpop.f32.mrb[0].mxu0
      %v2319 = vadd.f32 0.0, %v2318
      %v2320 = vpop.f32.mrb[0].mxu0
      %2321 = vmatprep.mubr.bf16.mxu0 0
      %2322 = vmatmul.mubr.bf16.gmra.mrb[0].mxu0 %v1666
      %v2323 = vpop.f32.mrb[0].mxu0
      %v2324 = vadd.f32 0.0, %v2323
      %v2325 = vpop.f32.mrb[0].mxu0
      %v2326 = vpop.f32.mrb[0].mxu0
      %v2327 = vadd.f32 0.0, %v2326
      %v2328 = vpop.f32.mrb[0].mxu0
      %2329 = vmatprep.mubr.bf16.mxu0 0
      %2330 = vmatmul.mubr.bf16.gmra.mrb[0].mxu0 %v1667
      %v2331 = vpop.f32.mrb[0].mxu0
      %v2332 = vadd.f32 0.0, %v2331
      %v2333 = vpop.f32.mrb[0].mxu0
      %v2334 = vpop.f32.mrb[0].mxu0
      %v2335 = vadd.f32 0.0, %v2334
      %v2336 = vpop.f32.mrb[0].mxu0
      %2337 = vmatprep.mubr.bf16.mxu0 0
      %2338 = vmatmul.mubr.bf16.gmra.mrb[0].mxu0 %v1668
      %v2339 = vpop.f32.mrb[0].mxu0
      %v2340 = vadd.f32 0.0, %v2339
      %v2341 = vpop.f32.mrb[0].mxu0
      %v2342 = vpop.f32.mrb[0].mxu0
      %v2343 = vadd.f32 0.0, %v2342
      %v2344 = vpop.f32.mrb[0].mxu0
      %2345 = vdwg.mxu0
      %v2346 = vadd.f32 %v1994, %v2220
      %v2347 = vadd.f32 %v1997, %v2223
      %v2348 = vadd.f32 %v2002, %v2228
      %v2349 = vadd.f32 %v2005, %v2231
      %v2350 = vadd.f32 %v2010, %v2236
      %v2351 = vadd.f32 %v2013, %v2239
      %v2352 = vadd.f32 %v2018, %v2244
      %v2353 = vadd.f32 %v2021, %v2247
      %v2354 = vadd.f32 %v2026, %v2252
      %v2355 = vadd.f32 %v2029, %v2255
      %v2356 = vadd.f32 %v2034, %v2260
      %v2357 = vadd.f32 %v2037, %v2263
      %v2358 = vadd.f32 %v2042, %v2268
      %v2359 = vadd.f32 %v2045, %v2271
      %v2360 = vadd.f32 %v2050, %v2276
      %v2361 = vadd.f32 %v2053, %v2279
      %v2362 = vadd.f32 %v2058, %v2284
      %v2363 = vadd.f32 %v2061, %v2287
      %v2364 = vadd.f32 %v2066, %v2292
      %v2365 = vadd.f32 %v2069, %v2295
      %v2366 = vadd.f32 %v2074, %v2300
      %v2367 = vadd.f32 %v2077, %v2303
      %v2368 = vadd.f32 %v2082, %v2308
      %v2369 = vadd.f32 %v2085, %v2311
      %v2370 = vadd.f32 %v2090, %v2316
      %v2371 = vadd.f32 %v2093, %v2319
      %v2372 = vadd.f32 %v2098, %v2324
      %v2373 = vadd.f32 %v2101, %v2327
      %v2374 = vadd.f32 %v2106, %v2332
      %v2375 = vadd.f32 %v2109, %v2335
      %v2376 = vadd.f32 %v2114, %v2340
      %v2377 = vadd.f32 %v2117, %v2343
      %v2378 = vld [vmem:[%s4] sm:$0x1]
      %v2380 = vlaneseq
      %v2381 = vshrl.u32 %v2380, 7
      %v2382 = vsub.s32 0, %v2381
      %v2383 = vrot.slane %v2378, %v2382
      %v2385 = vadd.f32 %v2346, %v2383
      %v2386 = vadd.f32 %v2347, %v2383
      %v2387 = vadd.f32 %v2348, %v2383
      %v2388 = vadd.f32 %v2349, %v2383
      %v2389 = vadd.f32 %v2350, %v2383
      %v2390 = vadd.f32 %v2351, %v2383
      %v2391 = vadd.f32 %v2352, %v2383
      %v2392 = vadd.f32 %v2353, %v2383
      %v2393 = vadd.f32 %v2354, %v2383
      %v2394 = vadd.f32 %v2355, %v2383
      %v2395 = vadd.f32 %v2356, %v2383
      %v2396 = vadd.f32 %v2357, %v2383
      %v2397 = vadd.f32 %v2358, %v2383
      %v2398 = vadd.f32 %v2359, %v2383
      %v2399 = vadd.f32 %v2360, %v2383
      %v2400 = vadd.f32 %v2361, %v2383
      %v2401 = vadd.f32 %v2362, %v2383
      %v2402 = vadd.f32 %v2363, %v2383
      %v2403 = vadd.f32 %v2364, %v2383
      %v2404 = vadd.f32 %v2365, %v2383
      %v2405 = vadd.f32 %v2366, %v2383
      %v2406 = vadd.f32 %v2367, %v2383
      %v2407 = vadd.f32 %v2368, %v2383
      %v2408 = vadd.f32 %v2369, %v2383
      %v2409 = vadd.f32 %v2370, %v2383
      %v2410 = vadd.f32 %v2371, %v2383
      %v2411 = vadd.f32 %v2372, %v2383
      %v2412 = vadd.f32 %v2373, %v2383
      %v2413 = vadd.f32 %v2374, %v2383
      %v2414 = vadd.f32 %v2375, %v2383
      %v2415 = vadd.f32 %v2376, %v2383
      %v2416 = vadd.f32 %v2377, %v2383
      %v2417 = vmax.f32 %v2385, 0.0
      %v2418 = vmax.f32 %v2386, 0.0
      %v2419 = vmax.f32 %v2387, 0.0
      %v2420 = vmax.f32 %v2388, 0.0
      %v2421 = vmax.f32 %v2389, 0.0
      %v2422 = vmax.f32 %v2390, 0.0
      %v2423 = vmax.f32 %v2391, 0.0
      %v2424 = vmax.f32 %v2392, 0.0
      %v2425 = vmax.f32 %v2393, 0.0
      %v2426 = vmax.f32 %v2394, 0.0
      %v2427 = vmax.f32 %v2395, 0.0
      %v2428 = vmax.f32 %v2396, 0.0
      %v2429 = vmax.f32 %v2397, 0.0
      %v2430 = vmax.f32 %v2398, 0.0
      %v2431 = vmax.f32 %v2399, 0.0
      %v2432 = vmax.f32 %v2400, 0.0
      %v2433 = vmax.f32 %v2401, 0.0
      %v2434 = vmax.f32 %v2402, 0.0
      %v2435 = vmax.f32 %v2403, 0.0
      %v2436 = vmax.f32 %v2404, 0.0
      %v2437 = vmax.f32 %v2405, 0.0
      %v2438 = vmax.f32 %v2406, 0.0
      %v2439 = vmax.f32 %v2407, 0.0
      %v2440 = vmax.f32 %v2408, 0.0
      %v2441 = vmax.f32 %v2409, 0.0
      %v2442 = vmax.f32 %v2410, 0.0
      %v2443 = vmax.f32 %v2411, 0.0
      %v2444 = vmax.f32 %v2412, 0.0
      %v2445 = vmax.f32 %v2413, 0.0
      %v2446 = vmax.f32 %v2414, 0.0
      %v2447 = vmax.f32 %v2415, 0.0
      %v2448 = vmax.f32 %v2416, 0.0
      %v2449 = vpack.c.bf16 %v2418, %v2417
      %v2450 = vpack.c.bf16 %v2420, %v2419
      %v2451 = vpack.c.bf16 %v2422, %v2421
      %v2452 = vpack.c.bf16 %v2424, %v2423
      %v2453 = vpack.c.bf16 %v2426, %v2425
      %v2454 = vpack.c.bf16 %v2428, %v2427
      %v2455 = vpack.c.bf16 %v2430, %v2429
      %v2456 = vpack.c.bf16 %v2432, %v2431
      %v2457 = vpack.c.bf16 %v2434, %v2433
      %v2458 = vpack.c.bf16 %v2436, %v2435
      %v2459 = vpack.c.bf16 %v2438, %v2437
      %v2460 = vpack.c.bf16 %v2440, %v2439
      %v2461 = vpack.c.bf16 %v2442, %v2441
      %v2462 = vpack.c.bf16 %v2444, %v2443
      %v2463 = vpack.c.bf16 %v2446, %v2445
      %v2464 = vpack.c.bf16 %v2448, %v2447
      %2465 = vst [vmem:[#allocation3 + $0x8] sm:$0xff] %v2449
      %2466 = vst [vmem:[#allocation3 + $0x10] sm:$0xff] %v2450
      %2467 = vst [vmem:[#allocation3 + $0x18] sm:$0xff] %v2451
      %2468 = vst [vmem:[#allocation3 + $0x20] sm:$0xff] %v2452
      %2469 = vst [vmem:[#allocation3 + $0x28] sm:$0xff] %v2453
      %2470 = vst [vmem:[#allocation3 + $0x30] sm:$0xff] %v2454
      %2471 = vst [vmem:[#allocation3 + $0x38] sm:$0xff] %v2455
      %2472 = vst [vmem:[#allocation3 + $0x40] sm:$0xff] %v2456
      %2473 = vst [vmem:[#allocation3 + $0x48] sm:$0xff] %v2457
      %2474 = vst [vmem:[#allocation3 + $0x50] sm:$0xff] %v2458
      %2475 = vst [vmem:[#allocation3 + $0x58] sm:$0xff] %v2459
      %2476 = vst [vmem:[#allocation3 + $0x60] sm:$0xff] %v2460
      %2477 = vst [vmem:[#allocation3 + $0x68] sm:$0xff] %v2461
      %2478 = vst [vmem:[#allocation3 + $0x70] sm:$0xff] %v2462
      %2479 = vst [vmem:[#allocation3 + $0x78] sm:$0xff] %v2463
      %2480 = vst [vmem:[#allocation3 + $0x80] sm:$0xff] %v2464
      %v2481 = vld [vmem:[#allocation2 + $0x8] sm:$0xff]
      %v2482 = vld [vmem:[#allocation2 + $0x10] sm:$0xff]
      %v2483 = vld [vmem:[#allocation2 + $0x18] sm:$0xff]
      %v2484 = vld [vmem:[#allocation2 + $0x20] sm:$0xff]
      %v2485 = vld [vmem:[#allocation2 + $0x28] sm:$0xff]
      %v2486 = vld [vmem:[#allocation2 + $0x30] sm:$0xff]
      %v2487 = vld [vmem:[#allocation2 + $0x38] sm:$0xff]
      %v2488 = vld [vmem:[#allocation2 + $0x40] sm:$0xff]
      %v2489 = vld [vmem:[#allocation2 + $0x48] sm:$0xff]
      %v2490 = vld [vmem:[#allocation2 + $0x50] sm:$0xff]
      %v2491 = vld [vmem:[#allocation2 + $0x58] sm:$0xff]
      %v2492 = vld [vmem:[#allocation2 + $0x60] sm:$0xff]
      %v2493 = vld [vmem:[#allocation2 + $0x68] sm:$0xff]
      %v2494 = vld [vmem:[#allocation2 + $0x70] sm:$0xff]
      %v2495 = vld [vmem:[#allocation2 + $0x78] sm:$0xff]
      %v2496 = vld [vmem:[#allocation2 + $0x80] sm:$0xff]
      %v2497 = vld [vmem:[#allocation3] sm:$0xff]
      %v2498 = vld [vmem:[#allocation3 + $0x8] sm:$0xff]
      %v2499 = vld [vmem:[#allocation3 + $0x10] sm:$0xff]
      %v2500 = vld [vmem:[#allocation3 + $0x18] sm:$0xff]
      %v2501 = vld [vmem:[#allocation3 + $0x20] sm:$0xff]
      %v2502 = vld [vmem:[#allocation3 + $0x28] sm:$0xff]
      %v2503 = vld [vmem:[#allocation3 + $0x30] sm:$0xff]
      %v2504 = vld [vmem:[#allocation3 + $0x38] sm:$0xff]
      %v2505 = vld [vmem:[#allocation3 + $0x40] sm:$0xff]
      %v2506 = vld [vmem:[#allocation3 + $0x48] sm:$0xff]
      %v2507 = vld [vmem:[#allocation3 + $0x50] sm:$0xff]
      %v2508 = vld [vmem:[#allocation3 + $0x58] sm:$0xff]
      %v2509 = vld [vmem:[#allocation3 + $0x60] sm:$0xff]
      %v2510 = vld [vmem:[#allocation3 + $0x68] sm:$0xff]
      %v2511 = vld [vmem:[#allocation3 + $0x70] sm:$0xff]
      %v2512 = vld [vmem:[#allocation3 + $0x78] sm:$0xff]
      %v2513 = vld [vmem:[#allocation3 + $0x80] sm:$0xff]
      %v2514 = vld [vmem:[#allocation3 + $0x10] sm:$0xff]
      %v2515 = vld [vmem:[#allocation3 + $0x18] sm:$0xff]
      %v2516 = vld [vmem:[#allocation3 + $0x20] sm:$0xff]
      %v2517 = vld [vmem:[#allocation3 + $0x28] sm:$0xff]
      %v2518 = vld [vmem:[#allocation3 + $0x30] sm:$0xff]
      %v2519 = vld [vmem:[#allocation3 + $0x38] sm:$0xff]
      %v2520 = vld [vmem:[#allocation3 + $0x40] sm:$0xff]
      %v2521 = vld [vmem:[#allocation3 + $0x48] sm:$0xff]
      %v2522 = vld [vmem:[#allocation3 + $0x50] sm:$0xff]
      %v2523 = vld [vmem:[#allocation3 + $0x58] sm:$0xff]
      %v2524 = vld [vmem:[#allocation3 + $0x60] sm:$0xff]
      %v2525 = vld [vmem:[#allocation3 + $0x68] sm:$0xff]
      %v2526 = vld [vmem:[#allocation3 + $0x70] sm:$0xff]
      %v2527 = vld [vmem:[#allocation3 + $0x78] sm:$0xff]
      %v2528 = vld [vmem:[#allocation3 + $0x80] sm:$0xff]
      %v2529 = vld [vmem:[#allocation3 + $0x88] sm:$0xff]
      %v2530 = vld [vmem:[%s5] sm:$0xf]
      %v2531 = vld [vmem:[%s5 + $0x4] sm:$0xf]
      %v2532 = vld [vmem:[%s5 + $0x8] sm:$0xf]
      %v2533 = vld [vmem:[%s5 + $0xc] sm:$0xf]
      %v2534 = vld [vmem:[%s5 + $0x10] sm:$0xf]
      %v2535 = vld [vmem:[%s5 + $0x14] sm:$0xf]
      %v2536 = vld [vmem:[%s5 + $0x18] sm:$0xf]
      %v2537 = vld [vmem:[%s5 + $0x1c] sm:$0xf]
      %v2538 = vld [vmem:[%s5 + $0x20] sm:$0xf]
      %v2539 = vld [vmem:[%s5 + $0x24] sm:$0xf]
      %v2540 = vld [vmem:[%s5 + $0x28] sm:$0xf]
      %v2541 = vld [vmem:[%s5 + $0x2c] sm:$0xf]
      %v2542 = vld [vmem:[%s5 + $0x30] sm:$0xf]
      %v2543 = vld [vmem:[%s5 + $0x34] sm:$0xf]
      %v2544 = vld [vmem:[%s5 + $0x38] sm:$0xf]
      %v2545 = vld [vmem:[%s5 + $0x3c] sm:$0xf]
      %s2546 = scalar_lea.vmem %s5, 64
      %v2547 = vld [vmem:[%s2546] sm:$0xf]
      %v2548 = vld [vmem:[%s2546 + $0x4] sm:$0xf]
      %v2549 = vld [vmem:[%s2546 + $0x8] sm:$0xf]
      %v2550 = vld [vmem:[%s2546 + $0xc] sm:$0xf]
      %v2551 = vld [vmem:[%s2546 + $0x10] sm:$0xf]
      %v2552 = vld [vmem:[%s2546 + $0x14] sm:$0xf]
      %v2553 = vld [vmem:[%s2546 + $0x18] sm:$0xf]
      %v2554 = vld [vmem:[%s2546 + $0x1c] sm:$0xf]
      %v2555 = vld [vmem:[%s2546 + $0x20] sm:$0xf]
      %v2556 = vld [vmem:[%s2546 + $0x24] sm:$0xf]
      %v2557 = vld [vmem:[%s2546 + $0x28] sm:$0xf]
      %v2558 = vld [vmem:[%s2546 + $0x2c] sm:$0xf]
      %v2559 = vld [vmem:[%s2546 + $0x30] sm:$0xf]
      %v2560 = vld [vmem:[%s2546 + $0x34] sm:$0xf]
      %v2561 = vld [vmem:[%s2546 + $0x38] sm:$0xf]
      %v2562 = vld [vmem:[%s2546 + $0x3c] sm:$0xf]
      %v2579 = vunpack.c.l.b16 %v2547
      %v2580 = vunpack.c.l.b16 %v2548
      %v2581 = vunpack.c.l.b16 %v2549
      %v2582 = vunpack.c.l.b16 %v2550
      %v2583 = vunpack.c.l.b16 %v2551
      %v2584 = vunpack.c.l.b16 %v2552
      %v2585 = vunpack.c.l.b16 %v2553
      %v2586 = vunpack.c.l.b16 %v2554
      %v2587 = vunpack.c.l.b16 %v2555
      %v2588 = vunpack.c.l.b16 %v2556
      %v2589 = vunpack.c.l.b16 %v2557
      %v2590 = vunpack.c.l.b16 %v2558
      %v2591 = vunpack.c.l.b16 %v2559
      %v2592 = vunpack.c.l.b16 %v2560
      %v2593 = vunpack.c.l.b16 %v2561
      %v2594 = vunpack.c.l.b16 %v2562
      %v2595 = vpack.c.b16 %v2580, %v2579
      %v2596 = vpack.c.b16 %v2582, %v2581
      %v2597 = vpack.c.b16 %v2584, %v2583
      %v2598 = vpack.c.b16 %v2586, %v2585
      %v2599 = vpack.c.b16 %v2588, %v2587
      %v2600 = vpack.c.b16 %v2590, %v2589
      %v2601 = vpack.c.b16 %v2592, %v2591
      %v2602 = vpack.c.b16 %v2594, %v2593
      %2611 = vmatprep.subr.bf16.mxu0 0
      %2612 = vmatpush1.bf16.msra.mxu0 %v2595
      %2613 = vmatprep.subr.bf16.mxu0 0
      %2614 = vmatpush1.bf16.msra.mxu0 %v2596
      %2615 = vmatprep.subr.bf16.mxu0 0
      %2616 = vmatpush1.bf16.msra.mxu0 %v2597
      %2617 = vmatprep.subr.bf16.mxu0 0
      %2618 = vmatpush1.bf16.msra.mxu0 %v2598
      %2619 = vmatprep.subr.bf16.mxu0 0
      %2620 = vmatpush1.bf16.msra.mxu0 %v2599
      %2621 = vmatprep.subr.bf16.mxu0 0
      %2622 = vmatpush1.bf16.msra.mxu0 %v2600
      %2623 = vmatprep.subr.bf16.mxu0 0
      %2624 = vmatpush1.bf16.msra.mxu0 %v2601
      %2625 = vmatprep.subr.bf16.mxu0 0
      %2626 = vmatpush1.bf16.msra.mxu0 %v2602
      %2627 = vmatprep.subr.bf16.mxu0 0
      %2628 = vmatpush1.bf16.msra.mxu0 0
      %2629 = vmatprep.subr.bf16.mxu0 0
      %2630 = vmatpush1.bf16.msra.mxu0 0
      %2631 = vmatprep.subr.bf16.mxu0 0
      %2632 = vmatpush1.bf16.msra.mxu0 0
      %2633 = vmatprep.subr.bf16.mxu0 0
      %2634 = vmatpush1.bf16.msra.mxu0 0
      %2635 = vmatprep.subr.bf16.mxu0 0
      %2636 = vmatpush1.bf16.msra.mxu0 0
      %2637 = vmatprep.subr.bf16.mxu0 0
      %2638 = vmatpush1.bf16.msra.mxu0 0
      %2639 = vmatprep.subr.bf16.mxu0 0
      %2640 = vmatpush1.bf16.msra.mxu0 0
      %2641 = vmatprep.subr.bf16.mxu0 0
      %2642 = vmatpush1.bf16.msra.mxu0 0
      %2643 = vmatprep.mubr.bf16.mxu0 0
      %2644 = vmatmul.mubr.bf16.gmra.mrb[0].mxu0 %v2498
      %v2645 = vpop.f32.mrb[0].mxu0
      %v2646 = vadd.f32 0.0, %v2645
      %v2647 = vpop.f32.mrb[0].mxu0
      %v2648 = vpop.f32.mrb[0].mxu0
      %v2649 = vadd.f32 0.0, %v2648
      %v2650 = vpop.f32.mrb[0].mxu0
      %2651 = vmatprep.mubr.bf16.mxu0 0
      %2652 = vmatmul.mubr.bf16.gmra.mrb[0].mxu0 %v2499
      %v2653 = vpop.f32.mrb[0].mxu0
      %v2654 = vadd.f32 0.0, %v2653
      %v2655 = vpop.f32.mrb[0].mxu0
      %v2656 = vpop.f32.mrb[0].mxu0
      %v2657 = vadd.f32 0.0, %v2656
      %v2658 = vpop.f32.mrb[0].mxu0
      %2659 = vmatprep.mubr.bf16.mxu0 0
      %2660 = vmatmul.mubr.bf16.gmra.mrb[0].mxu0 %v2500
      %v2661 = vpop.f32.mrb[0].mxu0
      %v2662 = vadd.f32 0.0, %v2661
      %v2663 = vpop.f32.mrb[0].mxu0
      %v2664 = vpop.f32.mrb[0].mxu0
      %v2665 = vadd.f32 0.0, %v2664
      %v2666 = vpop.f32.mrb[0].mxu0
      %2667 = vmatprep.mubr.bf16.mxu0 0
      %2668 = vmatmul.mubr.bf16.gmra.mrb[0].mxu0 %v2501
      %v2669 = vpop.f32.mrb[0].mxu0
      %v2670 = vadd.f32 0.0, %v2669
      %v2671 = vpop.f32.mrb[0].mxu0
      %v2672 = vpop.f32.mrb[0].mxu0
      %v2673 = vadd.f32 0.0, %v2672
      %v2674 = vpop.f32.mrb[0].mxu0
      %2675 = vmatprep.mubr.bf16.mxu0 0
      %2676 = vmatmul.mubr.bf16.gmra.mrb[0].mxu0 %v2502
      %v2677 = vpop.f32.mrb[0].mxu0
      %v2678 = vadd.f32 0.0, %v2677
      %v2679 = vpop.f32.mrb[0].mxu0
      %v2680 = vpop.f32.mrb[0].mxu0
      %v2681 = vadd.f32 0.0, %v2680
      %v2682 = vpop.f32.mrb[0].mxu0
      %2683 = vmatprep.mubr.bf16.mxu0 0
      %2684 = vmatmul.mubr.bf16.gmra.mrb[0].mxu0 %v2503
      %v2685 = vpop.f32.mrb[0].mxu0
      %v2686 = vadd.f32 0.0, %v2685
      %v2687 = vpop.f32.mrb[0].mxu0
      %v2688 = vpop.f32.mrb[0].mxu0
      %v2689 = vadd.f32 0.0, %v2688
      %v2690 = vpop.f32.mrb[0].mxu0
      %2691 = vmatprep.mubr.bf16.mxu0 0
      %2692 = vmatmul.mubr.bf16.gmra.mrb[0].mxu0 %v2504
      %v2693 = vpop.f32.mrb[0].mxu0
      %v2694 = vadd.f32 0.0, %v2693
      %v2695 = vpop.f32.mrb[0].mxu0
      %v2696 = vpop.f32.mrb[0].mxu0
      %v2697 = vadd.f32 0.0, %v2696
      %v2698 = vpop.f32.mrb[0].mxu0
      %2699 = vmatprep.mubr.bf16.mxu0 0
      %2700 = vmatmul.mubr.bf16.gmra.mrb[0].mxu0 %v2505
      %v2701 = vpop.f32.mrb[0].mxu0
      %v2702 = vadd.f32 0.0, %v2701
      %v2703 = vpop.f32.mrb[0].mxu0
      %v2704 = vpop.f32.mrb[0].mxu0
      %v2705 = vadd.f32 0.0, %v2704
      %v2706 = vpop.f32.mrb[0].mxu0
      %2707 = vmatprep.mubr.bf16.mxu0 0
      %2708 = vmatmul.mubr.bf16.gmra.mrb[0].mxu0 %v2506
      %v2709 = vpop.f32.mrb[0].mxu0
      %v2710 = vadd.f32 0.0, %v2709
      %v2711 = vpop.f32.mrb[0].mxu0
      %v2712 = vpop.f32.mrb[0].mxu0
      %v2713 = vadd.f32 0.0, %v2712
      %v2714 = vpop.f32.mrb[0].mxu0
      %2715 = vmatprep.mubr.bf16.mxu0 0
      %2716 = vmatmul.mubr.bf16.gmra.mrb[0].mxu0 %v2507
      %v2717 = vpop.f32.mrb[0].mxu0
      %v2718 = vadd.f32 0.0, %v2717
      %v2719 = vpop.f32.mrb[0].mxu0
      %v2720 = vpop.f32.mrb[0].mxu0
      %v2721 = vadd.f32 0.0, %v2720
      %v2722 = vpop.f32.mrb[0].mxu0
      %2723 = vmatprep.mubr.bf16.mxu0 0
      %2724 = vmatmul.mubr.bf16.gmra.mrb[0].mxu0 %v2508
      %v2725 = vpop.f32.mrb[0].mxu0
      %v2726 = vadd.f32 0.0, %v2725
      %v2727 = vpop.f32.mrb[0].mxu0
      %v2728 = vpop.f32.mrb[0].mxu0
      %v2729 = vadd.f32 0.0, %v2728
      %v2730 = vpop.f32.mrb[0].mxu0
      %2731 = vmatprep.mubr.bf16.mxu0 0
      %2732 = vmatmul.mubr.bf16.gmra.mrb[0].mxu0 %v2509
      %v2733 = vpop.f32.mrb[0].mxu0
      %v2734 = vadd.f32 0.0, %v2733
      %v2735 = vpop.f32.mrb[0].mxu0
      %v2736 = vpop.f32.mrb[0].mxu0
      %v2737 = vadd.f32 0.0, %v2736
      %v2738 = vpop.f32.mrb[0].mxu0
      %2739 = vmatprep.mubr.bf16.mxu0 0
      %2740 = vmatmul.mubr.bf16.gmra.mrb[0].mxu0 %v2510
      %v2741 = vpop.f32.mrb[0].mxu0
      %v2742 = vadd.f32 0.0, %v2741
      %v2743 = vpop.f32.mrb[0].mxu0
      %v2744 = vpop.f32.mrb[0].mxu0
      %v2745 = vadd.f32 0.0, %v2744
      %v2746 = vpop.f32.mrb[0].mxu0
      %2747 = vmatprep.mubr.bf16.mxu0 0
      %2748 = vmatmul.mubr.bf16.gmra.mrb[0].mxu0 %v2511
      %v2749 = vpop.f32.mrb[0].mxu0
      %v2750 = vadd.f32 0.0, %v2749
      %v2751 = vpop.f32.mrb[0].mxu0
      %v2752 = vpop.f32.mrb[0].mxu0
      %v2753 = vadd.f32 0.0, %v2752
      %v2754 = vpop.f32.mrb[0].mxu0
      %2755 = vmatprep.mubr.bf16.mxu0 0
      %2756 = vmatmul.mubr.bf16.gmra.mrb[0].mxu0 %v2512
      %v2757 = vpop.f32.mrb[0].mxu0
      %v2758 = vadd.f32 0.0, %v2757
      %v2759 = vpop.f32.mrb[0].mxu0
      %v2760 = vpop.f32.mrb[0].mxu0
      %v2761 = vadd.f32 0.0, %v2760
      %v2762 = vpop.f32.mrb[0].mxu0
      %2763 = vmatprep.mubr.bf16.mxu0 0
      %2764 = vmatmul.mubr.bf16.gmra.mrb[0].mxu0 %v2513
      %v2765 = vpop.f32.mrb[0].mxu0
      %v2766 = vadd.f32 0.0, %v2765
      %v2767 = vpop.f32.mrb[0].mxu0
      %v2768 = vpop.f32.mrb[0].mxu0
      %v2769 = vadd.f32 0.0, %v2768
      %v2770 = vpop.f32.mrb[0].mxu0
      %2771 = vdwg.mxu0
      %v2788 = vunpack.c.l.b16 %v2530
      %v2789 = vunpack.c.l.b16 %v2531
      %v2790 = vunpack.c.l.b16 %v2532
      %v2791 = vunpack.c.l.b16 %v2533
      %v2792 = vunpack.c.l.b16 %v2534
      %v2793 = vunpack.c.l.b16 %v2535
      %v2794 = vunpack.c.l.b16 %v2536
      %v2795 = vunpack.c.l.b16 %v2537
      %v2796 = vunpack.c.l.b16 %v2538
      %v2797 = vunpack.c.l.b16 %v2539
      %v2798 = vunpack.c.l.b16 %v2540
      %v2799 = vunpack.c.l.b16 %v2541
      %v2800 = vunpack.c.l.b16 %v2542
      %v2801 = vunpack.c.l.b16 %v2543
      %v2802 = vunpack.c.l.b16 %v2544
      %v2803 = vunpack.c.l.b16 %v2545
      %v2804 = vpack.c.b16 %v2789, %v2788
      %v2805 = vpack.c.b16 %v2791, %v2790
      %v2806 = vpack.c.b16 %v2793, %v2792
      %v2807 = vpack.c.b16 %v2795, %v2794
      %v2808 = vpack.c.b16 %v2797, %v2796
      %v2809 = vpack.c.b16 %v2799, %v2798
      %v2810 = vpack.c.b16 %v2801, %v2800
      %v2811 = vpack.c.b16 %v2803, %v2802
      %2820 = vmatprep.subr.bf16.mxu0 0
      %2821 = vmatpush1.bf16.msra.mxu0 %v2804
      %2822 = vmatprep.subr.bf16.mxu0 0
      %2823 = vmatpush1.bf16.msra.mxu0 %v2805
      %2824 = vmatprep.subr.bf16.mxu0 0
      %2825 = vmatpush1.bf16.msra.mxu0 %v2806
      %2826 = vmatprep.subr.bf16.mxu0 0
      %2827 = vmatpush1.bf16.msra.mxu0 %v2807
      %2828 = vmatprep.subr.bf16.mxu0 0
      %2829 = vmatpush1.bf16.msra.mxu0 %v2808
      %2830 = vmatprep.subr.bf16.mxu0 0
      %2831 = vmatpush1.bf16.msra.mxu0 %v2809
      %2832 = vmatprep.subr.bf16.mxu0 0
      %2833 = vmatpush1.bf16.msra.mxu0 %v2810
      %2834 = vmatprep.subr.bf16.mxu0 0
      %2835 = vmatpush1.bf16.msra.mxu0 %v2811
      %2836 = vmatprep.subr.bf16.mxu0 0
      %2837 = vmatpush1.bf16.msra.mxu0 0
      %2838 = vmatprep.subr.bf16.mxu0 0
      %2839 = vmatpush1.bf16.msra.mxu0 0
      %2840 = vmatprep.subr.bf16.mxu0 0
      %2841 = vmatpush1.bf16.msra.mxu0 0
      %2842 = vmatprep.subr.bf16.mxu0 0
      %2843 = vmatpush1.bf16.msra.mxu0 0
      %2844 = vmatprep.subr.bf16.mxu0 0
      %2845 = vmatpush1.bf16.msra.mxu0 0
      %2846 = vmatprep.subr.bf16.mxu0 0
      %2847 = vmatpush1.bf16.msra.mxu0 0
      %2848 = vmatprep.subr.bf16.mxu0 0
      %2849 = vmatpush1.bf16.msra.mxu0 0
      %2850 = vmatprep.subr.bf16.mxu0 0
      %2851 = vmatpush1.bf16.msra.mxu0 0
      %2852 = vmatprep.mubr.bf16.mxu0 0
      %2853 = vmatmul.mubr.bf16.gmra.mrb[0].mxu0 %v2497
      %v2854 = vpop.f32.mrb[0].mxu0
      %v2855 = vadd.f32 %v2646, %v2854
      %v2856 = vpop.f32.mrb[0].mxu0
      %v2857 = vpop.f32.mrb[0].mxu0
      %v2858 = vadd.f32 %v2649, %v2857
      %v2859 = vpop.f32.mrb[0].mxu0
      %2860 = vmatprep.mubr.bf16.mxu0 0
      %2861 = vmatmul.mubr.bf16.gmra.mrb[0].mxu0 %v2498
      %v2862 = vpop.f32.mrb[0].mxu0
      %v2863 = vadd.f32 %v2654, %v2862
      %v2864 = vpop.f32.mrb[0].mxu0
      %v2865 = vpop.f32.mrb[0].mxu0
      %v2866 = vadd.f32 %v2657, %v2865
      %v2867 = vpop.f32.mrb[0].mxu0
      %2868 = vmatprep.mubr.bf16.mxu0 0
      %2869 = vmatmul.mubr.bf16.gmra.mrb[0].mxu0 %v2499
      %v2870 = vpop.f32.mrb[0].mxu0
      %v2871 = vadd.f32 %v2662, %v2870
      %v2872 = vpop.f32.mrb[0].mxu0
      %v2873 = vpop.f32.mrb[0].mxu0
      %v2874 = vadd.f32 %v2665, %v2873
      %v2875 = vpop.f32.mrb[0].mxu0
      %2876 = vmatprep.mubr.bf16.mxu0 0
      %2877 = vmatmul.mubr.bf16.gmra.mrb[0].mxu0 %v2500
      %v2878 = vpop.f32.mrb[0].mxu0
      %v2879 = vadd.f32 %v2670, %v2878
      %v2880 = vpop.f32.mrb[0].mxu0
      %v2881 = vpop.f32.mrb[0].mxu0
      %v2882 = vadd.f32 %v2673, %v2881
      %v2883 = vpop.f32.mrb[0].mxu0
      %2884 = vmatprep.mubr.bf16.mxu0 0
      %2885 = vmatmul.mubr.bf16.gmra.mrb[0].mxu0 %v2501
      %v2886 = vpop.f32.mrb[0].mxu0
      %v2887 = vadd.f32 %v2678, %v2886
      %v2888 = vpop.f32.mrb[0].mxu0
      %v2889 = vpop.f32.mrb[0].mxu0
      %v2890 = vadd.f32 %v2681, %v2889
      %v2891 = vpop.f32.mrb[0].mxu0
      %2892 = vmatprep.mubr.bf16.mxu0 0
      %2893 = vmatmul.mubr.bf16.gmra.mrb[0].mxu0 %v2502
      %v2894 = vpop.f32.mrb[0].mxu0
      %v2895 = vadd.f32 %v2686, %v2894
      %v2896 = vpop.f32.mrb[0].mxu0
      %v2897 = vpop.f32.mrb[0].mxu0
      %v2898 = vadd.f32 %v2689, %v2897
      %v2899 = vpop.f32.mrb[0].mxu0
      %2900 = vmatprep.mubr.bf16.mxu0 0
      %2901 = vmatmul.mubr.bf16.gmra.mrb[0].mxu0 %v2503
      %v2902 = vpop.f32.mrb[0].mxu0
      %v2903 = vadd.f32 %v2694, %v2902
      %v2904 = vpop.f32.mrb[0].mxu0
      %v2905 = vpop.f32.mrb[0].mxu0
      %v2906 = vadd.f32 %v2697, %v2905
      %v2907 = vpop.f32.mrb[0].mxu0
      %2908 = vmatprep.mubr.bf16.mxu0 0
      %2909 = vmatmul.mubr.bf16.gmra.mrb[0].mxu0 %v2504
      %v2910 = vpop.f32.mrb[0].mxu0
      %v2911 = vadd.f32 %v2702, %v2910
      %v2912 = vpop.f32.mrb[0].mxu0
      %v2913 = vpop.f32.mrb[0].mxu0
      %v2914 = vadd.f32 %v2705, %v2913
      %v2915 = vpop.f32.mrb[0].mxu0
      %2916 = vmatprep.mubr.bf16.mxu0 0
      %2917 = vmatmul.mubr.bf16.gmra.mrb[0].mxu0 %v2505
      %v2918 = vpop.f32.mrb[0].mxu0
      %v2919 = vadd.f32 %v2710, %v2918
      %v2920 = vpop.f32.mrb[0].mxu0
      %v2921 = vpop.f32.mrb[0].mxu0
      %v2922 = vadd.f32 %v2713, %v2921
      %v2923 = vpop.f32.mrb[0].mxu0
      %2924 = vmatprep.mubr.bf16.mxu0 0
      %2925 = vmatmul.mubr.bf16.gmra.mrb[0].mxu0 %v2506
      %v2926 = vpop.f32.mrb[0].mxu0
      %v2927 = vadd.f32 %v2718, %v2926
      %v2928 = vpop.f32.mrb[0].mxu0
      %v2929 = vpop.f32.mrb[0].mxu0
      %v2930 = vadd.f32 %v2721, %v2929
      %v2931 = vpop.f32.mrb[0].mxu0
      %2932 = vmatprep.mubr.bf16.mxu0 0
      %2933 = vmatmul.mubr.bf16.gmra.mrb[0].mxu0 %v2507
      %v2934 = vpop.f32.mrb[0].mxu0
      %v2935 = vadd.f32 %v2726, %v2934
      %v2936 = vpop.f32.mrb[0].mxu0
      %v2937 = vpop.f32.mrb[0].mxu0
      %v2938 = vadd.f32 %v2729, %v2937
      %v2939 = vpop.f32.mrb[0].mxu0
      %2940 = vmatprep.mubr.bf16.mxu0 0
      %2941 = vmatmul.mubr.bf16.gmra.mrb[0].mxu0 %v2508
      %v2942 = vpop.f32.mrb[0].mxu0
      %v2943 = vadd.f32 %v2734, %v2942
      %v2944 = vpop.f32.mrb[0].mxu0
      %v2945 = vpop.f32.mrb[0].mxu0
      %v2946 = vadd.f32 %v2737, %v2945
      %v2947 = vpop.f32.mrb[0].mxu0
      %2948 = vmatprep.mubr.bf16.mxu0 0
      %2949 = vmatmul.mubr.bf16.gmra.mrb[0].mxu0 %v2509
      %v2950 = vpop.f32.mrb[0].mxu0
      %v2951 = vadd.f32 %v2742, %v2950
      %v2952 = vpop.f32.mrb[0].mxu0
      %v2953 = vpop.f32.mrb[0].mxu0
      %v2954 = vadd.f32 %v2745, %v2953
      %v2955 = vpop.f32.mrb[0].mxu0
      %2956 = vmatprep.mubr.bf16.mxu0 0
      %2957 = vmatmul.mubr.bf16.gmra.mrb[0].mxu0 %v2510
      %v2958 = vpop.f32.mrb[0].mxu0
      %v2959 = vadd.f32 %v2750, %v2958
      %v2960 = vpop.f32.mrb[0].mxu0
      %v2961 = vpop.f32.mrb[0].mxu0
      %v2962 = vadd.f32 %v2753, %v2961
      %v2963 = vpop.f32.mrb[0].mxu0
      %2964 = vmatprep.mubr.bf16.mxu0 0
      %2965 = vmatmul.mubr.bf16.gmra.mrb[0].mxu0 %v2511
      %v2966 = vpop.f32.mrb[0].mxu0
      %v2967 = vadd.f32 %v2758, %v2966
      %v2968 = vpop.f32.mrb[0].mxu0
      %v2969 = vpop.f32.mrb[0].mxu0
      %v2970 = vadd.f32 %v2761, %v2969
      %v2971 = vpop.f32.mrb[0].mxu0
      %2972 = vmatprep.mubr.bf16.mxu0 0
      %2973 = vmatmul.mubr.bf16.gmra.mrb[0].mxu0 %v2512
      %v2974 = vpop.f32.mrb[0].mxu0
      %v2975 = vadd.f32 %v2766, %v2974
      %v2976 = vpop.f32.mrb[0].mxu0
      %v2977 = vpop.f32.mrb[0].mxu0
      %v2978 = vadd.f32 %v2769, %v2977
      %v2979 = vpop.f32.mrb[0].mxu0
      %2980 = vdwg.mxu0
      %s2981 = scalar_lea.vmem %s5, 128
      %v2982 = vld [vmem:[%s2981] sm:$0xf]
      %v2983 = vld [vmem:[%s2981 + $0x4] sm:$0xf]
      %v2984 = vld [vmem:[%s2981 + $0x8] sm:$0xf]
      %v2985 = vld [vmem:[%s2981 + $0xc] sm:$0xf]
      %v2986 = vld [vmem:[%s2981 + $0x10] sm:$0xf]
      %v2987 = vld [vmem:[%s2981 + $0x14] sm:$0xf]
      %v2988 = vld [vmem:[%s2981 + $0x18] sm:$0xf]
      %v2989 = vld [vmem:[%s2981 + $0x1c] sm:$0xf]
      %v2990 = vld [vmem:[%s2981 + $0x20] sm:$0xf]
      %v2991 = vld [vmem:[%s2981 + $0x24] sm:$0xf]
      %v2992 = vld [vmem:[%s2981 + $0x28] sm:$0xf]
      %v2993 = vld [vmem:[%s2981 + $0x2c] sm:$0xf]
      %v2994 = vld [vmem:[%s2981 + $0x30] sm:$0xf]
      %v2995 = vld [vmem:[%s2981 + $0x34] sm:$0xf]
      %v2996 = vld [vmem:[%s2981 + $0x38] sm:$0xf]
      %v2997 = vld [vmem:[%s2981 + $0x3c] sm:$0xf]
      %v3014 = vunpack.c.l.b16 %v2982
      %v3015 = vunpack.c.l.b16 %v2983
      %v3016 = vunpack.c.l.b16 %v2984
      %v3017 = vunpack.c.l.b16 %v2985
      %v3018 = vunpack.c.l.b16 %v2986
      %v3019 = vunpack.c.l.b16 %v2987
      %v3020 = vunpack.c.l.b16 %v2988
      %v3021 = vunpack.c.l.b16 %v2989
      %v3022 = vunpack.c.l.b16 %v2990
      %v3023 = vunpack.c.l.b16 %v2991
      %v3024 = vunpack.c.l.b16 %v2992
      %v3025 = vunpack.c.l.b16 %v2993
      %v3026 = vunpack.c.l.b16 %v2994
      %v3027 = vunpack.c.l.b16 %v2995
      %v3028 = vunpack.c.l.b16 %v2996
      %v3029 = vunpack.c.l.b16 %v2997
      %v3030 = vpack.c.b16 %v3015, %v3014
      %v3031 = vpack.c.b16 %v3017, %v3016
      %v3032 = vpack.c.b16 %v3019, %v3018
      %v3033 = vpack.c.b16 %v3021, %v3020
      %v3034 = vpack.c.b16 %v3023, %v3022
      %v3035 = vpack.c.b16 %v3025, %v3024
      %v3036 = vpack.c.b16 %v3027, %v3026
      %v3037 = vpack.c.b16 %v3029, %v3028
      %3046 = vmatprep.subr.bf16.mxu0 0
      %3047 = vmatpush1.bf16.msra.mxu0 %v3030
      %3048 = vmatprep.subr.bf16.mxu0 0
      %3049 = vmatpush1.bf16.msra.mxu0 %v3031
      %3050 = vmatprep.subr.bf16.mxu0 0
      %3051 = vmatpush1.bf16.msra.mxu0 %v3032
      %3052 = vmatprep.subr.bf16.mxu0 0
      %3053 = vmatpush1.bf16.msra.mxu0 %v3033
      %3054 = vmatprep.subr.bf16.mxu0 0
      %3055 = vmatpush1.bf16.msra.mxu0 %v3034
      %3056 = vmatprep.subr.bf16.mxu0 0
      %3057 = vmatpush1.bf16.msra.mxu0 %v3035
      %3058 = vmatprep.subr.bf16.mxu0 0
      %3059 = vmatpush1.bf16.msra.mxu0 %v3036
      %3060 = vmatprep.subr.bf16.mxu0 0
      %3061 = vmatpush1.bf16.msra.mxu0 %v3037
      %3062 = vmatprep.subr.bf16.mxu0 0
      %3063 = vmatpush1.bf16.msra.mxu0 0
      %3064 = vmatprep.subr.bf16.mxu0 0
      %3065 = vmatpush1.bf16.msra.mxu0 0
      %3066 = vmatprep.subr.bf16.mxu0 0
      %3067 = vmatpush1.bf16.msra.mxu0 0
      %3068 = vmatprep.subr.bf16.mxu0 0
      %3069 = vmatpush1.bf16.msra.mxu0 0
      %3070 = vmatprep.subr.bf16.mxu0 0
      %3071 = vmatpush1.bf16.msra.mxu0 0
      %3072 = vmatprep.subr.bf16.mxu0 0
      %3073 = vmatpush1.bf16.msra.mxu0 0
      %3074 = vmatprep.subr.bf16.mxu0 0
      %3075 = vmatpush1.bf16.msra.mxu0 0
      %3076 = vmatprep.subr.bf16.mxu0 0
      %3077 = vmatpush1.bf16.msra.mxu0 0
      %3078 = vmatprep.mubr.bf16.mxu0 0
      %3079 = vmatmul.mubr.bf16.gmra.mrb[0].mxu0 %v2514
      %v3080 = vpop.f32.mrb[0].mxu0
      %v3081 = vadd.f32 0.0, %v3080
      %v3082 = vpop.f32.mrb[0].mxu0
      %v3083 = vpop.f32.mrb[0].mxu0
      %v3084 = vadd.f32 0.0, %v3083
      %v3085 = vpop.f32.mrb[0].mxu0
      %3086 = vmatprep.mubr.bf16.mxu0 0
      %3087 = vmatmul.mubr.bf16.gmra.mrb[0].mxu0 %v2515
      %v3088 = vpop.f32.mrb[0].mxu0
      %v3089 = vadd.f32 0.0, %v3088
      %v3090 = vpop.f32.mrb[0].mxu0
      %v3091 = vpop.f32.mrb[0].mxu0
      %v3092 = vadd.f32 0.0, %v3091
      %v3093 = vpop.f32.mrb[0].mxu0
      %3094 = vmatprep.mubr.bf16.mxu0 0
      %3095 = vmatmul.mubr.bf16.gmra.mrb[0].mxu0 %v2516
      %v3096 = vpop.f32.mrb[0].mxu0
      %v3097 = vadd.f32 0.0, %v3096
      %v3098 = vpop.f32.mrb[0].mxu0
      %v3099 = vpop.f32.mrb[0].mxu0
      %v3100 = vadd.f32 0.0, %v3099
      %v3101 = vpop.f32.mrb[0].mxu0
      %3102 = vmatprep.mubr.bf16.mxu0 0
      %3103 = vmatmul.mubr.bf16.gmra.mrb[0].mxu0 %v2517
      %v3104 = vpop.f32.mrb[0].mxu0
      %v3105 = vadd.f32 0.0, %v3104
      %v3106 = vpop.f32.mrb[0].mxu0
      %v3107 = vpop.f32.mrb[0].mxu0
      %v3108 = vadd.f32 0.0, %v3107
      %v3109 = vpop.f32.mrb[0].mxu0
      %3110 = vmatprep.mubr.bf16.mxu0 0
      %3111 = vmatmul.mubr.bf16.gmra.mrb[0].mxu0 %v2518
      %v3112 = vpop.f32.mrb[0].mxu0
      %v3113 = vadd.f32 0.0, %v3112
      %v3114 = vpop.f32.mrb[0].mxu0
      %v3115 = vpop.f32.mrb[0].mxu0
      %v3116 = vadd.f32 0.0, %v3115
      %v3117 = vpop.f32.mrb[0].mxu0
      %3118 = vmatprep.mubr.bf16.mxu0 0
      %3119 = vmatmul.mubr.bf16.gmra.mrb[0].mxu0 %v2519
      %v3120 = vpop.f32.mrb[0].mxu0
      %v3121 = vadd.f32 0.0, %v3120
      %v3122 = vpop.f32.mrb[0].mxu0
      %v3123 = vpop.f32.mrb[0].mxu0
      %v3124 = vadd.f32 0.0, %v3123
      %v3125 = vpop.f32.mrb[0].mxu0
      %3126 = vmatprep.mubr.bf16.mxu0 0
      %3127 = vmatmul.mubr.bf16.gmra.mrb[0].mxu0 %v2520
      %v3128 = vpop.f32.mrb[0].mxu0
      %v3129 = vadd.f32 0.0, %v3128
      %v3130 = vpop.f32.mrb[0].mxu0
      %v3131 = vpop.f32.mrb[0].mxu0
      %v3132 = vadd.f32 0.0, %v3131
      %v3133 = vpop.f32.mrb[0].mxu0
      %3134 = vmatprep.mubr.bf16.mxu0 0
      %3135 = vmatmul.mubr.bf16.gmra.mrb[0].mxu0 %v2521
      %v3136 = vpop.f32.mrb[0].mxu0
      %v3137 = vadd.f32 0.0, %v3136
      %v3138 = vpop.f32.mrb[0].mxu0
      %v3139 = vpop.f32.mrb[0].mxu0
      %v3140 = vadd.f32 0.0, %v3139
      %v3141 = vpop.f32.mrb[0].mxu0
      %3142 = vmatprep.mubr.bf16.mxu0 0
      %3143 = vmatmul.mubr.bf16.gmra.mrb[0].mxu0 %v2522
      %v3144 = vpop.f32.mrb[0].mxu0
      %v3145 = vadd.f32 0.0, %v3144
      %v3146 = vpop.f32.mrb[0].mxu0
      %v3147 = vpop.f32.mrb[0].mxu0
      %v3148 = vadd.f32 0.0, %v3147
      %v3149 = vpop.f32.mrb[0].mxu0
      %3150 = vmatprep.mubr.bf16.mxu0 0
      %3151 = vmatmul.mubr.bf16.gmra.mrb[0].mxu0 %v2523
      %v3152 = vpop.f32.mrb[0].mxu0
      %v3153 = vadd.f32 0.0, %v3152
      %v3154 = vpop.f32.mrb[0].mxu0
      %v3155 = vpop.f32.mrb[0].mxu0
      %v3156 = vadd.f32 0.0, %v3155
      %v3157 = vpop.f32.mrb[0].mxu0
      %3158 = vmatprep.mubr.bf16.mxu0 0
      %3159 = vmatmul.mubr.bf16.gmra.mrb[0].mxu0 %v2524
      %v3160 = vpop.f32.mrb[0].mxu0
      %v3161 = vadd.f32 0.0, %v3160
      %v3162 = vpop.f32.mrb[0].mxu0
      %v3163 = vpop.f32.mrb[0].mxu0
      %v3164 = vadd.f32 0.0, %v3163
      %v3165 = vpop.f32.mrb[0].mxu0
      %3166 = vmatprep.mubr.bf16.mxu0 0
      %3167 = vmatmul.mubr.bf16.gmra.mrb[0].mxu0 %v2525
      %v3168 = vpop.f32.mrb[0].mxu0
      %v3169 = vadd.f32 0.0, %v3168
      %v3170 = vpop.f32.mrb[0].mxu0
      %v3171 = vpop.f32.mrb[0].mxu0
      %v3172 = vadd.f32 0.0, %v3171
      %v3173 = vpop.f32.mrb[0].mxu0
      %3174 = vmatprep.mubr.bf16.mxu0 0
      %3175 = vmatmul.mubr.bf16.gmra.mrb[0].mxu0 %v2526
      %v3176 = vpop.f32.mrb[0].mxu0
      %v3177 = vadd.f32 0.0, %v3176
      %v3178 = vpop.f32.mrb[0].mxu0
      %v3179 = vpop.f32.mrb[0].mxu0
      %v3180 = vadd.f32 0.0, %v3179
      %v3181 = vpop.f32.mrb[0].mxu0
      %3182 = vmatprep.mubr.bf16.mxu0 0
      %3183 = vmatmul.mubr.bf16.gmra.mrb[0].mxu0 %v2527
      %v3184 = vpop.f32.mrb[0].mxu0
      %v3185 = vadd.f32 0.0, %v3184
      %v3186 = vpop.f32.mrb[0].mxu0
      %v3187 = vpop.f32.mrb[0].mxu0
      %v3188 = vadd.f32 0.0, %v3187
      %v3189 = vpop.f32.mrb[0].mxu0
      %3190 = vmatprep.mubr.bf16.mxu0 0
      %3191 = vmatmul.mubr.bf16.gmra.mrb[0].mxu0 %v2528
      %v3192 = vpop.f32.mrb[0].mxu0
      %v3193 = vadd.f32 0.0, %v3192
      %v3194 = vpop.f32.mrb[0].mxu0
      %v3195 = vpop.f32.mrb[0].mxu0
      %v3196 = vadd.f32 0.0, %v3195
      %v3197 = vpop.f32.mrb[0].mxu0
      %3198 = vmatprep.mubr.bf16.mxu0 0
      %3199 = vmatmul.mubr.bf16.gmra.mrb[0].mxu0 %v2529
      %v3200 = vpop.f32.mrb[0].mxu0
      %v3201 = vadd.f32 0.0, %v3200
      %v3202 = vpop.f32.mrb[0].mxu0
      %v3203 = vpop.f32.mrb[0].mxu0
      %v3204 = vadd.f32 0.0, %v3203
      %v3205 = vpop.f32.mrb[0].mxu0
      %3206 = vdwg.mxu0
      %v3207 = vadd.f32 %v2855, %v3081
      %v3208 = vadd.f32 %v2858, %v3084
      %v3209 = vadd.f32 %v2863, %v3089
      %v3210 = vadd.f32 %v2866, %v3092
      %v3211 = vadd.f32 %v2871, %v3097
      %v3212 = vadd.f32 %v2874, %v3100
      %v3213 = vadd.f32 %v2879, %v3105
      %v3214 = vadd.f32 %v2882, %v3108
      %v3215 = vadd.f32 %v2887, %v3113
      %v3216 = vadd.f32 %v2890, %v3116
      %v3217 = vadd.f32 %v2895, %v3121
      %v3218 = vadd.f32 %v2898, %v3124
      %v3219 = vadd.f32 %v2903, %v3129
      %v3220 = vadd.f32 %v2906, %v3132
      %v3221 = vadd.f32 %v2911, %v3137
      %v3222 = vadd.f32 %v2914, %v3140
      %v3223 = vadd.f32 %v2919, %v3145
      %v3224 = vadd.f32 %v2922, %v3148
      %v3225 = vadd.f32 %v2927, %v3153
      %v3226 = vadd.f32 %v2930, %v3156
      %v3227 = vadd.f32 %v2935, %v3161
      %v3228 = vadd.f32 %v2938, %v3164
      %v3229 = vadd.f32 %v2943, %v3169
      %v3230 = vadd.f32 %v2946, %v3172
      %v3231 = vadd.f32 %v2951, %v3177
      %v3232 = vadd.f32 %v2954, %v3180
      %v3233 = vadd.f32 %v2959, %v3185
      %v3234 = vadd.f32 %v2962, %v3188
      %v3235 = vadd.f32 %v2967, %v3193
      %v3236 = vadd.f32 %v2970, %v3196
      %v3237 = vadd.f32 %v2975, %v3201
      %v3238 = vadd.f32 %v2978, %v3204
      %v3239 = vld [vmem:[%s6] sm:$0x1]
      %v3241 = vlaneseq
      %v3242 = vshrl.u32 %v3241, 7
      %v3243 = vsub.s32 0, %v3242
      %v3244 = vrot.slane %v3239, %v3243
      %v3246 = vadd.f32 %v3207, %v3244
      %v3247 = vadd.f32 %v3208, %v3244
      %v3248 = vadd.f32 %v3209, %v3244
      %v3249 = vadd.f32 %v3210, %v3244
      %v3250 = vadd.f32 %v3211, %v3244
      %v3251 = vadd.f32 %v3212, %v3244
      %v3252 = vadd.f32 %v3213, %v3244
      %v3253 = vadd.f32 %v3214, %v3244
      %v3254 = vadd.f32 %v3215, %v3244
      %v3255 = vadd.f32 %v3216, %v3244
      %v3256 = vadd.f32 %v3217, %v3244
      %v3257 = vadd.f32 %v3218, %v3244
      %v3258 = vadd.f32 %v3219, %v3244
      %v3259 = vadd.f32 %v3220, %v3244
      %v3260 = vadd.f32 %v3221, %v3244
      %v3261 = vadd.f32 %v3222, %v3244
      %v3262 = vadd.f32 %v3223, %v3244
      %v3263 = vadd.f32 %v3224, %v3244
      %v3264 = vadd.f32 %v3225, %v3244
      %v3265 = vadd.f32 %v3226, %v3244
      %v3266 = vadd.f32 %v3227, %v3244
      %v3267 = vadd.f32 %v3228, %v3244
      %v3268 = vadd.f32 %v3229, %v3244
      %v3269 = vadd.f32 %v3230, %v3244
      %v3270 = vadd.f32 %v3231, %v3244
      %v3271 = vadd.f32 %v3232, %v3244
      %v3272 = vadd.f32 %v3233, %v3244
      %v3273 = vadd.f32 %v3234, %v3244
      %v3274 = vadd.f32 %v3235, %v3244
      %v3275 = vadd.f32 %v3236, %v3244
      %v3276 = vadd.f32 %v3237, %v3244
      %v3277 = vadd.f32 %v3238, %v3244
      %v3278 = vunpack.c.l.bf16 %v2481
      %v3279 = vunpack.c.h.bf16 %v2481
      %v3280 = vunpack.c.l.bf16 %v2482
      %v3281 = vunpack.c.h.bf16 %v2482
      %v3282 = vunpack.c.l.bf16 %v2483
      %v3283 = vunpack.c.h.bf16 %v2483
      %v3284 = vunpack.c.l.bf16 %v2484
      %v3285 = vunpack.c.h.bf16 %v2484
      %v3286 = vunpack.c.l.bf16 %v2485
      %v3287 = vunpack.c.h.bf16 %v2485
      %v3288 = vunpack.c.l.bf16 %v2486
      %v3289 = vunpack.c.h.bf16 %v2486
      %v3290 = vunpack.c.l.bf16 %v2487
      %v3291 = vunpack.c.h.bf16 %v2487
      %v3292 = vunpack.c.l.bf16 %v2488
      %v3293 = vunpack.c.h.bf16 %v2488
      %v3294 = vunpack.c.l.bf16 %v2489
      %v3295 = vunpack.c.h.bf16 %v2489
      %v3296 = vunpack.c.l.bf16 %v2490
      %v3297 = vunpack.c.h.bf16 %v2490
      %v3298 = vunpack.c.l.bf16 %v2491
      %v3299 = vunpack.c.h.bf16 %v2491
      %v3300 = vunpack.c.l.bf16 %v2492
      %v3301 = vunpack.c.h.bf16 %v2492
      %v3302 = vunpack.c.l.bf16 %v2493
      %v3303 = vunpack.c.h.bf16 %v2493
      %v3304 = vunpack.c.l.bf16 %v2494
      %v3305 = vunpack.c.h.bf16 %v2494
      %v3306 = vunpack.c.l.bf16 %v2495
      %v3307 = vunpack.c.h.bf16 %v2495
      %v3308 = vunpack.c.l.bf16 %v2496
      %v3309 = vunpack.c.h.bf16 %v2496
      %v3310 = vadd.f32 %v3246, %v3278
      %v3311 = vadd.f32 %v3247, %v3279
      %v3312 = vadd.f32 %v3248, %v3280
      %v3313 = vadd.f32 %v3249, %v3281
      %v3314 = vadd.f32 %v3250, %v3282
      %v3315 = vadd.f32 %v3251, %v3283
      %v3316 = vadd.f32 %v3252, %v3284
      %v3317 = vadd.f32 %v3253, %v3285
      %v3318 = vadd.f32 %v3254, %v3286
      %v3319 = vadd.f32 %v3255, %v3287
      %v3320 = vadd.f32 %v3256, %v3288
      %v3321 = vadd.f32 %v3257, %v3289
      %v3322 = vadd.f32 %v3258, %v3290
      %v3323 = vadd.f32 %v3259, %v3291
      %v3324 = vadd.f32 %v3260, %v3292
      %v3325 = vadd.f32 %v3261, %v3293
      %v3326 = vadd.f32 %v3262, %v3294
      %v3327 = vadd.f32 %v3263, %v3295
      %v3328 = vadd.f32 %v3264, %v3296
      %v3329 = vadd.f32 %v3265, %v3297
      %v3330 = vadd.f32 %v3266, %v3298
      %v3331 = vadd.f32 %v3267, %v3299
      %v3332 = vadd.f32 %v3268, %v3300
      %v3333 = vadd.f32 %v3269, %v3301
      %v3334 = vadd.f32 %v3270, %v3302
      %v3335 = vadd.f32 %v3271, %v3303
      %v3336 = vadd.f32 %v3272, %v3304
      %v3337 = vadd.f32 %v3273, %v3305
      %v3338 = vadd.f32 %v3274, %v3306
      %v3339 = vadd.f32 %v3275, %v3307
      %v3340 = vadd.f32 %v3276, %v3308
      %v3341 = vadd.f32 %v3277, %v3309
      %v3342 = vmax.f32 %v3310, 0.0
      %v3343 = vmax.f32 %v3311, 0.0
      %v3344 = vmax.f32 %v3312, 0.0
      %v3345 = vmax.f32 %v3313, 0.0
      %v3346 = vmax.f32 %v3314, 0.0
      %v3347 = vmax.f32 %v3315, 0.0
      %v3348 = vmax.f32 %v3316, 0.0
      %v3349 = vmax.f32 %v3317, 0.0
      %v3350 = vmax.f32 %v3318, 0.0
      %v3351 = vmax.f32 %v3319, 0.0
      %v3352 = vmax.f32 %v3320, 0.0
      %v3353 = vmax.f32 %v3321, 0.0
      %v3354 = vmax.f32 %v3322, 0.0
      %v3355 = vmax.f32 %v3323, 0.0
      %v3356 = vmax.f32 %v3324, 0.0
      %v3357 = vmax.f32 %v3325, 0.0
      %v3358 = vmax.f32 %v3326, 0.0
      %v3359 = vmax.f32 %v3327, 0.0
      %v3360 = vmax.f32 %v3328, 0.0
      %v3361 = vmax.f32 %v3329, 0.0
      %v3362 = vmax.f32 %v3330, 0.0
      %v3363 = vmax.f32 %v3331, 0.0
      %v3364 = vmax.f32 %v3332, 0.0
      %v3365 = vmax.f32 %v3333, 0.0
      %v3366 = vmax.f32 %v3334, 0.0
      %v3367 = vmax.f32 %v3335, 0.0
      %v3368 = vmax.f32 %v3336, 0.0
      %v3369 = vmax.f32 %v3337, 0.0
      %v3370 = vmax.f32 %v3338, 0.0
      %v3371 = vmax.f32 %v3339, 0.0
      %v3372 = vmax.f32 %v3340, 0.0
      %v3373 = vmax.f32 %v3341, 0.0
      %v3374 = vpack.c.bf16 %v3343, %v3342
      %v3375 = vpack.c.bf16 %v3345, %v3344
      %v3376 = vpack.c.bf16 %v3347, %v3346
      %v3377 = vpack.c.bf16 %v3349, %v3348
      %v3378 = vpack.c.bf16 %v3351, %v3350
      %v3379 = vpack.c.bf16 %v3353, %v3352
      %v3380 = vpack.c.bf16 %v3355, %v3354
      %v3381 = vpack.c.bf16 %v3357, %v3356
      %v3382 = vpack.c.bf16 %v3359, %v3358
      %v3383 = vpack.c.bf16 %v3361, %v3360
      %v3384 = vpack.c.bf16 %v3363, %v3362
      %v3385 = vpack.c.bf16 %v3365, %v3364
      %v3386 = vpack.c.bf16 %v3367, %v3366
      %v3387 = vpack.c.bf16 %v3369, %v3368
      %v3388 = vpack.c.bf16 %v3371, %v3370
      %v3389 = vpack.c.bf16 %v3373, %v3372
      %3390 = vst [vmem:[#allocation4 + $0x8] sm:$0xff] %v3375
      %3391 = vst [vmem:[#allocation4 + $0x10] sm:$0xff] %v3377
      %3392 = vst [vmem:[#allocation4 + $0x18] sm:$0xff] %v3379
      %3393 = vst [vmem:[#allocation4 + $0x20] sm:$0xff] %v3381
      %3394 = vst [vmem:[#allocation4 + $0x28] sm:$0xff] %v3383
      %3395 = vst [vmem:[#allocation4 + $0x30] sm:$0xff] %v3385
      %3396 = vst [vmem:[#allocation4 + $0x38] sm:$0xff] %v3387
      %3397 = vst [vmem:[#allocation4 + $0x40] sm:$0xff] %v3389
      %3398 = vst [vmem:[#allocation4 + $0x48] sm:$0xff] %v3374
      %3399 = vst [vmem:[#allocation4 + $0x50] sm:$0xff] %v3376
      %3400 = vst [vmem:[#allocation4 + $0x58] sm:$0xff] %v3378
      %3401 = vst [vmem:[#allocation4 + $0x60] sm:$0xff] %v3380
      %3402 = vst [vmem:[#allocation4 + $0x68] sm:$0xff] %v3382
      %3403 = vst [vmem:[#allocation4 + $0x70] sm:$0xff] %v3384
      %3404 = vst [vmem:[#allocation4 + $0x78] sm:$0xff] %v3386
      %3405 = vst [vmem:[#allocation4 + $0x80] sm:$0xff] %v3388
      %v3406 = vld [vmem:[#allocation4] sm:$0xff]
      %v3407 = vld [vmem:[#allocation4 + $0x8] sm:$0xff]
      %v3408 = vld [vmem:[#allocation4 + $0x10] sm:$0xff]
      %v3409 = vld [vmem:[#allocation4 + $0x18] sm:$0xff]
      %v3410 = vld [vmem:[#allocation4 + $0x20] sm:$0xff]
      %v3411 = vld [vmem:[#allocation4 + $0x28] sm:$0xff]
      %v3412 = vld [vmem:[#allocation4 + $0x30] sm:$0xff]
      %v3413 = vld [vmem:[#allocation4 + $0x38] sm:$0xff]
      %v3414 = vld [vmem:[#allocation4 + $0x48] sm:$0xff]
      %v3415 = vld [vmem:[#allocation4 + $0x50] sm:$0xff]
      %v3416 = vld [vmem:[#allocation4 + $0x58] sm:$0xff]
      %v3417 = vld [vmem:[#allocation4 + $0x60] sm:$0xff]
      %v3418 = vld [vmem:[#allocation4 + $0x68] sm:$0xff]
      %v3419 = vld [vmem:[#allocation4 + $0x70] sm:$0xff]
      %v3420 = vld [vmem:[#allocation4 + $0x78] sm:$0xff]
      %v3421 = vld [vmem:[#allocation4 + $0x80] sm:$0xff]
      %v3422 = vld [vmem:[#allocation4 + $0x40] sm:$0xff]
      %v3423 = vld [vmem:[%s7] sm:$0xf]
      %v3424 = vld [vmem:[%s7 + $0x4] sm:$0xf]
      %v3425 = vld [vmem:[%s7 + $0x8] sm:$0xf]
      %v3426 = vld [vmem:[%s7 + $0xc] sm:$0xf]
      %v3427 = vld [vmem:[%s7 + $0x10] sm:$0xf]
      %v3428 = vld [vmem:[%s7 + $0x14] sm:$0xf]
      %v3429 = vld [vmem:[%s7 + $0x18] sm:$0xf]
      %v3430 = vld [vmem:[%s7 + $0x1c] sm:$0xf]
      %v3431 = vld [vmem:[%s7 + $0x20] sm:$0xf]
      %v3432 = vld [vmem:[%s7 + $0x24] sm:$0xf]
      %v3433 = vld [vmem:[%s7 + $0x28] sm:$0xf]
      %v3434 = vld [vmem:[%s7 + $0x2c] sm:$0xf]
      %v3435 = vld [vmem:[%s7 + $0x30] sm:$0xf]
      %v3436 = vld [vmem:[%s7 + $0x34] sm:$0xf]
      %v3437 = vld [vmem:[%s7 + $0x38] sm:$0xf]
      %v3438 = vld [vmem:[%s7 + $0x3c] sm:$0xf]
      %s3439 = scalar_lea.vmem %s7, 64
      %v3440 = vld [vmem:[%s3439] sm:$0xf]
      %v3441 = vld [vmem:[%s3439 + $0x4] sm:$0xf]
      %v3442 = vld [vmem:[%s3439 + $0x8] sm:$0xf]
      %v3443 = vld [vmem:[%s3439 + $0xc] sm:$0xf]
      %v3444 = vld [vmem:[%s3439 + $0x10] sm:$0xf]
      %v3445 = vld [vmem:[%s3439 + $0x14] sm:$0xf]
      %v3446 = vld [vmem:[%s3439 + $0x18] sm:$0xf]
      %v3447 = vld [vmem:[%s3439 + $0x1c] sm:$0xf]
      %v3448 = vld [vmem:[%s3439 + $0x20] sm:$0xf]
      %v3449 = vld [vmem:[%s3439 + $0x24] sm:$0xf]
      %v3450 = vld [vmem:[%s3439 + $0x28] sm:$0xf]
      %v3451 = vld [vmem:[%s3439 + $0x2c] sm:$0xf]
      %v3452 = vld [vmem:[%s3439 + $0x30] sm:$0xf]
      %v3453 = vld [vmem:[%s3439 + $0x34] sm:$0xf]
      %v3454 = vld [vmem:[%s3439 + $0x38] sm:$0xf]
      %v3455 = vld [vmem:[%s3439 + $0x3c] sm:$0xf]
      %v3472 = vunpack.c.l.b16 %v3440
      %v3473 = vunpack.c.l.b16 %v3441
      %v3474 = vunpack.c.l.b16 %v3442
      %v3475 = vunpack.c.l.b16 %v3443
      %v3476 = vunpack.c.l.b16 %v3444
      %v3477 = vunpack.c.l.b16 %v3445
      %v3478 = vunpack.c.l.b16 %v3446
      %v3479 = vunpack.c.l.b16 %v3447
      %v3480 = vunpack.c.l.b16 %v3448
      %v3481 = vunpack.c.l.b16 %v3449
      %v3482 = vunpack.c.l.b16 %v3450
      %v3483 = vunpack.c.l.b16 %v3451
      %v3484 = vunpack.c.l.b16 %v3452
      %v3485 = vunpack.c.l.b16 %v3453
      %v3486 = vunpack.c.l.b16 %v3454
      %v3487 = vunpack.c.l.b16 %v3455
      %v3488 = vpack.c.b16 %v3473, %v3472
      %v3489 = vpack.c.b16 %v3475, %v3474
      %v3490 = vpack.c.b16 %v3477, %v3476
      %v3491 = vpack.c.b16 %v3479, %v3478
      %v3492 = vpack.c.b16 %v3481, %v3480
      %v3493 = vpack.c.b16 %v3483, %v3482
      %v3494 = vpack.c.b16 %v3485, %v3484
      %v3495 = vpack.c.b16 %v3487, %v3486
      %3504 = vmatprep.subr.bf16.mxu0 0
      %3505 = vmatpush1.bf16.msra.mxu0 %v3488
      %3506 = vmatprep.subr.bf16.mxu0 0
      %3507 = vmatpush1.bf16.msra.mxu0 %v3489
      %3508 = vmatprep.subr.bf16.mxu0 0
      %3509 = vmatpush1.bf16.msra.mxu0 %v3490
      %3510 = vmatprep.subr.bf16.mxu0 0
      %3511 = vmatpush1.bf16.msra.mxu0 %v3491
      %3512 = vmatprep.subr.bf16.mxu0 0
      %3513 = vmatpush1.bf16.msra.mxu0 %v3492
      %3514 = vmatprep.subr.bf16.mxu0 0
      %3515 = vmatpush1.bf16.msra.mxu0 %v3493
      %3516 = vmatprep.subr.bf16.mxu0 0
      %3517 = vmatpush1.bf16.msra.mxu0 %v3494
      %3518 = vmatprep.subr.bf16.mxu0 0
      %3519 = vmatpush1.bf16.msra.mxu0 %v3495
      %3520 = vmatprep.subr.bf16.mxu0 0
      %3521 = vmatpush1.bf16.msra.mxu0 0
      %3522 = vmatprep.subr.bf16.mxu0 0
      %3523 = vmatpush1.bf16.msra.mxu0 0
      %3524 = vmatprep.subr.bf16.mxu0 0
      %3525 = vmatpush1.bf16.msra.mxu0 0
      %3526 = vmatprep.subr.bf16.mxu0 0
      %3527 = vmatpush1.bf16.msra.mxu0 0
      %3528 = vmatprep.subr.bf16.mxu0 0
      %3529 = vmatpush1.bf16.msra.mxu0 0
      %3530 = vmatprep.subr.bf16.mxu0 0
      %3531 = vmatpush1.bf16.msra.mxu0 0
      %3532 = vmatprep.subr.bf16.mxu0 0
      %3533 = vmatpush1.bf16.msra.mxu0 0
      %3534 = vmatprep.subr.bf16.mxu0 0
      %3535 = vmatpush1.bf16.msra.mxu0 0
      %3536 = vmatprep.mubr.bf16.mxu0 0
      %3537 = vmatmul.mubr.bf16.gmra.mrb[0].mxu0 %v3414
      %v3538 = vpop.f32.mrb[0].mxu0
      %v3539 = vadd.f32 0.0, %v3538
      %v3540 = vpop.f32.mrb[0].mxu0
      %v3541 = vpop.f32.mrb[0].mxu0
      %v3542 = vadd.f32 0.0, %v3541
      %v3543 = vpop.f32.mrb[0].mxu0
      %3544 = vmatprep.mubr.bf16.mxu0 0
      %3545 = vmatmul.mubr.bf16.gmra.mrb[0].mxu0 %v3415
      %v3546 = vpop.f32.mrb[0].mxu0
      %v3547 = vadd.f32 0.0, %v3546
      %v3548 = vpop.f32.mrb[0].mxu0
      %v3549 = vpop.f32.mrb[0].mxu0
      %v3550 = vadd.f32 0.0, %v3549
      %v3551 = vpop.f32.mrb[0].mxu0
      %3552 = vmatprep.mubr.bf16.mxu0 0
      %3553 = vmatmul.mubr.bf16.gmra.mrb[0].mxu0 %v3416
      %v3554 = vpop.f32.mrb[0].mxu0
      %v3555 = vadd.f32 0.0, %v3554
      %v3556 = vpop.f32.mrb[0].mxu0
      %v3557 = vpop.f32.mrb[0].mxu0
      %v3558 = vadd.f32 0.0, %v3557
      %v3559 = vpop.f32.mrb[0].mxu0
      %3560 = vmatprep.mubr.bf16.mxu0 0
      %3561 = vmatmul.mubr.bf16.gmra.mrb[0].mxu0 %v3417
      %v3562 = vpop.f32.mrb[0].mxu0
      %v3563 = vadd.f32 0.0, %v3562
      %v3564 = vpop.f32.mrb[0].mxu0
      %v3565 = vpop.f32.mrb[0].mxu0
      %v3566 = vadd.f32 0.0, %v3565
      %v3567 = vpop.f32.mrb[0].mxu0
      %3568 = vmatprep.mubr.bf16.mxu0 0
      %3569 = vmatmul.mubr.bf16.gmra.mrb[0].mxu0 %v3418
      %v3570 = vpop.f32.mrb[0].mxu0
      %v3571 = vadd.f32 0.0, %v3570
      %v3572 = vpop.f32.mrb[0].mxu0
      %v3573 = vpop.f32.mrb[0].mxu0
      %v3574 = vadd.f32 0.0, %v3573
      %v3575 = vpop.f32.mrb[0].mxu0
      %3576 = vmatprep.mubr.bf16.mxu0 0
      %3577 = vmatmul.mubr.bf16.gmra.mrb[0].mxu0 %v3419
      %v3578 = vpop.f32.mrb[0].mxu0
      %v3579 = vadd.f32 0.0, %v3578
      %v3580 = vpop.f32.mrb[0].mxu0
      %v3581 = vpop.f32.mrb[0].mxu0
      %v3582 = vadd.f32 0.0, %v3581
      %v3583 = vpop.f32.mrb[0].mxu0
      %3584 = vmatprep.mubr.bf16.mxu0 0
      %3585 = vmatmul.mubr.bf16.gmra.mrb[0].mxu0 %v3420
      %v3586 = vpop.f32.mrb[0].mxu0
      %v3587 = vadd.f32 0.0, %v3586
      %v3588 = vpop.f32.mrb[0].mxu0
      %v3589 = vpop.f32.mrb[0].mxu0
      %v3590 = vadd.f32 0.0, %v3589
      %v3591 = vpop.f32.mrb[0].mxu0
      %3592 = vmatprep.mubr.bf16.mxu0 0
      %3593 = vmatmul.mubr.bf16.gmra.mrb[0].mxu0 %v3421
      %v3594 = vpop.f32.mrb[0].mxu0
      %v3595 = vadd.f32 0.0, %v3594
      %v3596 = vpop.f32.mrb[0].mxu0
      %v3597 = vpop.f32.mrb[0].mxu0
      %v3598 = vadd.f32 0.0, %v3597
      %v3599 = vpop.f32.mrb[0].mxu0
      %3600 = vdwg.mxu0
      %v3617 = vunpack.c.l.b16 %v3423
      %v3618 = vunpack.c.l.b16 %v3424
      %v3619 = vunpack.c.l.b16 %v3425
      %v3620 = vunpack.c.l.b16 %v3426
      %v3621 = vunpack.c.l.b16 %v3427
      %v3622 = vunpack.c.l.b16 %v3428
      %v3623 = vunpack.c.l.b16 %v3429
      %v3624 = vunpack.c.l.b16 %v3430
      %v3625 = vunpack.c.l.b16 %v3431
      %v3626 = vunpack.c.l.b16 %v3432
      %v3627 = vunpack.c.l.b16 %v3433
      %v3628 = vunpack.c.l.b16 %v3434
      %v3629 = vunpack.c.l.b16 %v3435
      %v3630 = vunpack.c.l.b16 %v3436
      %v3631 = vunpack.c.l.b16 %v3437
      %v3632 = vunpack.c.l.b16 %v3438
      %v3633 = vpack.c.b16 %v3618, %v3617
      %v3634 = vpack.c.b16 %v3620, %v3619
      %v3635 = vpack.c.b16 %v3622, %v3621
      %v3636 = vpack.c.b16 %v3624, %v3623
      %v3637 = vpack.c.b16 %v3626, %v3625
      %v3638 = vpack.c.b16 %v3628, %v3627
      %v3639 = vpack.c.b16 %v3630, %v3629
      %v3640 = vpack.c.b16 %v3632, %v3631
      %3649 = vmatprep.subr.bf16.mxu0 0
      %3650 = vmatpush1.bf16.msra.mxu0 %v3633
      %3651 = vmatprep.subr.bf16.mxu0 0
      %3652 = vmatpush1.bf16.msra.mxu0 %v3634
      %3653 = vmatprep.subr.bf16.mxu0 0
      %3654 = vmatpush1.bf16.msra.mxu0 %v3635
      %3655 = vmatprep.subr.bf16.mxu0 0
      %3656 = vmatpush1.bf16.msra.mxu0 %v3636
      %3657 = vmatprep.subr.bf16.mxu0 0
      %3658 = vmatpush1.bf16.msra.mxu0 %v3637
      %3659 = vmatprep.subr.bf16.mxu0 0
      %3660 = vmatpush1.bf16.msra.mxu0 %v3638
      %3661 = vmatprep.subr.bf16.mxu0 0
      %3662 = vmatpush1.bf16.msra.mxu0 %v3639
      %3663 = vmatprep.subr.bf16.mxu0 0
      %3664 = vmatpush1.bf16.msra.mxu0 %v3640
      %3665 = vmatprep.subr.bf16.mxu0 0
      %3666 = vmatpush1.bf16.msra.mxu0 0
      %3667 = vmatprep.subr.bf16.mxu0 0
      %3668 = vmatpush1.bf16.msra.mxu0 0
      %3669 = vmatprep.subr.bf16.mxu0 0
      %3670 = vmatpush1.bf16.msra.mxu0 0
      %3671 = vmatprep.subr.bf16.mxu0 0
      %3672 = vmatpush1.bf16.msra.mxu0 0
      %3673 = vmatprep.subr.bf16.mxu0 0
      %3674 = vmatpush1.bf16.msra.mxu0 0
      %3675 = vmatprep.subr.bf16.mxu0 0
      %3676 = vmatpush1.bf16.msra.mxu0 0
      %3677 = vmatprep.subr.bf16.mxu0 0
      %3678 = vmatpush1.bf16.msra.mxu0 0
      %3679 = vmatprep.subr.bf16.mxu0 0
      %3680 = vmatpush1.bf16.msra.mxu0 0
      %3681 = vmatprep.mubr.bf16.mxu0 0
      %3682 = vmatmul.mubr.bf16.gmra.mrb[0].mxu0 %v3406
      %v3683 = vpop.f32.mrb[0].mxu0
      %v3684 = vadd.f32 %v3539, %v3683
      %v3685 = vpop.f32.mrb[0].mxu0
      %v3686 = vpop.f32.mrb[0].mxu0
      %v3687 = vadd.f32 %v3542, %v3686
      %v3688 = vpop.f32.mrb[0].mxu0
      %3689 = vmatprep.mubr.bf16.mxu0 0
      %3690 = vmatmul.mubr.bf16.gmra.mrb[0].mxu0 %v3407
      %v3691 = vpop.f32.mrb[0].mxu0
      %v3692 = vadd.f32 %v3547, %v3691
      %v3693 = vpop.f32.mrb[0].mxu0
      %v3694 = vpop.f32.mrb[0].mxu0
      %v3695 = vadd.f32 %v3550, %v3694
      %v3696 = vpop.f32.mrb[0].mxu0
      %3697 = vmatprep.mubr.bf16.mxu0 0
      %3698 = vmatmul.mubr.bf16.gmra.mrb[0].mxu0 %v3408
      %v3699 = vpop.f32.mrb[0].mxu0
      %v3700 = vadd.f32 %v3555, %v3699
      %v3701 = vpop.f32.mrb[0].mxu0
      %v3702 = vpop.f32.mrb[0].mxu0
      %v3703 = vadd.f32 %v3558, %v3702
      %v3704 = vpop.f32.mrb[0].mxu0
      %3705 = vmatprep.mubr.bf16.mxu0 0
      %3706 = vmatmul.mubr.bf16.gmra.mrb[0].mxu0 %v3409
      %v3707 = vpop.f32.mrb[0].mxu0
      %v3708 = vadd.f32 %v3563, %v3707
      %v3709 = vpop.f32.mrb[0].mxu0
      %v3710 = vpop.f32.mrb[0].mxu0
      %v3711 = vadd.f32 %v3566, %v3710
      %v3712 = vpop.f32.mrb[0].mxu0
      %3713 = vmatprep.mubr.bf16.mxu0 0
      %3714 = vmatmul.mubr.bf16.gmra.mrb[0].mxu0 %v3410
      %v3715 = vpop.f32.mrb[0].mxu0
      %v3716 = vadd.f32 %v3571, %v3715
      %v3717 = vpop.f32.mrb[0].mxu0
      %v3718 = vpop.f32.mrb[0].mxu0
      %v3719 = vadd.f32 %v3574, %v3718
      %v3720 = vpop.f32.mrb[0].mxu0
      %3721 = vmatprep.mubr.bf16.mxu0 0
      %3722 = vmatmul.mubr.bf16.gmra.mrb[0].mxu0 %v3411
      %v3723 = vpop.f32.mrb[0].mxu0
      %v3724 = vadd.f32 %v3579, %v3723
      %v3725 = vpop.f32.mrb[0].mxu0
      %v3726 = vpop.f32.mrb[0].mxu0
      %v3727 = vadd.f32 %v3582, %v3726
      %v3728 = vpop.f32.mrb[0].mxu0
      %3729 = vmatprep.mubr.bf16.mxu0 0
      %3730 = vmatmul.mubr.bf16.gmra.mrb[0].mxu0 %v3412
      %v3731 = vpop.f32.mrb[0].mxu0
      %v3732 = vadd.f32 %v3587, %v3731
      %v3733 = vpop.f32.mrb[0].mxu0
      %v3734 = vpop.f32.mrb[0].mxu0
      %v3735 = vadd.f32 %v3590, %v3734
      %v3736 = vpop.f32.mrb[0].mxu0
      %3737 = vmatprep.mubr.bf16.mxu0 0
      %3738 = vmatmul.mubr.bf16.gmra.mrb[0].mxu0 %v3413
      %v3739 = vpop.f32.mrb[0].mxu0
      %v3740 = vadd.f32 %v3595, %v3739
      %v3741 = vpop.f32.mrb[0].mxu0
      %v3742 = vpop.f32.mrb[0].mxu0
      %v3743 = vadd.f32 %v3598, %v3742
      %v3744 = vpop.f32.mrb[0].mxu0
      %3745 = vdwg.mxu0
      %s3746 = scalar_lea.vmem %s7, 128
      %v3747 = vld [vmem:[%s3746] sm:$0xf]
      %v3748 = vld [vmem:[%s3746 + $0x4] sm:$0xf]
      %v3749 = vld [vmem:[%s3746 + $0x8] sm:$0xf]
      %v3750 = vld [vmem:[%s3746 + $0xc] sm:$0xf]
      %v3751 = vld [vmem:[%s3746 + $0x10] sm:$0xf]
      %v3752 = vld [vmem:[%s3746 + $0x14] sm:$0xf]
      %v3753 = vld [vmem:[%s3746 + $0x18] sm:$0xf]
      %v3754 = vld [vmem:[%s3746 + $0x1c] sm:$0xf]
      %v3755 = vld [vmem:[%s3746 + $0x20] sm:$0xf]
      %v3756 = vld [vmem:[%s3746 + $0x24] sm:$0xf]
      %v3757 = vld [vmem:[%s3746 + $0x28] sm:$0xf]
      %v3758 = vld [vmem:[%s3746 + $0x2c] sm:$0xf]
      %v3759 = vld [vmem:[%s3746 + $0x30] sm:$0xf]
      %v3760 = vld [vmem:[%s3746 + $0x34] sm:$0xf]
      %v3761 = vld [vmem:[%s3746 + $0x38] sm:$0xf]
      %v3762 = vld [vmem:[%s3746 + $0x3c] sm:$0xf]
      %v3779 = vunpack.c.l.b16 %v3747
      %v3780 = vunpack.c.l.b16 %v3748
      %v3781 = vunpack.c.l.b16 %v3749
      %v3782 = vunpack.c.l.b16 %v3750
      %v3783 = vunpack.c.l.b16 %v3751
      %v3784 = vunpack.c.l.b16 %v3752
      %v3785 = vunpack.c.l.b16 %v3753
      %v3786 = vunpack.c.l.b16 %v3754
      %v3787 = vunpack.c.l.b16 %v3755
      %v3788 = vunpack.c.l.b16 %v3756
      %v3789 = vunpack.c.l.b16 %v3757
      %v3790 = vunpack.c.l.b16 %v3758
      %v3791 = vunpack.c.l.b16 %v3759
      %v3792 = vunpack.c.l.b16 %v3760
      %v3793 = vunpack.c.l.b16 %v3761
      %v3794 = vunpack.c.l.b16 %v3762
      %v3795 = vpack.c.b16 %v3780, %v3779
      %v3796 = vpack.c.b16 %v3782, %v3781
      %v3797 = vpack.c.b16 %v3784, %v3783
      %v3798 = vpack.c.b16 %v3786, %v3785
      %v3799 = vpack.c.b16 %v3788, %v3787
      %v3800 = vpack.c.b16 %v3790, %v3789
      %v3801 = vpack.c.b16 %v3792, %v3791
      %v3802 = vpack.c.b16 %v3794, %v3793
      %3811 = vmatprep.subr.bf16.mxu0 0
      %3812 = vmatpush1.bf16.msra.mxu0 %v3795
      %3813 = vmatprep.subr.bf16.mxu0 0
      %3814 = vmatpush1.bf16.msra.mxu0 %v3796
      %3815 = vmatprep.subr.bf16.mxu0 0
      %3816 = vmatpush1.bf16.msra.mxu0 %v3797
      %3817 = vmatprep.subr.bf16.mxu0 0
      %3818 = vmatpush1.bf16.msra.mxu0 %v3798
      %3819 = vmatprep.subr.bf16.mxu0 0
      %3820 = vmatpush1.bf16.msra.mxu0 %v3799
      %3821 = vmatprep.subr.bf16.mxu0 0
      %3822 = vmatpush1.bf16.msra.mxu0 %v3800
      %3823 = vmatprep.subr.bf16.mxu0 0
      %3824 = vmatpush1.bf16.msra.mxu0 %v3801
      %3825 = vmatprep.subr.bf16.mxu0 0
      %3826 = vmatpush1.bf16.msra.mxu0 %v3802
      %3827 = vmatprep.subr.bf16.mxu0 0
      %3828 = vmatpush1.bf16.msra.mxu0 0
      %3829 = vmatprep.subr.bf16.mxu0 0
      %3830 = vmatpush1.bf16.msra.mxu0 0
      %3831 = vmatprep.subr.bf16.mxu0 0
      %3832 = vmatpush1.bf16.msra.mxu0 0
      %3833 = vmatprep.subr.bf16.mxu0 0
      %3834 = vmatpush1.bf16.msra.mxu0 0
      %3835 = vmatprep.subr.bf16.mxu0 0
      %3836 = vmatpush1.bf16.msra.mxu0 0
      %3837 = vmatprep.subr.bf16.mxu0 0
      %3838 = vmatpush1.bf16.msra.mxu0 0
      %3839 = vmatprep.subr.bf16.mxu0 0
      %3840 = vmatpush1.bf16.msra.mxu0 0
      %3841 = vmatprep.subr.bf16.mxu0 0
      %3842 = vmatpush1.bf16.msra.mxu0 0
      %3843 = vmatprep.mubr.bf16.mxu0 0
      %3844 = vmatmul.mubr.bf16.gmra.mrb[0].mxu0 %v3407
      %v3845 = vpop.f32.mrb[0].mxu0
      %v3846 = vadd.f32 0.0, %v3845
      %v3847 = vpop.f32.mrb[0].mxu0
      %v3848 = vpop.f32.mrb[0].mxu0
      %v3849 = vadd.f32 0.0, %v3848
      %v3850 = vpop.f32.mrb[0].mxu0
      %3851 = vmatprep.mubr.bf16.mxu0 0
      %3852 = vmatmul.mubr.bf16.gmra.mrb[0].mxu0 %v3408
      %v3853 = vpop.f32.mrb[0].mxu0
      %v3854 = vadd.f32 0.0, %v3853
      %v3855 = vpop.f32.mrb[0].mxu0
      %v3856 = vpop.f32.mrb[0].mxu0
      %v3857 = vadd.f32 0.0, %v3856
      %v3858 = vpop.f32.mrb[0].mxu0
      %3859 = vmatprep.mubr.bf16.mxu0 0
      %3860 = vmatmul.mubr.bf16.gmra.mrb[0].mxu0 %v3409
      %v3861 = vpop.f32.mrb[0].mxu0
      %v3862 = vadd.f32 0.0, %v3861
      %v3863 = vpop.f32.mrb[0].mxu0
      %v3864 = vpop.f32.mrb[0].mxu0
      %v3865 = vadd.f32 0.0, %v3864
      %v3866 = vpop.f32.mrb[0].mxu0
      %3867 = vmatprep.mubr.bf16.mxu0 0
      %3868 = vmatmul.mubr.bf16.gmra.mrb[0].mxu0 %v3410
      %v3869 = vpop.f32.mrb[0].mxu0
      %v3870 = vadd.f32 0.0, %v3869
      %v3871 = vpop.f32.mrb[0].mxu0
      %v3872 = vpop.f32.mrb[0].mxu0
      %v3873 = vadd.f32 0.0, %v3872
      %v3874 = vpop.f32.mrb[0].mxu0
      %3875 = vmatprep.mubr.bf16.mxu0 0
      %3876 = vmatmul.mubr.bf16.gmra.mrb[0].mxu0 %v3411
      %v3877 = vpop.f32.mrb[0].mxu0
      %v3878 = vadd.f32 0.0, %v3877
      %v3879 = vpop.f32.mrb[0].mxu0
      %v3880 = vpop.f32.mrb[0].mxu0
      %v3881 = vadd.f32 0.0, %v3880
      %v3882 = vpop.f32.mrb[0].mxu0
      %3883 = vmatprep.mubr.bf16.mxu0 0
      %3884 = vmatmul.mubr.bf16.gmra.mrb[0].mxu0 %v3412
      %v3885 = vpop.f32.mrb[0].mxu0
      %v3886 = vadd.f32 0.0, %v3885
      %v3887 = vpop.f32.mrb[0].mxu0
      %v3888 = vpop.f32.mrb[0].mxu0
      %v3889 = vadd.f32 0.0, %v3888
      %v3890 = vpop.f32.mrb[0].mxu0
      %3891 = vmatprep.mubr.bf16.mxu0 0
      %3892 = vmatmul.mubr.bf16.gmra.mrb[0].mxu0 %v3413
      %v3893 = vpop.f32.mrb[0].mxu0
      %v3894 = vadd.f32 0.0, %v3893
      %v3895 = vpop.f32.mrb[0].mxu0
      %v3896 = vpop.f32.mrb[0].mxu0
      %v3897 = vadd.f32 0.0, %v3896
      %v3898 = vpop.f32.mrb[0].mxu0
      %3899 = vmatprep.mubr.bf16.mxu0 0
      %3900 = vmatmul.mubr.bf16.gmra.mrb[0].mxu0 %v3422
      %v3901 = vpop.f32.mrb[0].mxu0
      %v3902 = vadd.f32 0.0, %v3901
      %v3903 = vpop.f32.mrb[0].mxu0
      %v3904 = vpop.f32.mrb[0].mxu0
      %v3905 = vadd.f32 0.0, %v3904
      %v3906 = vpop.f32.mrb[0].mxu0
      %3907 = vdwg.mxu0
      %v3908 = vadd.f32 %v3684, %v3846
      %v3909 = vadd.f32 %v3687, %v3849
      %v3910 = vadd.f32 %v3692, %v3854
      %v3911 = vadd.f32 %v3695, %v3857
      %v3912 = vadd.f32 %v3700, %v3862
      %v3913 = vadd.f32 %v3703, %v3865
      %v3914 = vadd.f32 %v3708, %v3870
      %v3915 = vadd.f32 %v3711, %v3873
      %v3916 = vadd.f32 %v3716, %v3878
      %v3917 = vadd.f32 %v3719, %v3881
      %v3918 = vadd.f32 %v3724, %v3886
      %v3919 = vadd.f32 %v3727, %v3889
      %v3920 = vadd.f32 %v3732, %v3894
      %v3921 = vadd.f32 %v3735, %v3897
      %v3922 = vadd.f32 %v3740, %v3902
      %v3923 = vadd.f32 %v3743, %v3905
      %v3924 = vld [vmem:[%s8] sm:$0x1]
      %v3926 = vlaneseq
      %v3927 = vshrl.u32 %v3926, 7
      %v3928 = vsub.s32 0, %v3927
      %v3929 = vrot.slane %v3924, %v3928
      %v3931 = vadd.f32 %v3908, %v3929
      %v3932 = vadd.f32 %v3909, %v3929
      %v3933 = vadd.f32 %v3910, %v3929
      %v3934 = vadd.f32 %v3911, %v3929
      %v3935 = vadd.f32 %v3912, %v3929
      %v3936 = vadd.f32 %v3913, %v3929
      %v3937 = vadd.f32 %v3914, %v3929
      %v3938 = vadd.f32 %v3915, %v3929
      %v3939 = vadd.f32 %v3916, %v3929
      %v3940 = vadd.f32 %v3917, %v3929
      %v3941 = vadd.f32 %v3918, %v3929
      %v3942 = vadd.f32 %v3919, %v3929
      %v3943 = vadd.f32 %v3920, %v3929
      %v3944 = vadd.f32 %v3921, %v3929
      %v3945 = vadd.f32 %v3922, %v3929
      %v3946 = vadd.f32 %v3923, %v3929
      %v3947 = vmax.f32 %v3931, 0.0
      %v3948 = vmax.f32 %v3932, 0.0
      %v3949 = vmax.f32 %v3933, 0.0
      %v3950 = vmax.f32 %v3934, 0.0
      %v3951 = vmax.f32 %v3935, 0.0
      %v3952 = vmax.f32 %v3936, 0.0
      %v3953 = vmax.f32 %v3937, 0.0
      %v3954 = vmax.f32 %v3938, 0.0
      %v3955 = vmax.f32 %v3939, 0.0
      %v3956 = vmax.f32 %v3940, 0.0
      %v3957 = vmax.f32 %v3941, 0.0
      %v3958 = vmax.f32 %v3942, 0.0
      %v3959 = vmax.f32 %v3943, 0.0
      %v3960 = vmax.f32 %v3944, 0.0
      %v3961 = vmax.f32 %v3945, 0.0
      %v3962 = vmax.f32 %v3946, 0.0
      %v3963 = vpack.c.bf16 %v3948, %v3947
      %v3964 = vpack.c.bf16 %v3950, %v3949
      %v3965 = vpack.c.bf16 %v3952, %v3951
      %v3966 = vpack.c.bf16 %v3954, %v3953
      %v3967 = vpack.c.bf16 %v3956, %v3955
      %v3968 = vpack.c.bf16 %v3958, %v3957
      %v3969 = vpack.c.bf16 %v3960, %v3959
      %v3970 = vpack.c.bf16 %v3962, %v3961
      %3971 = vst [vmem:[#allocation5 + $0x8] sm:$0xff] %v3963
      %3972 = vst [vmem:[#allocation5 + $0x10] sm:$0xff] %v3964
      %3973 = vst [vmem:[#allocation5 + $0x18] sm:$0xff] %v3965
      %3974 = vst [vmem:[#allocation5 + $0x20] sm:$0xff] %v3966
      %3975 = vst [vmem:[#allocation5 + $0x28] sm:$0xff] %v3967
      %3976 = vst [vmem:[#allocation5 + $0x30] sm:$0xff] %v3968
      %3977 = vst [vmem:[#allocation5 + $0x38] sm:$0xff] %v3969
      %3978 = vst [vmem:[#allocation5 + $0x40] sm:$0xff] %v3970
      %v3979 = vld [vmem:[#allocation4 + $0x48] sm:$0xff]
      %v3980 = vld [vmem:[#allocation4 + $0x50] sm:$0xff]
      %v3981 = vld [vmem:[#allocation4 + $0x58] sm:$0xff]
      %v3982 = vld [vmem:[#allocation4 + $0x60] sm:$0xff]
      %v3983 = vld [vmem:[#allocation4 + $0x68] sm:$0xff]
      %v3984 = vld [vmem:[#allocation4 + $0x70] sm:$0xff]
      %v3985 = vld [vmem:[#allocation4 + $0x78] sm:$0xff]
      %v3986 = vld [vmem:[#allocation4 + $0x80] sm:$0xff]
      %v3987 = vld [vmem:[%s9] sm:$0xf]
      %v3988 = vld [vmem:[%s9 + $0x4] sm:$0xf]
      %v3989 = vld [vmem:[%s9 + $0x8] sm:$0xf]
      %v3990 = vld [vmem:[%s9 + $0xc] sm:$0xf]
      %v3991 = vld [vmem:[%s9 + $0x10] sm:$0xf]
      %v3992 = vld [vmem:[%s9 + $0x14] sm:$0xf]
      %v3993 = vld [vmem:[%s9 + $0x18] sm:$0xf]
      %v3994 = vld [vmem:[%s9 + $0x1c] sm:$0xf]
      %v3995 = vld [vmem:[%s9 + $0x20] sm:$0xf]
      %v3996 = vld [vmem:[%s9 + $0x24] sm:$0xf]
      %v3997 = vld [vmem:[%s9 + $0x28] sm:$0xf]
      %v3998 = vld [vmem:[%s9 + $0x2c] sm:$0xf]
      %v3999 = vld [vmem:[%s9 + $0x30] sm:$0xf]
      %v4000 = vld [vmem:[%s9 + $0x34] sm:$0xf]
      %v4001 = vld [vmem:[%s9 + $0x38] sm:$0xf]
      %v4002 = vld [vmem:[%s9 + $0x3c] sm:$0xf]
      %v4003 = vld [vmem:[%s10] sm:$0x1]
      %v4005 = vlaneseq
      %v4006 = vshrl.u32 %v4005, 7
      %v4007 = vsub.s32 0, %v4006
      %v4008 = vrot.slane %v4003, %v4007
      %v4026 = vunpack.c.l.b16 %v3987
      %v4027 = vunpack.c.l.b16 %v3988
      %v4028 = vunpack.c.l.b16 %v3989
      %v4029 = vunpack.c.l.b16 %v3990
      %v4030 = vunpack.c.l.b16 %v3991
      %v4031 = vunpack.c.l.b16 %v3992
      %v4032 = vunpack.c.l.b16 %v3993
      %v4033 = vunpack.c.l.b16 %v3994
      %v4034 = vunpack.c.l.b16 %v3995
      %v4035 = vunpack.c.l.b16 %v3996
      %v4036 = vunpack.c.l.b16 %v3997
      %v4037 = vunpack.c.l.b16 %v3998
      %v4038 = vunpack.c.l.b16 %v3999
      %v4039 = vunpack.c.l.b16 %v4000
      %v4040 = vunpack.c.l.b16 %v4001
      %v4041 = vunpack.c.l.b16 %v4002
      %v4042 = vpack.c.b16 %v4027, %v4026
      %v4043 = vpack.c.b16 %v4029, %v4028
      %v4044 = vpack.c.b16 %v4031, %v4030
      %v4045 = vpack.c.b16 %v4033, %v4032
      %v4046 = vpack.c.b16 %v4035, %v4034
      %v4047 = vpack.c.b16 %v4037, %v4036
      %v4048 = vpack.c.b16 %v4039, %v4038
      %v4049 = vpack.c.b16 %v4041, %v4040
      %4058 = vmatprep.subr.bf16.mxu0 0
      %4059 = vmatpush1.bf16.msra.mxu0 %v4042
      %4060 = vmatprep.subr.bf16.mxu0 0
      %4061 = vmatpush1.bf16.msra.mxu0 %v4043
      %4062 = vmatprep.subr.bf16.mxu0 0
      %4063 = vmatpush1.bf16.msra.mxu0 %v4044
      %4064 = vmatprep.subr.bf16.mxu0 0
      %4065 = vmatpush1.bf16.msra.mxu0 %v4045
      %4066 = vmatprep.subr.bf16.mxu0 0
      %4067 = vmatpush1.bf16.msra.mxu0 %v4046
      %4068 = vmatprep.subr.bf16.mxu0 0
      %4069 = vmatpush1.bf16.msra.mxu0 %v4047
      %4070 = vmatprep.subr.bf16.mxu0 0
      %4071 = vmatpush1.bf16.msra.mxu0 %v4048
      %4072 = vmatprep.subr.bf16.mxu0 0
      %4073 = vmatpush1.bf16.msra.mxu0 %v4049
      %4074 = vmatprep.subr.bf16.mxu0 0
      %4075 = vmatpush1.bf16.msra.mxu0 0
      %4076 = vmatprep.subr.bf16.mxu0 0
      %4077 = vmatpush1.bf16.msra.mxu0 0
      %4078 = vmatprep.subr.bf16.mxu0 0
      %4079 = vmatpush1.bf16.msra.mxu0 0
      %4080 = vmatprep.subr.bf16.mxu0 0
      %4081 = vmatpush1.bf16.msra.mxu0 0
      %4082 = vmatprep.subr.bf16.mxu0 0
      %4083 = vmatpush1.bf16.msra.mxu0 0
      %4084 = vmatprep.subr.bf16.mxu0 0
      %4085 = vmatpush1.bf16.msra.mxu0 0
      %4086 = vmatprep.subr.bf16.mxu0 0
      %4087 = vmatpush1.bf16.msra.mxu0 0
      %4088 = vmatprep.subr.bf16.mxu0 0
      %4089 = vmatpush1.bf16.msra.mxu0 0
      %4090 = vmatprep.mubr.bf16.mxu0 0
      %4091 = vmatmul.mubr.bf16.gmra.mrb[0].mxu0 %v3979
      %v4092 = vpop.f32.mrb[0].mxu0
      %v4093 = vadd.f32 %v4008, %v4092
      %v4094 = vpop.f32.mrb[0].mxu0
      %v4095 = vpop.f32.mrb[0].mxu0
      %v4096 = vadd.f32 %v4008, %v4095
      %v4097 = vpop.f32.mrb[0].mxu0
      %4098 = vmatprep.mubr.bf16.mxu0 0
      %4099 = vmatmul.mubr.bf16.gmra.mrb[0].mxu0 %v3980
      %v4100 = vpop.f32.mrb[0].mxu0
      %v4101 = vadd.f32 %v4008, %v4100
      %v4102 = vpop.f32.mrb[0].mxu0
      %v4103 = vpop.f32.mrb[0].mxu0
      %v4104 = vadd.f32 %v4008, %v4103
      %v4105 = vpop.f32.mrb[0].mxu0
      %4106 = vmatprep.mubr.bf16.mxu0 0
      %4107 = vmatmul.mubr.bf16.gmra.mrb[0].mxu0 %v3981
      %v4108 = vpop.f32.mrb[0].mxu0
      %v4109 = vadd.f32 %v4008, %v4108
      %v4110 = vpop.f32.mrb[0].mxu0
      %v4111 = vpop.f32.mrb[0].mxu0
      %v4112 = vadd.f32 %v4008, %v4111
      %v4113 = vpop.f32.mrb[0].mxu0
      %4114 = vmatprep.mubr.bf16.mxu0 0
      %4115 = vmatmul.mubr.bf16.gmra.mrb[0].mxu0 %v3982
      %v4116 = vpop.f32.mrb[0].mxu0
      %v4117 = vadd.f32 %v4008, %v4116
      %v4118 = vpop.f32.mrb[0].mxu0
      %v4119 = vpop.f32.mrb[0].mxu0
      %v4120 = vadd.f32 %v4008, %v4119
      %v4121 = vpop.f32.mrb[0].mxu0
      %4122 = vmatprep.mubr.bf16.mxu0 0
      %4123 = vmatmul.mubr.bf16.gmra.mrb[0].mxu0 %v3983
      %v4124 = vpop.f32.mrb[0].mxu0
      %v4125 = vadd.f32 %v4008, %v4124
      %v4126 = vpop.f32.mrb[0].mxu0
      %v4127 = vpop.f32.mrb[0].mxu0
      %v4128 = vadd.f32 %v4008, %v4127
      %v4129 = vpop.f32.mrb[0].mxu0
      %4130 = vmatprep.mubr.bf16.mxu0 0
      %4131 = vmatmul.mubr.bf16.gmra.mrb[0].mxu0 %v3984
      %v4132 = vpop.f32.mrb[0].mxu0
      %v4133 = vadd.f32 %v4008, %v4132
      %v4134 = vpop.f32.mrb[0].mxu0
      %v4135 = vpop.f32.mrb[0].mxu0
      %v4136 = vadd.f32 %v4008, %v4135
      %v4137 = vpop.f32.mrb[0].mxu0
      %4138 = vmatprep.mubr.bf16.mxu0 0
      %4139 = vmatmul.mubr.bf16.gmra.mrb[0].mxu0 %v3985
      %v4140 = vpop.f32.mrb[0].mxu0
      %v4141 = vadd.f32 %v4008, %v4140
      %v4142 = vpop.f32.mrb[0].mxu0
      %v4143 = vpop.f32.mrb[0].mxu0
      %v4144 = vadd.f32 %v4008, %v4143
      %v4145 = vpop.f32.mrb[0].mxu0
      %4146 = vmatprep.mubr.bf16.mxu0 0
      %4147 = vmatmul.mubr.bf16.gmra.mrb[0].mxu0 %v3986
      %v4148 = vpop.f32.mrb[0].mxu0
      %v4149 = vadd.f32 %v4008, %v4148
      %v4150 = vpop.f32.mrb[0].mxu0
      %v4151 = vpop.f32.mrb[0].mxu0
      %v4152 = vadd.f32 %v4008, %v4151
      %v4153 = vpop.f32.mrb[0].mxu0
      %4154 = vdwg.mxu0
      %v4155 = vld [vmem:[#allocation5] sm:$0xff]
      %v4156 = vld [vmem:[#allocation5 + $0x8] sm:$0xff]
      %v4157 = vld [vmem:[#allocation5 + $0x10] sm:$0xff]
      %v4158 = vld [vmem:[#allocation5 + $0x18] sm:$0xff]
      %v4159 = vld [vmem:[#allocation5 + $0x20] sm:$0xff]
      %v4160 = vld [vmem:[#allocation5 + $0x28] sm:$0xff]
      %v4161 = vld [vmem:[#allocation5 + $0x30] sm:$0xff]
      %v4162 = vld [vmem:[#allocation5 + $0x38] sm:$0xff]
      %v4163 = vld [vmem:[#allocation5 + $0x40] sm:$0xff]
      %v4164 = vld [vmem:[#allocation5 + $0x10] sm:$0xff]
      %v4165 = vld [vmem:[#allocation5 + $0x18] sm:$0xff]
      %v4166 = vld [vmem:[#allocation5 + $0x20] sm:$0xff]
      %v4167 = vld [vmem:[#allocation5 + $0x28] sm:$0xff]
      %v4168 = vld [vmem:[#allocation5 + $0x30] sm:$0xff]
      %v4169 = vld [vmem:[#allocation5 + $0x38] sm:$0xff]
      %v4170 = vld [vmem:[#allocation5 + $0x40] sm:$0xff]
      %v4171 = vld [vmem:[#allocation5 + $0x48] sm:$0xff]
      %v4172 = vld [vmem:[%s11] sm:$0xf]
      %v4173 = vld [vmem:[%s11 + $0x4] sm:$0xf]
      %v4174 = vld [vmem:[%s11 + $0x8] sm:$0xf]
      %v4175 = vld [vmem:[%s11 + $0xc] sm:$0xf]
      %v4176 = vld [vmem:[%s11 + $0x10] sm:$0xf]
      %v4177 = vld [vmem:[%s11 + $0x14] sm:$0xf]
      %v4178 = vld [vmem:[%s11 + $0x18] sm:$0xf]
      %v4179 = vld [vmem:[%s11 + $0x1c] sm:$0xf]
      %v4180 = vld [vmem:[%s11 + $0x20] sm:$0xf]
      %v4181 = vld [vmem:[%s11 + $0x24] sm:$0xf]
      %v4182 = vld [vmem:[%s11 + $0x28] sm:$0xf]
      %v4183 = vld [vmem:[%s11 + $0x2c] sm:$0xf]
      %v4184 = vld [vmem:[%s11 + $0x30] sm:$0xf]
      %v4185 = vld [vmem:[%s11 + $0x34] sm:$0xf]
      %v4186 = vld [vmem:[%s11 + $0x38] sm:$0xf]
      %v4187 = vld [vmem:[%s11 + $0x3c] sm:$0xf]
      %s4188 = scalar_lea.vmem %s11, 64
      %v4189 = vld [vmem:[%s4188] sm:$0xf]
      %v4190 = vld [vmem:[%s4188 + $0x4] sm:$0xf]
      %v4191 = vld [vmem:[%s4188 + $0x8] sm:$0xf]
      %v4192 = vld [vmem:[%s4188 + $0xc] sm:$0xf]
      %v4193 = vld [vmem:[%s4188 + $0x10] sm:$0xf]
      %v4194 = vld [vmem:[%s4188 + $0x14] sm:$0xf]
      %v4195 = vld [vmem:[%s4188 + $0x18] sm:$0xf]
      %v4196 = vld [vmem:[%s4188 + $0x1c] sm:$0xf]
      %v4197 = vld [vmem:[%s4188 + $0x20] sm:$0xf]
      %v4198 = vld [vmem:[%s4188 + $0x24] sm:$0xf]
      %v4199 = vld [vmem:[%s4188 + $0x28] sm:$0xf]
      %v4200 = vld [vmem:[%s4188 + $0x2c] sm:$0xf]
      %v4201 = vld [vmem:[%s4188 + $0x30] sm:$0xf]
      %v4202 = vld [vmem:[%s4188 + $0x34] sm:$0xf]
      %v4203 = vld [vmem:[%s4188 + $0x38] sm:$0xf]
      %v4204 = vld [vmem:[%s4188 + $0x3c] sm:$0xf]
      %v4221 = vunpack.c.l.b16 %v4189
      %v4222 = vunpack.c.l.b16 %v4190
      %v4223 = vunpack.c.l.b16 %v4191
      %v4224 = vunpack.c.l.b16 %v4192
      %v4225 = vunpack.c.l.b16 %v4193
      %v4226 = vunpack.c.l.b16 %v4194
      %v4227 = vunpack.c.l.b16 %v4195
      %v4228 = vunpack.c.l.b16 %v4196
      %v4229 = vunpack.c.l.b16 %v4197
      %v4230 = vunpack.c.l.b16 %v4198
      %v4231 = vunpack.c.l.b16 %v4199
      %v4232 = vunpack.c.l.b16 %v4200
      %v4233 = vunpack.c.l.b16 %v4201
      %v4234 = vunpack.c.l.b16 %v4202
      %v4235 = vunpack.c.l.b16 %v4203
      %v4236 = vunpack.c.l.b16 %v4204
      %v4237 = vpack.c.b16 %v4222, %v4221
      %v4238 = vpack.c.b16 %v4224, %v4223
      %v4239 = vpack.c.b16 %v4226, %v4225
      %v4240 = vpack.c.b16 %v4228, %v4227
      %v4241 = vpack.c.b16 %v4230, %v4229
      %v4242 = vpack.c.b16 %v4232, %v4231
      %v4243 = vpack.c.b16 %v4234, %v4233
      %v4244 = vpack.c.b16 %v4236, %v4235
      %4253 = vmatprep.subr.bf16.mxu0 0
      %4254 = vmatpush1.bf16.msra.mxu0 %v4237
      %4255 = vmatprep.subr.bf16.mxu0 0
      %4256 = vmatpush1.bf16.msra.mxu0 %v4238
      %4257 = vmatprep.subr.bf16.mxu0 0
      %4258 = vmatpush1.bf16.msra.mxu0 %v4239
      %4259 = vmatprep.subr.bf16.mxu0 0
      %4260 = vmatpush1.bf16.msra.mxu0 %v4240
      %4261 = vmatprep.subr.bf16.mxu0 0
      %4262 = vmatpush1.bf16.msra.mxu0 %v4241
      %4263 = vmatprep.subr.bf16.mxu0 0
      %4264 = vmatpush1.bf16.msra.mxu0 %v4242
      %4265 = vmatprep.subr.bf16.mxu0 0
      %4266 = vmatpush1.bf16.msra.mxu0 %v4243
      %4267 = vmatprep.subr.bf16.mxu0 0
      %4268 = vmatpush1.bf16.msra.mxu0 %v4244
      %4269 = vmatprep.subr.bf16.mxu0 0
      %4270 = vmatpush1.bf16.msra.mxu0 0
      %4271 = vmatprep.subr.bf16.mxu0 0
      %4272 = vmatpush1.bf16.msra.mxu0 0
      %4273 = vmatprep.subr.bf16.mxu0 0
      %4274 = vmatpush1.bf16.msra.mxu0 0
      %4275 = vmatprep.subr.bf16.mxu0 0
      %4276 = vmatpush1.bf16.msra.mxu0 0
      %4277 = vmatprep.subr.bf16.mxu0 0
      %4278 = vmatpush1.bf16.msra.mxu0 0
      %4279 = vmatprep.subr.bf16.mxu0 0
      %4280 = vmatpush1.bf16.msra.mxu0 0
      %4281 = vmatprep.subr.bf16.mxu0 0
      %4282 = vmatpush1.bf16.msra.mxu0 0
      %4283 = vmatprep.subr.bf16.mxu0 0
      %4284 = vmatpush1.bf16.msra.mxu0 0
      %4285 = vmatprep.mubr.bf16.mxu0 0
      %4286 = vmatmul.mubr.bf16.gmra.mrb[0].mxu0 %v4156
      %v4287 = vpop.f32.mrb[0].mxu0
      %v4288 = vadd.f32 0.0, %v4287
      %v4289 = vpop.f32.mrb[0].mxu0
      %v4290 = vpop.f32.mrb[0].mxu0
      %v4291 = vadd.f32 0.0, %v4290
      %v4292 = vpop.f32.mrb[0].mxu0
      %4293 = vmatprep.mubr.bf16.mxu0 0
      %4294 = vmatmul.mubr.bf16.gmra.mrb[0].mxu0 %v4157
      %v4295 = vpop.f32.mrb[0].mxu0
      %v4296 = vadd.f32 0.0, %v4295
      %v4297 = vpop.f32.mrb[0].mxu0
      %v4298 = vpop.f32.mrb[0].mxu0
      %v4299 = vadd.f32 0.0, %v4298
      %v4300 = vpop.f32.mrb[0].mxu0
      %4301 = vmatprep.mubr.bf16.mxu0 0
      %4302 = vmatmul.mubr.bf16.gmra.mrb[0].mxu0 %v4158
      %v4303 = vpop.f32.mrb[0].mxu0
      %v4304 = vadd.f32 0.0, %v4303
      %v4305 = vpop.f32.mrb[0].mxu0
      %v4306 = vpop.f32.mrb[0].mxu0
      %v4307 = vadd.f32 0.0, %v4306
      %v4308 = vpop.f32.mrb[0].mxu0
      %4309 = vmatprep.mubr.bf16.mxu0 0
      %4310 = vmatmul.mubr.bf16.gmra.mrb[0].mxu0 %v4159
      %v4311 = vpop.f32.mrb[0].mxu0
      %v4312 = vadd.f32 0.0, %v4311
      %v4313 = vpop.f32.mrb[0].mxu0
      %v4314 = vpop.f32.mrb[0].mxu0
      %v4315 = vadd.f32 0.0, %v4314
      %v4316 = vpop.f32.mrb[0].mxu0
      %4317 = vmatprep.mubr.bf16.mxu0 0
      %4318 = vmatmul.mubr.bf16.gmra.mrb[0].mxu0 %v4160
      %v4319 = vpop.f32.mrb[0].mxu0
      %v4320 = vadd.f32 0.0, %v4319
      %v4321 = vpop.f32.mrb[0].mxu0
      %v4322 = vpop.f32.mrb[0].mxu0
      %v4323 = vadd.f32 0.0, %v4322
      %v4324 = vpop.f32.mrb[0].mxu0
      %4325 = vmatprep.mubr.bf16.mxu0 0
      %4326 = vmatmul.mubr.bf16.gmra.mrb[0].mxu0 %v4161
      %v4327 = vpop.f32.mrb[0].mxu0
      %v4328 = vadd.f32 0.0, %v4327
      %v4329 = vpop.f32.mrb[0].mxu0
      %v4330 = vpop.f32.mrb[0].mxu0
      %v4331 = vadd.f32 0.0, %v4330
      %v4332 = vpop.f32.mrb[0].mxu0
      %4333 = vmatprep.mubr.bf16.mxu0 0
      %4334 = vmatmul.mubr.bf16.gmra.mrb[0].mxu0 %v4162
      %v4335 = vpop.f32.mrb[0].mxu0
      %v4336 = vadd.f32 0.0, %v4335
      %v4337 = vpop.f32.mrb[0].mxu0
      %v4338 = vpop.f32.mrb[0].mxu0
      %v4339 = vadd.f32 0.0, %v4338
      %v4340 = vpop.f32.mrb[0].mxu0
      %4341 = vmatprep.mubr.bf16.mxu0 0
      %4342 = vmatmul.mubr.bf16.gmra.mrb[0].mxu0 %v4163
      %v4343 = vpop.f32.mrb[0].mxu0
      %v4344 = vadd.f32 0.0, %v4343
      %v4345 = vpop.f32.mrb[0].mxu0
      %v4346 = vpop.f32.mrb[0].mxu0
      %v4347 = vadd.f32 0.0, %v4346
      %v4348 = vpop.f32.mrb[0].mxu0
      %4349 = vdwg.mxu0
      %v4366 = vunpack.c.l.b16 %v4172
      %v4367 = vunpack.c.l.b16 %v4173
      %v4368 = vunpack.c.l.b16 %v4174
      %v4369 = vunpack.c.l.b16 %v4175
      %v4370 = vunpack.c.l.b16 %v4176
      %v4371 = vunpack.c.l.b16 %v4177
      %v4372 = vunpack.c.l.b16 %v4178
      %v4373 = vunpack.c.l.b16 %v4179
      %v4374 = vunpack.c.l.b16 %v4180
      %v4375 = vunpack.c.l.b16 %v4181
      %v4376 = vunpack.c.l.b16 %v4182
      %v4377 = vunpack.c.l.b16 %v4183
      %v4378 = vunpack.c.l.b16 %v4184
      %v4379 = vunpack.c.l.b16 %v4185
      %v4380 = vunpack.c.l.b16 %v4186
      %v4381 = vunpack.c.l.b16 %v4187
      %v4382 = vpack.c.b16 %v4367, %v4366
      %v4383 = vpack.c.b16 %v4369, %v4368
      %v4384 = vpack.c.b16 %v4371, %v4370
      %v4385 = vpack.c.b16 %v4373, %v4372
      %v4386 = vpack.c.b16 %v4375, %v4374
      %v4387 = vpack.c.b16 %v4377, %v4376
      %v4388 = vpack.c.b16 %v4379, %v4378
      %v4389 = vpack.c.b16 %v4381, %v4380
      %4398 = vmatprep.subr.bf16.mxu0 0
      %4399 = vmatpush1.bf16.msra.mxu0 %v4382
      %4400 = vmatprep.subr.bf16.mxu0 0
      %4401 = vmatpush1.bf16.msra.mxu0 %v4383
      %4402 = vmatprep.subr.bf16.mxu0 0
      %4403 = vmatpush1.bf16.msra.mxu0 %v4384
      %4404 = vmatprep.subr.bf16.mxu0 0
      %4405 = vmatpush1.bf16.msra.mxu0 %v4385
      %4406 = vmatprep.subr.bf16.mxu0 0
      %4407 = vmatpush1.bf16.msra.mxu0 %v4386
      %4408 = vmatprep.subr.bf16.mxu0 0
      %4409 = vmatpush1.bf16.msra.mxu0 %v4387
      %4410 = vmatprep.subr.bf16.mxu0 0
      %4411 = vmatpush1.bf16.msra.mxu0 %v4388
      %4412 = vmatprep.subr.bf16.mxu0 0
      %4413 = vmatpush1.bf16.msra.mxu0 %v4389
      %4414 = vmatprep.subr.bf16.mxu0 0
      %4415 = vmatpush1.bf16.msra.mxu0 0
      %4416 = vmatprep.subr.bf16.mxu0 0
      %4417 = vmatpush1.bf16.msra.mxu0 0
      %4418 = vmatprep.subr.bf16.mxu0 0
      %4419 = vmatpush1.bf16.msra.mxu0 0
      %4420 = vmatprep.subr.bf16.mxu0 0
      %4421 = vmatpush1.bf16.msra.mxu0 0
      %4422 = vmatprep.subr.bf16.mxu0 0
      %4423 = vmatpush1.bf16.msra.mxu0 0
      %4424 = vmatprep.subr.bf16.mxu0 0
      %4425 = vmatpush1.bf16.msra.mxu0 0
      %4426 = vmatprep.subr.bf16.mxu0 0
      %4427 = vmatpush1.bf16.msra.mxu0 0
      %4428 = vmatprep.subr.bf16.mxu0 0
      %4429 = vmatpush1.bf16.msra.mxu0 0
      %4430 = vmatprep.mubr.bf16.mxu0 0
      %4431 = vmatmul.mubr.bf16.gmra.mrb[0].mxu0 %v4155
      %v4432 = vpop.f32.mrb[0].mxu0
      %v4433 = vadd.f32 %v4288, %v4432
      %v4434 = vpop.f32.mrb[0].mxu0
      %v4435 = vpop.f32.mrb[0].mxu0
      %v4436 = vadd.f32 %v4291, %v4435
      %v4437 = vpop.f32.mrb[0].mxu0
      %4438 = vmatprep.mubr.bf16.mxu0 0
      %4439 = vmatmul.mubr.bf16.gmra.mrb[0].mxu0 %v4156
      %v4440 = vpop.f32.mrb[0].mxu0
      %v4441 = vadd.f32 %v4296, %v4440
      %v4442 = vpop.f32.mrb[0].mxu0
      %v4443 = vpop.f32.mrb[0].mxu0
      %v4444 = vadd.f32 %v4299, %v4443
      %v4445 = vpop.f32.mrb[0].mxu0
      %4446 = vmatprep.mubr.bf16.mxu0 0
      %4447 = vmatmul.mubr.bf16.gmra.mrb[0].mxu0 %v4157
      %v4448 = vpop.f32.mrb[0].mxu0
      %v4449 = vadd.f32 %v4304, %v4448
      %v4450 = vpop.f32.mrb[0].mxu0
      %v4451 = vpop.f32.mrb[0].mxu0
      %v4452 = vadd.f32 %v4307, %v4451
      %v4453 = vpop.f32.mrb[0].mxu0
      %4454 = vmatprep.mubr.bf16.mxu0 0
      %4455 = vmatmul.mubr.bf16.gmra.mrb[0].mxu0 %v4158
      %v4456 = vpop.f32.mrb[0].mxu0
      %v4457 = vadd.f32 %v4312, %v4456
      %v4458 = vpop.f32.mrb[0].mxu0
      %v4459 = vpop.f32.mrb[0].mxu0
      %v4460 = vadd.f32 %v4315, %v4459
      %v4461 = vpop.f32.mrb[0].mxu0
      %4462 = vmatprep.mubr.bf16.mxu0 0
      %4463 = vmatmul.mubr.bf16.gmra.mrb[0].mxu0 %v4159
      %v4464 = vpop.f32.mrb[0].mxu0
      %v4465 = vadd.f32 %v4320, %v4464
      %v4466 = vpop.f32.mrb[0].mxu0
      %v4467 = vpop.f32.mrb[0].mxu0
      %v4468 = vadd.f32 %v4323, %v4467
      %v4469 = vpop.f32.mrb[0].mxu0
      %4470 = vmatprep.mubr.bf16.mxu0 0
      %4471 = vmatmul.mubr.bf16.gmra.mrb[0].mxu0 %v4160
      %v4472 = vpop.f32.mrb[0].mxu0
      %v4473 = vadd.f32 %v4328, %v4472
      %v4474 = vpop.f32.mrb[0].mxu0
      %v4475 = vpop.f32.mrb[0].mxu0
      %v4476 = vadd.f32 %v4331, %v4475
      %v4477 = vpop.f32.mrb[0].mxu0
      %4478 = vmatprep.mubr.bf16.mxu0 0
      %4479 = vmatmul.mubr.bf16.gmra.mrb[0].mxu0 %v4161
      %v4480 = vpop.f32.mrb[0].mxu0
      %v4481 = vadd.f32 %v4336, %v4480
      %v4482 = vpop.f32.mrb[0].mxu0
      %v4483 = vpop.f32.mrb[0].mxu0
      %v4484 = vadd.f32 %v4339, %v4483
      %v4485 = vpop.f32.mrb[0].mxu0
      %4486 = vmatprep.mubr.bf16.mxu0 0
      %4487 = vmatmul.mubr.bf16.gmra.mrb[0].mxu0 %v4162
      %v4488 = vpop.f32.mrb[0].mxu0
      %v4489 = vadd.f32 %v4344, %v4488
      %v4490 = vpop.f32.mrb[0].mxu0
      %v4491 = vpop.f32.mrb[0].mxu0
      %v4492 = vadd.f32 %v4347, %v4491
      %v4493 = vpop.f32.mrb[0].mxu0
      %4494 = vdwg.mxu0
      %s4495 = scalar_lea.vmem %s11, 128
      %v4496 = vld [vmem:[%s4495] sm:$0xf]
      %v4497 = vld [vmem:[%s4495 + $0x4] sm:$0xf]
      %v4498 = vld [vmem:[%s4495 + $0x8] sm:$0xf]
      %v4499 = vld [vmem:[%s4495 + $0xc] sm:$0xf]
      %v4500 = vld [vmem:[%s4495 + $0x10] sm:$0xf]
      %v4501 = vld [vmem:[%s4495 + $0x14] sm:$0xf]
      %v4502 = vld [vmem:[%s4495 + $0x18] sm:$0xf]
      %v4503 = vld [vmem:[%s4495 + $0x1c] sm:$0xf]
      %v4504 = vld [vmem:[%s4495 + $0x20] sm:$0xf]
      %v4505 = vld [vmem:[%s4495 + $0x24] sm:$0xf]
      %v4506 = vld [vmem:[%s4495 + $0x28] sm:$0xf]
      %v4507 = vld [vmem:[%s4495 + $0x2c] sm:$0xf]
      %v4508 = vld [vmem:[%s4495 + $0x30] sm:$0xf]
      %v4509 = vld [vmem:[%s4495 + $0x34] sm:$0xf]
      %v4510 = vld [vmem:[%s4495 + $0x38] sm:$0xf]
      %v4511 = vld [vmem:[%s4495 + $0x3c] sm:$0xf]
      %v4528 = vunpack.c.l.b16 %v4496
      %v4529 = vunpack.c.l.b16 %v4497
      %v4530 = vunpack.c.l.b16 %v4498
      %v4531 = vunpack.c.l.b16 %v4499
      %v4532 = vunpack.c.l.b16 %v4500
      %v4533 = vunpack.c.l.b16 %v4501
      %v4534 = vunpack.c.l.b16 %v4502
      %v4535 = vunpack.c.l.b16 %v4503
      %v4536 = vunpack.c.l.b16 %v4504
      %v4537 = vunpack.c.l.b16 %v4505
      %v4538 = vunpack.c.l.b16 %v4506
      %v4539 = vunpack.c.l.b16 %v4507
      %v4540 = vunpack.c.l.b16 %v4508
      %v4541 = vunpack.c.l.b16 %v4509
      %v4542 = vunpack.c.l.b16 %v4510
      %v4543 = vunpack.c.l.b16 %v4511
      %v4544 = vpack.c.b16 %v4529, %v4528
      %v4545 = vpack.c.b16 %v4531, %v4530
      %v4546 = vpack.c.b16 %v4533, %v4532
      %v4547 = vpack.c.b16 %v4535, %v4534
      %v4548 = vpack.c.b16 %v4537, %v4536
      %v4549 = vpack.c.b16 %v4539, %v4538
      %v4550 = vpack.c.b16 %v4541, %v4540
      %v4551 = vpack.c.b16 %v4543, %v4542
      %4560 = vmatprep.subr.bf16.mxu0 0
      %4561 = vmatpush1.bf16.msra.mxu0 %v4544
      %4562 = vmatprep.subr.bf16.mxu0 0
      %4563 = vmatpush1.bf16.msra.mxu0 %v4545
      %4564 = vmatprep.subr.bf16.mxu0 0
      %4565 = vmatpush1.bf16.msra.mxu0 %v4546
      %4566 = vmatprep.subr.bf16.mxu0 0
      %4567 = vmatpush1.bf16.msra.mxu0 %v4547
      %4568 = vmatprep.subr.bf16.mxu0 0
      %4569 = vmatpush1.bf16.msra.mxu0 %v4548
      %4570 = vmatprep.subr.bf16.mxu0 0
      %4571 = vmatpush1.bf16.msra.mxu0 %v4549
      %4572 = vmatprep.subr.bf16.mxu0 0
      %4573 = vmatpush1.bf16.msra.mxu0 %v4550
      %4574 = vmatprep.subr.bf16.mxu0 0
      %4575 = vmatpush1.bf16.msra.mxu0 %v4551
      %4576 = vmatprep.subr.bf16.mxu0 0
      %4577 = vmatpush1.bf16.msra.mxu0 0
      %4578 = vmatprep.subr.bf16.mxu0 0
      %4579 = vmatpush1.bf16.msra.mxu0 0
      %4580 = vmatprep.subr.bf16.mxu0 0
      %4581 = vmatpush1.bf16.msra.mxu0 0
      %4582 = vmatprep.subr.bf16.mxu0 0
      %4583 = vmatpush1.bf16.msra.mxu0 0
      %4584 = vmatprep.subr.bf16.mxu0 0
      %4585 = vmatpush1.bf16.msra.mxu0 0
      %4586 = vmatprep.subr.bf16.mxu0 0
      %4587 = vmatpush1.bf16.msra.mxu0 0
      %4588 = vmatprep.subr.bf16.mxu0 0
      %4589 = vmatpush1.bf16.msra.mxu0 0
      %4590 = vmatprep.subr.bf16.mxu0 0
      %4591 = vmatpush1.bf16.msra.mxu0 0
      %4592 = vmatprep.mubr.bf16.mxu0 0
      %4593 = vmatmul.mubr.bf16.gmra.mrb[0].mxu0 %v4164
      %v4594 = vpop.f32.mrb[0].mxu0
      %v4595 = vadd.f32 0.0, %v4594
      %v4596 = vpop.f32.mrb[0].mxu0
      %v4597 = vpop.f32.mrb[0].mxu0
      %v4598 = vadd.f32 0.0, %v4597
      %v4599 = vpop.f32.mrb[0].mxu0
      %4600 = vmatprep.mubr.bf16.mxu0 0
      %4601 = vmatmul.mubr.bf16.gmra.mrb[0].mxu0 %v4165
      %v4602 = vpop.f32.mrb[0].mxu0
      %v4603 = vadd.f32 0.0, %v4602
      %v4604 = vpop.f32.mrb[0].mxu0
      %v4605 = vpop.f32.mrb[0].mxu0
      %v4606 = vadd.f32 0.0, %v4605
      %v4607 = vpop.f32.mrb[0].mxu0
      %4608 = vmatprep.mubr.bf16.mxu0 0
      %4609 = vmatmul.mubr.bf16.gmra.mrb[0].mxu0 %v4166
      %v4610 = vpop.f32.mrb[0].mxu0
      %v4611 = vadd.f32 0.0, %v4610
      %v4612 = vpop.f32.mrb[0].mxu0
      %v4613 = vpop.f32.mrb[0].mxu0
      %v4614 = vadd.f32 0.0, %v4613
      %v4615 = vpop.f32.mrb[0].mxu0
      %4616 = vmatprep.mubr.bf16.mxu0 0
      %4617 = vmatmul.mubr.bf16.gmra.mrb[0].mxu0 %v4167
      %v4618 = vpop.f32.mrb[0].mxu0
      %v4619 = vadd.f32 0.0, %v4618
      %v4620 = vpop.f32.mrb[0].mxu0
      %v4621 = vpop.f32.mrb[0].mxu0
      %v4622 = vadd.f32 0.0, %v4621
      %v4623 = vpop.f32.mrb[0].mxu0
      %4624 = vmatprep.mubr.bf16.mxu0 0
      %4625 = vmatmul.mubr.bf16.gmra.mrb[0].mxu0 %v4168
      %v4626 = vpop.f32.mrb[0].mxu0
      %v4627 = vadd.f32 0.0, %v4626
      %v4628 = vpop.f32.mrb[0].mxu0
      %v4629 = vpop.f32.mrb[0].mxu0
      %v4630 = vadd.f32 0.0, %v4629
      %v4631 = vpop.f32.mrb[0].mxu0
      %4632 = vmatprep.mubr.bf16.mxu0 0
      %4633 = vmatmul.mubr.bf16.gmra.mrb[0].mxu0 %v4169
      %v4634 = vpop.f32.mrb[0].mxu0
      %v4635 = vadd.f32 0.0, %v4634
      %v4636 = vpop.f32.mrb[0].mxu0
      %v4637 = vpop.f32.mrb[0].mxu0
      %v4638 = vadd.f32 0.0, %v4637
      %v4639 = vpop.f32.mrb[0].mxu0
      %4640 = vmatprep.mubr.bf16.mxu0 0
      %4641 = vmatmul.mubr.bf16.gmra.mrb[0].mxu0 %v4170
      %v4642 = vpop.f32.mrb[0].mxu0
      %v4643 = vadd.f32 0.0, %v4642
      %v4644 = vpop.f32.mrb[0].mxu0
      %v4645 = vpop.f32.mrb[0].mxu0
      %v4646 = vadd.f32 0.0, %v4645
      %v4647 = vpop.f32.mrb[0].mxu0
      %4648 = vmatprep.mubr.bf16.mxu0 0
      %4649 = vmatmul.mubr.bf16.gmra.mrb[0].mxu0 %v4171
      %v4650 = vpop.f32.mrb[0].mxu0
      %v4651 = vadd.f32 0.0, %v4650
      %v4652 = vpop.f32.mrb[0].mxu0
      %v4653 = vpop.f32.mrb[0].mxu0
      %v4654 = vadd.f32 0.0, %v4653
      %v4655 = vpop.f32.mrb[0].mxu0
      %4656 = vdwg.mxu0
      %v4657 = vadd.f32 %v4433, %v4595
      %v4658 = vadd.f32 %v4436, %v4598
      %v4659 = vadd.f32 %v4441, %v4603
      %v4660 = vadd.f32 %v4444, %v4606
      %v4661 = vadd.f32 %v4449, %v4611
      %v4662 = vadd.f32 %v4452, %v4614
      %v4663 = vadd.f32 %v4457, %v4619
      %v4664 = vadd.f32 %v4460, %v4622
      %v4665 = vadd.f32 %v4465, %v4627
      %v4666 = vadd.f32 %v4468, %v4630
      %v4667 = vadd.f32 %v4473, %v4635
      %v4668 = vadd.f32 %v4476, %v4638
      %v4669 = vadd.f32 %v4481, %v4643
      %v4670 = vadd.f32 %v4484, %v4646
      %v4671 = vadd.f32 %v4489, %v4651
      %v4672 = vadd.f32 %v4492, %v4654
      %v4673 = vld [vmem:[%s12] sm:$0x1]
      %v4675 = vlaneseq
      %v4676 = vshrl.u32 %v4675, 7
      %v4677 = vsub.s32 0, %v4676
      %v4678 = vrot.slane %v4673, %v4677
      %v4680 = vadd.f32 %v4657, %v4678
      %v4681 = vadd.f32 %v4658, %v4678
      %v4682 = vadd.f32 %v4659, %v4678
      %v4683 = vadd.f32 %v4660, %v4678
      %v4684 = vadd.f32 %v4661, %v4678
      %v4685 = vadd.f32 %v4662, %v4678
      %v4686 = vadd.f32 %v4663, %v4678
      %v4687 = vadd.f32 %v4664, %v4678
      %v4688 = vadd.f32 %v4665, %v4678
      %v4689 = vadd.f32 %v4666, %v4678
      %v4690 = vadd.f32 %v4667, %v4678
      %v4691 = vadd.f32 %v4668, %v4678
      %v4692 = vadd.f32 %v4669, %v4678
      %v4693 = vadd.f32 %v4670, %v4678
      %v4694 = vadd.f32 %v4671, %v4678
      %v4695 = vadd.f32 %v4672, %v4678
      %v4696 = vadd.f32 %v4680, %v4093
      %v4697 = vadd.f32 %v4681, %v4096
      %v4698 = vadd.f32 %v4682, %v4101
      %v4699 = vadd.f32 %v4683, %v4104
      %v4700 = vadd.f32 %v4684, %v4109
      %v4701 = vadd.f32 %v4685, %v4112
      %v4702 = vadd.f32 %v4686, %v4117
      %v4703 = vadd.f32 %v4687, %v4120
      %v4704 = vadd.f32 %v4688, %v4125
      %v4705 = vadd.f32 %v4689, %v4128
      %v4706 = vadd.f32 %v4690, %v4133
      %v4707 = vadd.f32 %v4691, %v4136
      %v4708 = vadd.f32 %v4692, %v4141
      %v4709 = vadd.f32 %v4693, %v4144
      %v4710 = vadd.f32 %v4694, %v4149
      %v4711 = vadd.f32 %v4695, %v4152
      %v4712 = vmax.f32 %v4696, 0.0
      %v4713 = vmax.f32 %v4697, 0.0
      %v4714 = vmax.f32 %v4698, 0.0
      %v4715 = vmax.f32 %v4699, 0.0
      %v4716 = vmax.f32 %v4700, 0.0
      %v4717 = vmax.f32 %v4701, 0.0
      %v4718 = vmax.f32 %v4702, 0.0
      %v4719 = vmax.f32 %v4703, 0.0
      %v4720 = vmax.f32 %v4704, 0.0
      %v4721 = vmax.f32 %v4705, 0.0
      %v4722 = vmax.f32 %v4706, 0.0
      %v4723 = vmax.f32 %v4707, 0.0
      %v4724 = vmax.f32 %v4708, 0.0
      %v4725 = vmax.f32 %v4709, 0.0
      %v4726 = vmax.f32 %v4710, 0.0
      %v4727 = vmax.f32 %v4711, 0.0
      %v4728 = vpack.c.bf16 %v4713, %v4712
      %v4729 = vpack.c.bf16 %v4715, %v4714
      %v4730 = vpack.c.bf16 %v4717, %v4716
      %v4731 = vpack.c.bf16 %v4719, %v4718
      %v4732 = vpack.c.bf16 %v4721, %v4720
      %v4733 = vpack.c.bf16 %v4723, %v4722
      %v4734 = vpack.c.bf16 %v4725, %v4724
      %v4735 = vpack.c.bf16 %v4727, %v4726
      %v4736 = vld [vmem:[%s13] sm:$0xf]
      %v4737 = vld [vmem:[%s13 + $0x4] sm:$0xf]
      %v4738 = vld [vmem:[%s13 + $0x8] sm:$0xf]
      %v4739 = vld [vmem:[%s13 + $0xc] sm:$0xf]
      %v4740 = vld [vmem:[%s13 + $0x10] sm:$0xf]
      %v4741 = vld [vmem:[%s13 + $0x14] sm:$0xf]
      %v4742 = vld [vmem:[%s13 + $0x18] sm:$0xf]
      %v4743 = vld [vmem:[%s13 + $0x1c] sm:$0xf]
      %v4744 = vld [vmem:[%s13 + $0x20] sm:$0xf]
      %v4745 = vld [vmem:[%s13 + $0x24] sm:$0xf]
      %v4746 = vld [vmem:[%s13 + $0x28] sm:$0xf]
      %v4747 = vld [vmem:[%s13 + $0x2c] sm:$0xf]
      %v4748 = vld [vmem:[%s13 + $0x30] sm:$0xf]
      %v4749 = vld [vmem:[%s13 + $0x34] sm:$0xf]
      %v4750 = vld [vmem:[%s13 + $0x38] sm:$0xf]
      %v4751 = vld [vmem:[%s13 + $0x3c] sm:$0xf]
      %s4752 = scalar_lea.vmem %s13, 64
      %v4753 = vld [vmem:[%s4752] sm:$0xf]
      %v4754 = vld [vmem:[%s4752 + $0x4] sm:$0xf]
      %v4755 = vld [vmem:[%s4752 + $0x8] sm:$0xf]
      %v4756 = vld [vmem:[%s4752 + $0xc] sm:$0xf]
      %v4757 = vld [vmem:[%s4752 + $0x10] sm:$0xf]
      %v4758 = vld [vmem:[%s4752 + $0x14] sm:$0xf]
      %v4759 = vld [vmem:[%s4752 + $0x18] sm:$0xf]
      %v4760 = vld [vmem:[%s4752 + $0x1c] sm:$0xf]
      %v4761 = vld [vmem:[%s4752 + $0x20] sm:$0xf]
      %v4762 = vld [vmem:[%s4752 + $0x24] sm:$0xf]
      %v4763 = vld [vmem:[%s4752 + $0x28] sm:$0xf]
      %v4764 = vld [vmem:[%s4752 + $0x2c] sm:$0xf]
      %v4765 = vld [vmem:[%s4752 + $0x30] sm:$0xf]
      %v4766 = vld [vmem:[%s4752 + $0x34] sm:$0xf]
      %v4767 = vld [vmem:[%s4752 + $0x38] sm:$0xf]
      %v4768 = vld [vmem:[%s4752 + $0x3c] sm:$0xf]
      %v4785 = vunpack.c.l.b16 %v4753
      %v4786 = vunpack.c.l.b16 %v4754
      %v4787 = vunpack.c.l.b16 %v4755
      %v4788 = vunpack.c.l.b16 %v4756
      %v4789 = vunpack.c.l.b16 %v4757
      %v4790 = vunpack.c.l.b16 %v4758
      %v4791 = vunpack.c.l.b16 %v4759
      %v4792 = vunpack.c.l.b16 %v4760
      %v4793 = vunpack.c.l.b16 %v4761
      %v4794 = vunpack.c.l.b16 %v4762
      %v4795 = vunpack.c.l.b16 %v4763
      %v4796 = vunpack.c.l.b16 %v4764
      %v4797 = vunpack.c.l.b16 %v4765
      %v4798 = vunpack.c.l.b16 %v4766
      %v4799 = vunpack.c.l.b16 %v4767
      %v4800 = vunpack.c.l.b16 %v4768
      %v4801 = vpack.c.b16 %v4786, %v4785
      %v4802 = vpack.c.b16 %v4788, %v4787
      %v4803 = vpack.c.b16 %v4790, %v4789
      %v4804 = vpack.c.b16 %v4792, %v4791
      %v4805 = vpack.c.b16 %v4794, %v4793
      %v4806 = vpack.c.b16 %v4796, %v4795
      %v4807 = vpack.c.b16 %v4798, %v4797
      %v4808 = vpack.c.b16 %v4800, %v4799
      %4817 = vmatprep.subr.bf16.mxu0 0
      %4818 = vmatpush1.bf16.msra.mxu0 %v4801
      %4819 = vmatprep.subr.bf16.mxu0 0
      %4820 = vmatpush1.bf16.msra.mxu0 %v4802
      %4821 = vmatprep.subr.bf16.mxu0 0
      %4822 = vmatpush1.bf16.msra.mxu0 %v4803
      %4823 = vmatprep.subr.bf16.mxu0 0
      %4824 = vmatpush1.bf16.msra.mxu0 %v4804
      %4825 = vmatprep.subr.bf16.mxu0 0
      %4826 = vmatpush1.bf16.msra.mxu0 %v4805
      %4827 = vmatprep.subr.bf16.mxu0 0
      %4828 = vmatpush1.bf16.msra.mxu0 %v4806
      %4829 = vmatprep.subr.bf16.mxu0 0
      %4830 = vmatpush1.bf16.msra.mxu0 %v4807
      %4831 = vmatprep.subr.bf16.mxu0 0
      %4832 = vmatpush1.bf16.msra.mxu0 %v4808
      %4833 = vmatprep.subr.bf16.mxu0 0
      %4834 = vmatpush1.bf16.msra.mxu0 0
      %4835 = vmatprep.subr.bf16.mxu0 0
      %4836 = vmatpush1.bf16.msra.mxu0 0
      %4837 = vmatprep.subr.bf16.mxu0 0
      %4838 = vmatpush1.bf16.msra.mxu0 0
      %4839 = vmatprep.subr.bf16.mxu0 0
      %4840 = vmatpush1.bf16.msra.mxu0 0
      %4841 = vmatprep.subr.bf16.mxu0 0
      %4842 = vmatpush1.bf16.msra.mxu0 0
      %4843 = vmatprep.subr.bf16.mxu0 0
      %4844 = vmatpush1.bf16.msra.mxu0 0
      %4845 = vmatprep.subr.bf16.mxu0 0
      %4846 = vmatpush1.bf16.msra.mxu0 0
      %4847 = vmatprep.subr.bf16.mxu0 0
      %4848 = vmatpush1.bf16.msra.mxu0 0
      %4849 = vmatprep.mubr.bf16.mxu0 0
      %4850 = vmatmul.mubr.bf16.gmra.mrb[0].mxu0 %v4729
      %v4851 = vpop.f32.mrb[0].mxu0
      %v4852 = vadd.f32 0.0, %v4851
      %v4853 = vpop.f32.mrb[0].mxu0
      %v4854 = vpop.f32.mrb[0].mxu0
      %v4855 = vadd.f32 0.0, %v4854
      %v4856 = vpop.f32.mrb[0].mxu0
      %4857 = vdwg.mxu0
      %v4874 = vunpack.c.l.b16 %v4736
      %v4875 = vunpack.c.l.b16 %v4737
      %v4876 = vunpack.c.l.b16 %v4738
      %v4877 = vunpack.c.l.b16 %v4739
      %v4878 = vunpack.c.l.b16 %v4740
      %v4879 = vunpack.c.l.b16 %v4741
      %v4880 = vunpack.c.l.b16 %v4742
      %v4881 = vunpack.c.l.b16 %v4743
      %v4882 = vunpack.c.l.b16 %v4744
      %v4883 = vunpack.c.l.b16 %v4745
      %v4884 = vunpack.c.l.b16 %v4746
      %v4885 = vunpack.c.l.b16 %v4747
      %v4886 = vunpack.c.l.b16 %v4748
      %v4887 = vunpack.c.l.b16 %v4749
      %v4888 = vunpack.c.l.b16 %v4750
      %v4889 = vunpack.c.l.b16 %v4751
      %v4890 = vpack.c.b16 %v4875, %v4874
      %v4891 = vpack.c.b16 %v4877, %v4876
      %v4892 = vpack.c.b16 %v4879, %v4878
      %v4893 = vpack.c.b16 %v4881, %v4880
      %v4894 = vpack.c.b16 %v4883, %v4882
      %v4895 = vpack.c.b16 %v4885, %v4884
      %v4896 = vpack.c.b16 %v4887, %v4886
      %v4897 = vpack.c.b16 %v4889, %v4888
      %4906 = vmatprep.subr.bf16.mxu0 0
      %4907 = vmatpush1.bf16.msra.mxu0 %v4890
      %4908 = vmatprep.subr.bf16.mxu0 0
      %4909 = vmatpush1.bf16.msra.mxu0 %v4891
      %4910 = vmatprep.subr.bf16.mxu0 0
      %4911 = vmatpush1.bf16.msra.mxu0 %v4892
      %4912 = vmatprep.subr.bf16.mxu0 0
      %4913 = vmatpush1.bf16.msra.mxu0 %v4893
      %4914 = vmatprep.subr.bf16.mxu0 0
      %4915 = vmatpush1.bf16.msra.mxu0 %v4894
      %4916 = vmatprep.subr.bf16.mxu0 0
      %4917 = vmatpush1.bf16.msra.mxu0 %v4895
      %4918 = vmatprep.subr.bf16.mxu0 0
      %4919 = vmatpush1.bf16.msra.mxu0 %v4896
      %4920 = vmatprep.subr.bf16.mxu0 0
      %4921 = vmatpush1.bf16.msra.mxu0 %v4897
      %4922 = vmatprep.subr.bf16.mxu0 0
      %4923 = vmatpush1.bf16.msra.mxu0 0
      %4924 = vmatprep.subr.bf16.mxu0 0
      %4925 = vmatpush1.bf16.msra.mxu0 0
      %4926 = vmatprep.subr.bf16.mxu0 0
      %4927 = vmatpush1.bf16.msra.mxu0 0
      %4928 = vmatprep.subr.bf16.mxu0 0
      %4929 = vmatpush1.bf16.msra.mxu0 0
      %4930 = vmatprep.subr.bf16.mxu0 0
      %4931 = vmatpush1.bf16.msra.mxu0 0
      %4932 = vmatprep.subr.bf16.mxu0 0
      %4933 = vmatpush1.bf16.msra.mxu0 0
      %4934 = vmatprep.subr.bf16.mxu0 0
      %4935 = vmatpush1.bf16.msra.mxu0 0
      %4936 = vmatprep.subr.bf16.mxu0 0
      %4937 = vmatpush1.bf16.msra.mxu0 0
      %4938 = vmatprep.mubr.bf16.mxu0 0
      %4939 = vmatmul.mubr.bf16.gmra.mrb[0].mxu0 %v4728
      %v4940 = vpop.f32.mrb[0].mxu0
      %v4941 = vadd.f32 %v4852, %v4940
      %v4942 = vpop.f32.mrb[0].mxu0
      %v4943 = vpop.f32.mrb[0].mxu0
      %v4944 = vadd.f32 %v4855, %v4943
      %v4945 = vpop.f32.mrb[0].mxu0
      %4946 = vdwg.mxu0
      %s4947 = scalar_lea.vmem %s13, 128
      %v4948 = vld [vmem:[%s4947] sm:$0xf]
      %v4949 = vld [vmem:[%s4947 + $0x4] sm:$0xf]
      %v4950 = vld [vmem:[%s4947 + $0x8] sm:$0xf]
      %v4951 = vld [vmem:[%s4947 + $0xc] sm:$0xf]
      %v4952 = vld [vmem:[%s4947 + $0x10] sm:$0xf]
      %v4953 = vld [vmem:[%s4947 + $0x14] sm:$0xf]
      %v4954 = vld [vmem:[%s4947 + $0x18] sm:$0xf]
      %v4955 = vld [vmem:[%s4947 + $0x1c] sm:$0xf]
      %v4956 = vld [vmem:[%s4947 + $0x20] sm:$0xf]
      %v4957 = vld [vmem:[%s4947 + $0x24] sm:$0xf]
      %v4958 = vld [vmem:[%s4947 + $0x28] sm:$0xf]
      %v4959 = vld [vmem:[%s4947 + $0x2c] sm:$0xf]
      %v4960 = vld [vmem:[%s4947 + $0x30] sm:$0xf]
      %v4961 = vld [vmem:[%s4947 + $0x34] sm:$0xf]
      %v4962 = vld [vmem:[%s4947 + $0x38] sm:$0xf]
      %v4963 = vld [vmem:[%s4947 + $0x3c] sm:$0xf]
      %v4980 = vunpack.c.l.b16 %v4948
      %v4981 = vunpack.c.l.b16 %v4949
      %v4982 = vunpack.c.l.b16 %v4950
      %v4983 = vunpack.c.l.b16 %v4951
      %v4984 = vunpack.c.l.b16 %v4952
      %v4985 = vunpack.c.l.b16 %v4953
      %v4986 = vunpack.c.l.b16 %v4954
      %v4987 = vunpack.c.l.b16 %v4955
      %v4988 = vunpack.c.l.b16 %v4956
      %v4989 = vunpack.c.l.b16 %v4957
      %v4990 = vunpack.c.l.b16 %v4958
      %v4991 = vunpack.c.l.b16 %v4959
      %v4992 = vunpack.c.l.b16 %v4960
      %v4993 = vunpack.c.l.b16 %v4961
      %v4994 = vunpack.c.l.b16 %v4962
      %v4995 = vunpack.c.l.b16 %v4963
      %v4996 = vpack.c.b16 %v4981, %v4980
      %v4997 = vpack.c.b16 %v4983, %v4982
      %v4998 = vpack.c.b16 %v4985, %v4984
      %v4999 = vpack.c.b16 %v4987, %v4986
      %v5000 = vpack.c.b16 %v4989, %v4988
      %v5001 = vpack.c.b16 %v4991, %v4990
      %v5002 = vpack.c.b16 %v4993, %v4992
      %v5003 = vpack.c.b16 %v4995, %v4994
      %5012 = vmatprep.subr.bf16.mxu0 0
      %5013 = vmatpush1.bf16.msra.mxu0 %v4996
      %5014 = vmatprep.subr.bf16.mxu0 0
      %5015 = vmatpush1.bf16.msra.mxu0 %v4997
      %5016 = vmatprep.subr.bf16.mxu0 0
      %5017 = vmatpush1.bf16.msra.mxu0 %v4998
      %5018 = vmatprep.subr.bf16.mxu0 0
      %5019 = vmatpush1.bf16.msra.mxu0 %v4999
      %5020 = vmatprep.subr.bf16.mxu0 0
      %5021 = vmatpush1.bf16.msra.mxu0 %v5000
      %5022 = vmatprep.subr.bf16.mxu0 0
      %5023 = vmatpush1.bf16.msra.mxu0 %v5001
      %5024 = vmatprep.subr.bf16.mxu0 0
      %5025 = vmatpush1.bf16.msra.mxu0 %v5002
      %5026 = vmatprep.subr.bf16.mxu0 0
      %5027 = vmatpush1.bf16.msra.mxu0 %v5003
      %5028 = vmatprep.subr.bf16.mxu0 0
      %5029 = vmatpush1.bf16.msra.mxu0 0
      %5030 = vmatprep.subr.bf16.mxu0 0
      %5031 = vmatpush1.bf16.msra.mxu0 0
      %5032 = vmatprep.subr.bf16.mxu0 0
      %5033 = vmatpush1.bf16.msra.mxu0 0
      %5034 = vmatprep.subr.bf16.mxu0 0
      %5035 = vmatpush1.bf16.msra.mxu0 0
      %5036 = vmatprep.subr.bf16.mxu0 0
      %5037 = vmatpush1.bf16.msra.mxu0 0
      %5038 = vmatprep.subr.bf16.mxu0 0
      %5039 = vmatpush1.bf16.msra.mxu0 0
      %5040 = vmatprep.subr.bf16.mxu0 0
      %5041 = vmatpush1.bf16.msra.mxu0 0
      %5042 = vmatprep.subr.bf16.mxu0 0
      %5043 = vmatpush1.bf16.msra.mxu0 0
      %5044 = vmatprep.mubr.bf16.mxu0 0
      %5045 = vmatmul.mubr.bf16.gmra.mrb[0].mxu0 %v4730
      %v5046 = vpop.f32.mrb[0].mxu0
      %v5047 = vadd.f32 0.0, %v5046
      %v5048 = vpop.f32.mrb[0].mxu0
      %v5049 = vpop.f32.mrb[0].mxu0
      %v5050 = vadd.f32 0.0, %v5049
      %v5051 = vpop.f32.mrb[0].mxu0
      %5052 = vdwg.mxu0
      %v5053 = vadd.f32 %v4941, %v5047
      %v5054 = vadd.f32 %v4944, %v5050
      %s5055 = scalar_lea.vmem %s13, 192
      %v5056 = vld [vmem:[%s5055] sm:$0xf]
      %v5057 = vld [vmem:[%s5055 + $0x4] sm:$0xf]
      %v5058 = vld [vmem:[%s5055 + $0x8] sm:$0xf]
      %v5059 = vld [vmem:[%s5055 + $0xc] sm:$0xf]
      %v5060 = vld [vmem:[%s5055 + $0x10] sm:$0xf]
      %v5061 = vld [vmem:[%s5055 + $0x14] sm:$0xf]
      %v5062 = vld [vmem:[%s5055 + $0x18] sm:$0xf]
      %v5063 = vld [vmem:[%s5055 + $0x1c] sm:$0xf]
      %v5064 = vld [vmem:[%s5055 + $0x20] sm:$0xf]
      %v5065 = vld [vmem:[%s5055 + $0x24] sm:$0xf]
      %v5066 = vld [vmem:[%s5055 + $0x28] sm:$0xf]
      %v5067 = vld [vmem:[%s5055 + $0x2c] sm:$0xf]
      %v5068 = vld [vmem:[%s5055 + $0x30] sm:$0xf]
      %v5069 = vld [vmem:[%s5055 + $0x34] sm:$0xf]
      %v5070 = vld [vmem:[%s5055 + $0x38] sm:$0xf]
      %v5071 = vld [vmem:[%s5055 + $0x3c] sm:$0xf]
      %v5088 = vunpack.c.l.b16 %v5056
      %v5089 = vunpack.c.l.b16 %v5057
      %v5090 = vunpack.c.l.b16 %v5058
      %v5091 = vunpack.c.l.b16 %v5059
      %v5092 = vunpack.c.l.b16 %v5060
      %v5093 = vunpack.c.l.b16 %v5061
      %v5094 = vunpack.c.l.b16 %v5062
      %v5095 = vunpack.c.l.b16 %v5063
      %v5096 = vunpack.c.l.b16 %v5064
      %v5097 = vunpack.c.l.b16 %v5065
      %v5098 = vunpack.c.l.b16 %v5066
      %v5099 = vunpack.c.l.b16 %v5067
      %v5100 = vunpack.c.l.b16 %v5068
      %v5101 = vunpack.c.l.b16 %v5069
      %v5102 = vunpack.c.l.b16 %v5070
      %v5103 = vunpack.c.l.b16 %v5071
      %v5104 = vpack.c.b16 %v5089, %v5088
      %v5105 = vpack.c.b16 %v5091, %v5090
      %v5106 = vpack.c.b16 %v5093, %v5092
      %v5107 = vpack.c.b16 %v5095, %v5094
      %v5108 = vpack.c.b16 %v5097, %v5096
      %v5109 = vpack.c.b16 %v5099, %v5098
      %v5110 = vpack.c.b16 %v5101, %v5100
      %v5111 = vpack.c.b16 %v5103, %v5102
      %5120 = vmatprep.subr.bf16.mxu0 0
      %5121 = vmatpush1.bf16.msra.mxu0 %v5104
      %5122 = vmatprep.subr.bf16.mxu0 0
      %5123 = vmatpush1.bf16.msra.mxu0 %v5105
      %5124 = vmatprep.subr.bf16.mxu0 0
      %5125 = vmatpush1.bf16.msra.mxu0 %v5106
      %5126 = vmatprep.subr.bf16.mxu0 0
      %5127 = vmatpush1.bf16.msra.mxu0 %v5107
      %5128 = vmatprep.subr.bf16.mxu0 0
      %5129 = vmatpush1.bf16.msra.mxu0 %v5108
      %5130 = vmatprep.subr.bf16.mxu0 0
      %5131 = vmatpush1.bf16.msra.mxu0 %v5109
      %5132 = vmatprep.subr.bf16.mxu0 0
      %5133 = vmatpush1.bf16.msra.mxu0 %v5110
      %5134 = vmatprep.subr.bf16.mxu0 0
      %5135 = vmatpush1.bf16.msra.mxu0 %v5111
      %5136 = vmatprep.subr.bf16.mxu0 0
      %5137 = vmatpush1.bf16.msra.mxu0 0
      %5138 = vmatprep.subr.bf16.mxu0 0
      %5139 = vmatpush1.bf16.msra.mxu0 0
      %5140 = vmatprep.subr.bf16.mxu0 0
      %5141 = vmatpush1.bf16.msra.mxu0 0
      %5142 = vmatprep.subr.bf16.mxu0 0
      %5143 = vmatpush1.bf16.msra.mxu0 0
      %5144 = vmatprep.subr.bf16.mxu0 0
      %5145 = vmatpush1.bf16.msra.mxu0 0
      %5146 = vmatprep.subr.bf16.mxu0 0
      %5147 = vmatpush1.bf16.msra.mxu0 0
      %5148 = vmatprep.subr.bf16.mxu0 0
      %5149 = vmatpush1.bf16.msra.mxu0 0
      %5150 = vmatprep.subr.bf16.mxu0 0
      %5151 = vmatpush1.bf16.msra.mxu0 0
      %5152 = vmatprep.mubr.bf16.mxu0 0
      %5153 = vmatmul.mubr.bf16.gmra.mrb[0].mxu0 %v4731
      %v5154 = vpop.f32.mrb[0].mxu0
      %v5155 = vadd.f32 0.0, %v5154
      %v5156 = vpop.f32.mrb[0].mxu0
      %v5157 = vpop.f32.mrb[0].mxu0
      %v5158 = vadd.f32 0.0, %v5157
      %v5159 = vpop.f32.mrb[0].mxu0
      %5160 = vdwg.mxu0
      %v5161 = vadd.f32 %v5053, %v5155
      %v5162 = vadd.f32 %v5054, %v5158
      %s5163 = scalar_lea.vmem %s13, 256
      %v5164 = vld [vmem:[%s5163] sm:$0xf]
      %v5165 = vld [vmem:[%s5163 + $0x4] sm:$0xf]
      %v5166 = vld [vmem:[%s5163 + $0x8] sm:$0xf]
      %v5167 = vld [vmem:[%s5163 + $0xc] sm:$0xf]
      %v5168 = vld [vmem:[%s5163 + $0x10] sm:$0xf]
      %v5169 = vld [vmem:[%s5163 + $0x14] sm:$0xf]
      %v5170 = vld [vmem:[%s5163 + $0x18] sm:$0xf]
      %v5171 = vld [vmem:[%s5163 + $0x1c] sm:$0xf]
      %v5172 = vld [vmem:[%s5163 + $0x20] sm:$0xf]
      %v5173 = vld [vmem:[%s5163 + $0x24] sm:$0xf]
      %v5174 = vld [vmem:[%s5163 + $0x28] sm:$0xf]
      %v5175 = vld [vmem:[%s5163 + $0x2c] sm:$0xf]
      %v5176 = vld [vmem:[%s5163 + $0x30] sm:$0xf]
      %v5177 = vld [vmem:[%s5163 + $0x34] sm:$0xf]
      %v5178 = vld [vmem:[%s5163 + $0x38] sm:$0xf]
      %v5179 = vld [vmem:[%s5163 + $0x3c] sm:$0xf]
      %v5196 = vunpack.c.l.b16 %v5164
      %v5197 = vunpack.c.l.b16 %v5165
      %v5198 = vunpack.c.l.b16 %v5166
      %v5199 = vunpack.c.l.b16 %v5167
      %v5200 = vunpack.c.l.b16 %v5168
      %v5201 = vunpack.c.l.b16 %v5169
      %v5202 = vunpack.c.l.b16 %v5170
      %v5203 = vunpack.c.l.b16 %v5171
      %v5204 = vunpack.c.l.b16 %v5172
      %v5205 = vunpack.c.l.b16 %v5173
      %v5206 = vunpack.c.l.b16 %v5174
      %v5207 = vunpack.c.l.b16 %v5175
      %v5208 = vunpack.c.l.b16 %v5176
      %v5209 = vunpack.c.l.b16 %v5177
      %v5210 = vunpack.c.l.b16 %v5178
      %v5211 = vunpack.c.l.b16 %v5179
      %v5212 = vpack.c.b16 %v5197, %v5196
      %v5213 = vpack.c.b16 %v5199, %v5198
      %v5214 = vpack.c.b16 %v5201, %v5200
      %v5215 = vpack.c.b16 %v5203, %v5202
      %v5216 = vpack.c.b16 %v5205, %v5204
      %v5217 = vpack.c.b16 %v5207, %v5206
      %v5218 = vpack.c.b16 %v5209, %v5208
      %v5219 = vpack.c.b16 %v5211, %v5210
      %5228 = vmatprep.subr.bf16.mxu0 0
      %5229 = vmatpush1.bf16.msra.mxu0 %v5212
      %5230 = vmatprep.subr.bf16.mxu0 0
      %5231 = vmatpush1.bf16.msra.mxu0 %v5213
      %5232 = vmatprep.subr.bf16.mxu0 0
      %5233 = vmatpush1.bf16.msra.mxu0 %v5214
      %5234 = vmatprep.subr.bf16.mxu0 0
      %5235 = vmatpush1.bf16.msra.mxu0 %v5215
      %5236 = vmatprep.subr.bf16.mxu0 0
      %5237 = vmatpush1.bf16.msra.mxu0 %v5216
      %5238 = vmatprep.subr.bf16.mxu0 0
      %5239 = vmatpush1.bf16.msra.mxu0 %v5217
      %5240 = vmatprep.subr.bf16.mxu0 0
      %5241 = vmatpush1.bf16.msra.mxu0 %v5218
      %5242 = vmatprep.subr.bf16.mxu0 0
      %5243 = vmatpush1.bf16.msra.mxu0 %v5219
      %5244 = vmatprep.subr.bf16.mxu0 0
      %5245 = vmatpush1.bf16.msra.mxu0 0
      %5246 = vmatprep.subr.bf16.mxu0 0
      %5247 = vmatpush1.bf16.msra.mxu0 0
      %5248 = vmatprep.subr.bf16.mxu0 0
      %5249 = vmatpush1.bf16.msra.mxu0 0
      %5250 = vmatprep.subr.bf16.mxu0 0
      %5251 = vmatpush1.bf16.msra.mxu0 0
      %5252 = vmatprep.subr.bf16.mxu0 0
      %5253 = vmatpush1.bf16.msra.mxu0 0
      %5254 = vmatprep.subr.bf16.mxu0 0
      %5255 = vmatpush1.bf16.msra.mxu0 0
      %5256 = vmatprep.subr.bf16.mxu0 0
      %5257 = vmatpush1.bf16.msra.mxu0 0
      %5258 = vmatprep.subr.bf16.mxu0 0
      %5259 = vmatpush1.bf16.msra.mxu0 0
      %5260 = vmatprep.mubr.bf16.mxu0 0
      %5261 = vmatmul.mubr.bf16.gmra.mrb[0].mxu0 %v4732
      %v5262 = vpop.f32.mrb[0].mxu0
      %v5263 = vadd.f32 0.0, %v5262
      %v5264 = vpop.f32.mrb[0].mxu0
      %v5265 = vpop.f32.mrb[0].mxu0
      %v5266 = vadd.f32 0.0, %v5265
      %v5267 = vpop.f32.mrb[0].mxu0
      %5268 = vdwg.mxu0
      %v5269 = vadd.f32 %v5161, %v5263
      %v5270 = vadd.f32 %v5162, %v5266
      %s5271 = scalar_lea.vmem %s13, 320
      %v5272 = vld [vmem:[%s5271] sm:$0xf]
      %v5273 = vld [vmem:[%s5271 + $0x4] sm:$0xf]
      %v5274 = vld [vmem:[%s5271 + $0x8] sm:$0xf]
      %v5275 = vld [vmem:[%s5271 + $0xc] sm:$0xf]
      %v5276 = vld [vmem:[%s5271 + $0x10] sm:$0xf]
      %v5277 = vld [vmem:[%s5271 + $0x14] sm:$0xf]
      %v5278 = vld [vmem:[%s5271 + $0x18] sm:$0xf]
      %v5279 = vld [vmem:[%s5271 + $0x1c] sm:$0xf]
      %v5280 = vld [vmem:[%s5271 + $0x20] sm:$0xf]
      %v5281 = vld [vmem:[%s5271 + $0x24] sm:$0xf]
      %v5282 = vld [vmem:[%s5271 + $0x28] sm:$0xf]
      %v5283 = vld [vmem:[%s5271 + $0x2c] sm:$0xf]
      %v5284 = vld [vmem:[%s5271 + $0x30] sm:$0xf]
      %v5285 = vld [vmem:[%s5271 + $0x34] sm:$0xf]
      %v5286 = vld [vmem:[%s5271 + $0x38] sm:$0xf]
      %v5287 = vld [vmem:[%s5271 + $0x3c] sm:$0xf]
      %v5304 = vunpack.c.l.b16 %v5272
      %v5305 = vunpack.c.l.b16 %v5273
      %v5306 = vunpack.c.l.b16 %v5274
      %v5307 = vunpack.c.l.b16 %v5275
      %v5308 = vunpack.c.l.b16 %v5276
      %v5309 = vunpack.c.l.b16 %v5277
      %v5310 = vunpack.c.l.b16 %v5278
      %v5311 = vunpack.c.l.b16 %v5279
      %v5312 = vunpack.c.l.b16 %v5280
      %v5313 = vunpack.c.l.b16 %v5281
      %v5314 = vunpack.c.l.b16 %v5282
      %v5315 = vunpack.c.l.b16 %v5283
      %v5316 = vunpack.c.l.b16 %v5284
      %v5317 = vunpack.c.l.b16 %v5285
      %v5318 = vunpack.c.l.b16 %v5286
      %v5319 = vunpack.c.l.b16 %v5287
      %v5320 = vpack.c.b16 %v5305, %v5304
      %v5321 = vpack.c.b16 %v5307, %v5306
      %v5322 = vpack.c.b16 %v5309, %v5308
      %v5323 = vpack.c.b16 %v5311, %v5310
      %v5324 = vpack.c.b16 %v5313, %v5312
      %v5325 = vpack.c.b16 %v5315, %v5314
      %v5326 = vpack.c.b16 %v5317, %v5316
      %v5327 = vpack.c.b16 %v5319, %v5318
      %5336 = vmatprep.subr.bf16.mxu0 0
      %5337 = vmatpush1.bf16.msra.mxu0 %v5320
      %5338 = vmatprep.subr.bf16.mxu0 0
      %5339 = vmatpush1.bf16.msra.mxu0 %v5321
      %5340 = vmatprep.subr.bf16.mxu0 0
      %5341 = vmatpush1.bf16.msra.mxu0 %v5322
      %5342 = vmatprep.subr.bf16.mxu0 0
      %5343 = vmatpush1.bf16.msra.mxu0 %v5323
      %5344 = vmatprep.subr.bf16.mxu0 0
      %5345 = vmatpush1.bf16.msra.mxu0 %v5324
      %5346 = vmatprep.subr.bf16.mxu0 0
      %5347 = vmatpush1.bf16.msra.mxu0 %v5325
      %5348 = vmatprep.subr.bf16.mxu0 0
      %5349 = vmatpush1.bf16.msra.mxu0 %v5326
      %5350 = vmatprep.subr.bf16.mxu0 0
      %5351 = vmatpush1.bf16.msra.mxu0 %v5327
      %5352 = vmatprep.subr.bf16.mxu0 0
      %5353 = vmatpush1.bf16.msra.mxu0 0
      %5354 = vmatprep.subr.bf16.mxu0 0
      %5355 = vmatpush1.bf16.msra.mxu0 0
      %5356 = vmatprep.subr.bf16.mxu0 0
      %5357 = vmatpush1.bf16.msra.mxu0 0
      %5358 = vmatprep.subr.bf16.mxu0 0
      %5359 = vmatpush1.bf16.msra.mxu0 0
      %5360 = vmatprep.subr.bf16.mxu0 0
      %5361 = vmatpush1.bf16.msra.mxu0 0
      %5362 = vmatprep.subr.bf16.mxu0 0
      %5363 = vmatpush1.bf16.msra.mxu0 0
      %5364 = vmatprep.subr.bf16.mxu0 0
      %5365 = vmatpush1.bf16.msra.mxu0 0
      %5366 = vmatprep.subr.bf16.mxu0 0
      %5367 = vmatpush1.bf16.msra.mxu0 0
      %5368 = vmatprep.mubr.bf16.mxu0 0
      %5369 = vmatmul.mubr.bf16.gmra.mrb[0].mxu0 %v4733
      %v5370 = vpop.f32.mrb[0].mxu0
      %v5371 = vadd.f32 0.0, %v5370
      %v5372 = vpop.f32.mrb[0].mxu0
      %v5373 = vpop.f32.mrb[0].mxu0
      %v5374 = vadd.f32 0.0, %v5373
      %v5375 = vpop.f32.mrb[0].mxu0
      %5376 = vdwg.mxu0
      %v5377 = vadd.f32 %v5269, %v5371
      %v5378 = vadd.f32 %v5270, %v5374
      %s5379 = scalar_lea.vmem %s13, 384
      %v5380 = vld [vmem:[%s5379] sm:$0xf]
      %v5381 = vld [vmem:[%s5379 + $0x4] sm:$0xf]
      %v5382 = vld [vmem:[%s5379 + $0x8] sm:$0xf]
      %v5383 = vld [vmem:[%s5379 + $0xc] sm:$0xf]
      %v5384 = vld [vmem:[%s5379 + $0x10] sm:$0xf]
      %v5385 = vld [vmem:[%s5379 + $0x14] sm:$0xf]
      %v5386 = vld [vmem:[%s5379 + $0x18] sm:$0xf]
      %v5387 = vld [vmem:[%s5379 + $0x1c] sm:$0xf]
      %v5388 = vld [vmem:[%s5379 + $0x20] sm:$0xf]
      %v5389 = vld [vmem:[%s5379 + $0x24] sm:$0xf]
      %v5390 = vld [vmem:[%s5379 + $0x28] sm:$0xf]
      %v5391 = vld [vmem:[%s5379 + $0x2c] sm:$0xf]
      %v5392 = vld [vmem:[%s5379 + $0x30] sm:$0xf]
      %v5393 = vld [vmem:[%s5379 + $0x34] sm:$0xf]
      %v5394 = vld [vmem:[%s5379 + $0x38] sm:$0xf]
      %v5395 = vld [vmem:[%s5379 + $0x3c] sm:$0xf]
      %v5412 = vunpack.c.l.b16 %v5380
      %v5413 = vunpack.c.l.b16 %v5381
      %v5414 = vunpack.c.l.b16 %v5382
      %v5415 = vunpack.c.l.b16 %v5383
      %v5416 = vunpack.c.l.b16 %v5384
      %v5417 = vunpack.c.l.b16 %v5385
      %v5418 = vunpack.c.l.b16 %v5386
      %v5419 = vunpack.c.l.b16 %v5387
      %v5420 = vunpack.c.l.b16 %v5388
      %v5421 = vunpack.c.l.b16 %v5389
      %v5422 = vunpack.c.l.b16 %v5390
      %v5423 = vunpack.c.l.b16 %v5391
      %v5424 = vunpack.c.l.b16 %v5392
      %v5425 = vunpack.c.l.b16 %v5393
      %v5426 = vunpack.c.l.b16 %v5394
      %v5427 = vunpack.c.l.b16 %v5395
      %v5428 = vpack.c.b16 %v5413, %v5412
      %v5429 = vpack.c.b16 %v5415, %v5414
      %v5430 = vpack.c.b16 %v5417, %v5416
      %v5431 = vpack.c.b16 %v5419, %v5418
      %v5432 = vpack.c.b16 %v5421, %v5420
      %v5433 = vpack.c.b16 %v5423, %v5422
      %v5434 = vpack.c.b16 %v5425, %v5424
      %v5435 = vpack.c.b16 %v5427, %v5426
      %5444 = vmatprep.subr.bf16.mxu0 0
      %5445 = vmatpush1.bf16.msra.mxu0 %v5428
      %5446 = vmatprep.subr.bf16.mxu0 0
      %5447 = vmatpush1.bf16.msra.mxu0 %v5429
      %5448 = vmatprep.subr.bf16.mxu0 0
      %5449 = vmatpush1.bf16.msra.mxu0 %v5430
      %5450 = vmatprep.subr.bf16.mxu0 0
      %5451 = vmatpush1.bf16.msra.mxu0 %v5431
      %5452 = vmatprep.subr.bf16.mxu0 0
      %5453 = vmatpush1.bf16.msra.mxu0 %v5432
      %5454 = vmatprep.subr.bf16.mxu0 0
      %5455 = vmatpush1.bf16.msra.mxu0 %v5433
      %5456 = vmatprep.subr.bf16.mxu0 0
      %5457 = vmatpush1.bf16.msra.mxu0 %v5434
      %5458 = vmatprep.subr.bf16.mxu0 0
      %5459 = vmatpush1.bf16.msra.mxu0 %v5435
      %5460 = vmatprep.subr.bf16.mxu0 0
      %5461 = vmatpush1.bf16.msra.mxu0 0
      %5462 = vmatprep.subr.bf16.mxu0 0
      %5463 = vmatpush1.bf16.msra.mxu0 0
      %5464 = vmatprep.subr.bf16.mxu0 0
      %5465 = vmatpush1.bf16.msra.mxu0 0
      %5466 = vmatprep.subr.bf16.mxu0 0
      %5467 = vmatpush1.bf16.msra.mxu0 0
      %5468 = vmatprep.subr.bf16.mxu0 0
      %5469 = vmatpush1.bf16.msra.mxu0 0
      %5470 = vmatprep.subr.bf16.mxu0 0
      %5471 = vmatpush1.bf16.msra.mxu0 0
      %5472 = vmatprep.subr.bf16.mxu0 0
      %5473 = vmatpush1.bf16.msra.mxu0 0
      %5474 = vmatprep.subr.bf16.mxu0 0
      %5475 = vmatpush1.bf16.msra.mxu0 0
      %5476 = vmatprep.mubr.bf16.mxu0 0
      %5477 = vmatmul.mubr.bf16.gmra.mrb[0].mxu0 %v4734
      %v5478 = vpop.f32.mrb[0].mxu0
      %v5479 = vadd.f32 0.0, %v5478
      %v5480 = vpop.f32.mrb[0].mxu0
      %v5481 = vpop.f32.mrb[0].mxu0
      %v5482 = vadd.f32 0.0, %v5481
      %v5483 = vpop.f32.mrb[0].mxu0
      %5484 = vdwg.mxu0
      %v5485 = vadd.f32 %v5377, %v5479
      %v5486 = vadd.f32 %v5378, %v5482
      %s5487 = scalar_lea.vmem %s13, 448
      %v5488 = vld [vmem:[%s5487] sm:$0xf]
      %v5489 = vld [vmem:[%s5487 + $0x4] sm:$0xf]
      %v5490 = vld [vmem:[%s5487 + $0x8] sm:$0xf]
      %v5491 = vld [vmem:[%s5487 + $0xc] sm:$0xf]
      %v5492 = vld [vmem:[%s5487 + $0x10] sm:$0xf]
      %v5493 = vld [vmem:[%s5487 + $0x14] sm:$0xf]
      %v5494 = vld [vmem:[%s5487 + $0x18] sm:$0xf]
      %v5495 = vld [vmem:[%s5487 + $0x1c] sm:$0xf]
      %v5496 = vld [vmem:[%s5487 + $0x20] sm:$0xf]
      %v5497 = vld [vmem:[%s5487 + $0x24] sm:$0xf]
      %v5498 = vld [vmem:[%s5487 + $0x28] sm:$0xf]
      %v5499 = vld [vmem:[%s5487 + $0x2c] sm:$0xf]
      %v5500 = vld [vmem:[%s5487 + $0x30] sm:$0xf]
      %v5501 = vld [vmem:[%s5487 + $0x34] sm:$0xf]
      %v5502 = vld [vmem:[%s5487 + $0x38] sm:$0xf]
      %v5503 = vld [vmem:[%s5487 + $0x3c] sm:$0xf]
      %v5520 = vunpack.c.l.b16 %v5488
      %v5521 = vunpack.c.l.b16 %v5489
      %v5522 = vunpack.c.l.b16 %v5490
      %v5523 = vunpack.c.l.b16 %v5491
      %v5524 = vunpack.c.l.b16 %v5492
      %v5525 = vunpack.c.l.b16 %v5493
      %v5526 = vunpack.c.l.b16 %v5494
      %v5527 = vunpack.c.l.b16 %v5495
      %v5528 = vunpack.c.l.b16 %v5496
      %v5529 = vunpack.c.l.b16 %v5497
      %v5530 = vunpack.c.l.b16 %v5498
      %v5531 = vunpack.c.l.b16 %v5499
      %v5532 = vunpack.c.l.b16 %v5500
      %v5533 = vunpack.c.l.b16 %v5501
      %v5534 = vunpack.c.l.b16 %v5502
      %v5535 = vunpack.c.l.b16 %v5503
      %v5536 = vpack.c.b16 %v5521, %v5520
      %v5537 = vpack.c.b16 %v5523, %v5522
      %v5538 = vpack.c.b16 %v5525, %v5524
      %v5539 = vpack.c.b16 %v5527, %v5526
      %v5540 = vpack.c.b16 %v5529, %v5528
      %v5541 = vpack.c.b16 %v5531, %v5530
      %v5542 = vpack.c.b16 %v5533, %v5532
      %v5543 = vpack.c.b16 %v5535, %v5534
      %5552 = vmatprep.subr.bf16.mxu0 0
      %5553 = vmatpush1.bf16.msra.mxu0 %v5536
      %5554 = vmatprep.subr.bf16.mxu0 0
      %5555 = vmatpush1.bf16.msra.mxu0 %v5537
      %5556 = vmatprep.subr.bf16.mxu0 0
      %5557 = vmatpush1.bf16.msra.mxu0 %v5538
      %5558 = vmatprep.subr.bf16.mxu0 0
      %5559 = vmatpush1.bf16.msra.mxu0 %v5539
      %5560 = vmatprep.subr.bf16.mxu0 0
      %5561 = vmatpush1.bf16.msra.mxu0 %v5540
      %5562 = vmatprep.subr.bf16.mxu0 0
      %5563 = vmatpush1.bf16.msra.mxu0 %v5541
      %5564 = vmatprep.subr.bf16.mxu0 0
      %5565 = vmatpush1.bf16.msra.mxu0 %v5542
      %5566 = vmatprep.subr.bf16.mxu0 0
      %5567 = vmatpush1.bf16.msra.mxu0 %v5543
      %5568 = vmatprep.subr.bf16.mxu0 0
      %5569 = vmatpush1.bf16.msra.mxu0 0
      %5570 = vmatprep.subr.bf16.mxu0 0
      %5571 = vmatpush1.bf16.msra.mxu0 0
      %5572 = vmatprep.subr.bf16.mxu0 0
      %5573 = vmatpush1.bf16.msra.mxu0 0
      %5574 = vmatprep.subr.bf16.mxu0 0
      %5575 = vmatpush1.bf16.msra.mxu0 0
      %5576 = vmatprep.subr.bf16.mxu0 0
      %5577 = vmatpush1.bf16.msra.mxu0 0
      %5578 = vmatprep.subr.bf16.mxu0 0
      %5579 = vmatpush1.bf16.msra.mxu0 0
      %5580 = vmatprep.subr.bf16.mxu0 0
      %5581 = vmatpush1.bf16.msra.mxu0 0
      %5582 = vmatprep.subr.bf16.mxu0 0
      %5583 = vmatpush1.bf16.msra.mxu0 0
      %5584 = vmatprep.mubr.bf16.mxu0 0
      %5585 = vmatmul.mubr.bf16.gmra.mrb[0].mxu0 %v4735
      %v5586 = vpop.f32.mrb[0].mxu0
      %v5587 = vadd.f32 0.0, %v5586
      %v5588 = vpop.f32.mrb[0].mxu0
      %v5589 = vpop.f32.mrb[0].mxu0
      %v5590 = vadd.f32 0.0, %v5589
      %v5591 = vpop.f32.mrb[0].mxu0
      %5592 = vdwg.mxu0
      %v5593 = vadd.f32 %v5485, %v5587
      %v5594 = vadd.f32 %v5486, %v5590
      %v5595 = vld [vmem:[%s14] sm:$0x1]
      %v5597 = vlaneseq
      %v5598 = vshrl.u32 %v5597, 7
      %v5599 = vsub.s32 0, %v5598
      %v5600 = vrot.slane %v5595, %v5599
      %v5602 = vadd.f32 %v5593, %v5600
      %v5603 = vadd.f32 %v5594, %v5600
      %v5604 = vmax.f32 %v5602, 0.0
      %v5605 = vmax.f32 %v5603, 0.0
      %v5606 = vpack.c.bf16 %v5605, %v5604
      %v5607 = vld [vmem:[%s15] sm:$0xf]
      %v5608 = vld [vmem:[%s15 + $0x4] sm:$0xf]
      %v5609 = vld [vmem:[%s15 + $0x8] sm:$0xf]
      %v5610 = vld [vmem:[%s15 + $0xc] sm:$0xf]
      %v5611 = vld [vmem:[%s15 + $0x10] sm:$0xf]
      %v5612 = vld [vmem:[%s15 + $0x14] sm:$0xf]
      %v5613 = vld [vmem:[%s15 + $0x18] sm:$0xf]
      %v5614 = vld [vmem:[%s15 + $0x1c] sm:$0xf]
      %v5615 = vld [vmem:[%s15 + $0x20] sm:$0xf]
      %v5616 = vld [vmem:[%s15 + $0x24] sm:$0xf]
      %v5617 = vld [vmem:[%s15 + $0x28] sm:$0xf]
      %v5618 = vld [vmem:[%s15 + $0x2c] sm:$0xf]
      %v5619 = vld [vmem:[%s15 + $0x30] sm:$0xf]
      %v5620 = vld [vmem:[%s15 + $0x34] sm:$0xf]
      %v5621 = vld [vmem:[%s15 + $0x38] sm:$0xf]
      %v5622 = vld [vmem:[%s15 + $0x3c] sm:$0xf]
      %v5623 = vld [vmem:[%s16] sm:$0x1]
      %v5625 = vlaneseq
      %v5626 = vshrl.u32 %v5625, 7
      %v5627 = vsub.s32 0, %v5626
      %v5628 = vrot.slane %v5623, %v5627
      %v5646 = vunpack.c.l.b16 %v5607
      %v5647 = vunpack.c.l.b16 %v5608
      %v5648 = vunpack.c.l.b16 %v5609
      %v5649 = vunpack.c.l.b16 %v5610
      %v5650 = vunpack.c.l.b16 %v5611
      %v5651 = vunpack.c.l.b16 %v5612
      %v5652 = vunpack.c.l.b16 %v5613
      %v5653 = vunpack.c.l.b16 %v5614
      %v5654 = vunpack.c.l.b16 %v5615
      %v5655 = vunpack.c.l.b16 %v5616
      %v5656 = vunpack.c.l.b16 %v5617
      %v5657 = vunpack.c.l.b16 %v5618
      %v5658 = vunpack.c.l.b16 %v5619
      %v5659 = vunpack.c.l.b16 %v5620
      %v5660 = vunpack.c.l.b16 %v5621
      %v5661 = vunpack.c.l.b16 %v5622
      %v5662 = vpack.c.b16 %v5647, %v5646
      %v5663 = vpack.c.b16 %v5649, %v5648
      %v5664 = vpack.c.b16 %v5651, %v5650
      %v5665 = vpack.c.b16 %v5653, %v5652
      %v5666 = vpack.c.b16 %v5655, %v5654
      %v5667 = vpack.c.b16 %v5657, %v5656
      %v5668 = vpack.c.b16 %v5659, %v5658
      %v5669 = vpack.c.b16 %v5661, %v5660
      %5678 = vmatprep.subr.bf16.mxu0 0
      %5679 = vmatpush1.bf16.msra.mxu0 %v5662
      %5680 = vmatprep.subr.bf16.mxu0 0
      %5681 = vmatpush1.bf16.msra.mxu0 %v5663
      %5682 = vmatprep.subr.bf16.mxu0 0
      %5683 = vmatpush1.bf16.msra.mxu0 %v5664
      %5684 = vmatprep.subr.bf16.mxu0 0
      %5685 = vmatpush1.bf16.msra.mxu0 %v5665
      %5686 = vmatprep.subr.bf16.mxu0 0
      %5687 = vmatpush1.bf16.msra.mxu0 %v5666
      %5688 = vmatprep.subr.bf16.mxu0 0
      %5689 = vmatpush1.bf16.msra.mxu0 %v5667
      %5690 = vmatprep.subr.bf16.mxu0 0
      %5691 = vmatpush1.bf16.msra.mxu0 %v5668
      %5692 = vmatprep.subr.bf16.mxu0 0
      %5693 = vmatpush1.bf16.msra.mxu0 %v5669
      %5694 = vmatprep.subr.bf16.mxu0 0
      %5695 = vmatpush1.bf16.msra.mxu0 0
      %5696 = vmatprep.subr.bf16.mxu0 0
      %5697 = vmatpush1.bf16.msra.mxu0 0
      %5698 = vmatprep.subr.bf16.mxu0 0
      %5699 = vmatpush1.bf16.msra.mxu0 0
      %5700 = vmatprep.subr.bf16.mxu0 0
      %5701 = vmatpush1.bf16.msra.mxu0 0
      %5702 = vmatprep.subr.bf16.mxu0 0
      %5703 = vmatpush1.bf16.msra.mxu0 0
      %5704 = vmatprep.subr.bf16.mxu0 0
      %5705 = vmatpush1.bf16.msra.mxu0 0
      %5706 = vmatprep.subr.bf16.mxu0 0
      %5707 = vmatpush1.bf16.msra.mxu0 0
      %5708 = vmatprep.subr.bf16.mxu0 0
      %5709 = vmatpush1.bf16.msra.mxu0 0
      %5710 = vmatprep.mubr.bf16.mxu0 0
      %5711 = vmatmul.mubr.bf16.gmra.mrb[0].mxu0 %v5606
      %v5712 = vpop.f32.mrb[0].mxu0
      %v5713 = vadd.f32 %v5628, %v5712
      %v5714 = vpop.f32.mrb[0].mxu0
      %v5715 = vpop.f32.mrb[0].mxu0
      %v5716 = vadd.f32 %v5628, %v5715
      %v5717 = vpop.f32.mrb[0].mxu0
      %5718 = vdwg.mxu0
      %5719 = vst [vmem:[%s550] sm:$0xff] %v5713
      %5720 = vst [vmem:[%s550 + $0x8] sm:$0xff] %v5716
      %s5721 = smul.u32 2, %s28
      %p5722 = scmp.lt.s32.totalorder %s5721, 3
      %s5723 = scalar_select %p5722, %s5721, 3
      %s5724 = smul.addr %s5723, 8
      %s5725 = scalar_lea.vmem %s17, %s5724
      // Predicated region
      $region89: #{resnet_forward.1} parent=87 // pred_check
        %p5726 = pneg %p408
      $region90: #{resnet_forward.1} parent=87 // pred_check_branch
        %5728 = sbr.rel (%p5726) target = $region92
      $region91: #{resnet_forward.1} parent=87 // pred_region
        %s5729 = smul.u32 2, %s28
      $region92: #{resnet_forward.1} parent=87 // pred_fallthru
        _
    $region88: #{resnet_forward.1} parent=5 // pred_fallthru
      _
    %p5730 = scmp.le.s32.totalorder 2, %s23
    // Predicated region
    $region93: #{resnet_forward.1} parent=5 // pred_check
      %p5731 = pneg %p5730
    $region94: #{resnet_forward.1} parent=5 // pred_check_branch
      %5733 = sbr.rel (%p5731) target = $region96
    $region95: #{resnet_forward.1} parent=5 // pred_region
      %s5734 = ssub.s32 %s23, 2
      // Predicated region
      $region97: #{resnet_forward.1} parent=95 // pred_check
        %p5735 = pneg %p414
      $region98: #{resnet_forward.1} parent=95 // pred_check_branch
        %5737 = sbr.rel (%p5735) target = $region100
      $region99: #{resnet_forward.1} parent=95 // pred_region
        %s5738 = smul.u32 2, %s29
        %p5739 = scmp.lt.s32.totalorder %s5738, 3
        %s5740 = scalar_select %p5739, %s5738, 3
        %s5741 = smul.addr %s5740, 8
        %s5742 = scalar_lea.vmem %s17, %s5741
      $region100: #{resnet_forward.1} parent=95 // pred_fallthru
        _
    $region96: #{resnet_forward.1} parent=5 // pred_fallthru
      _
  $region6: #{resnet_forward.1} parent=0 // loop_footer
    %s27 = sadd.s32 1, %s23
  $region7: #{resnet_forward.1} parent=0 // loop_footer_branch
    %22 = sbr.rel target = $region3
  $region8: #{resnet_forward.1} parent=0 // loop_exit
    _

</llo_original>
